<compile_context>
chip_gen: v7x
topology: tpu7x:2x2x1
jax: 0.10.0
libtpu: 0.0.40
codegen_flags: <defaults>
</compile_context>

<pallas_src>
import jax
import jax.numpy as jnp
from jax import lax
from jax.experimental import pallas as pl
from jax.experimental.pallas import tpu as pltpu


# --------------------------------------------------------------------------
# Kernel 1: ConcatAttention (Bahdanau) + GRU recurrence
# --------------------------------------------------------------------------
def _attn_gru_kernel(emb_ref, h0_ref, enc_ref, maskadd_ref,
                     w1_ref, b1_ref, w2_ref, b2_ref, va_ref, vb_ref,
                     wihx_ref, wihc_ref, whh_ref, bih_ref, bhh_ref,
                     hs_ref, state_ref, attnw_ref,
                     gi_scratch):
    T, TB, E = emb_ref.shape            # time-major block (T, tb, E) bf16
    S = enc_ref.shape[1]
    H = h0_ref.shape[1]

    enc = enc_ref[...]                  # (tb, S, H) f32
    h0 = h0_ref[...]                    # (tb, H)    f32

    # ---- ConcatAttention: score = V(tanh(W1 enc + W2 h)), softmax over S ----
    e1 = jnp.dot(enc.reshape(TB * S, H).astype(jnp.bfloat16), w1_ref[...],
                 preferred_element_type=jnp.float32) + b1_ref[...]        # (tb*S, A)
    e2 = jnp.dot(h0.astype(jnp.bfloat16), w2_ref[...],
                 preferred_element_type=jnp.float32) + b2_ref[...]        # (tb, A)
    feat = jnp.tanh(e1.reshape(TB, S, -1) + e2[:, None, :])               # (tb, S, A)
    score = jnp.sum(feat * va_ref[...], axis=-1) + vb_ref[...]            # (tb, S)
    score = score + maskadd_ref[...]        # additive mask precomputed in wrapper

    score_max = jnp.max(score, axis=-1, keepdims=True)
    p = jnp.exp(score - score_max)
    # approx=False: attention weights sum to 1 (parity with torch.softmax);
    # the reciprocal still runs on the EUP slot.
    attn = p * pl.reciprocal(jnp.sum(p, axis=-1, keepdims=True), approx=False)
    attnw_ref[...] = attn
    # VPU multiply + cross-sublane reduce; negligible at this tb*S*H.
    # TODO(synk): switch to an MXU einsum 'bs,bsh->bh' if tb>=128 or S is large.
    ctx = jnp.sum(attn[:, :, None] * enc, axis=1)                         # (tb, H)

    # ---- GRU (1 layer, batch_first); gate order r, z, n as in PyTorch ----
    bih = bih_ref[...]                  # (1, 3H)
    bhh = bhh_ref[...]                  # (1, 3H)
    whh = whh_ref[...]                  # (H, 3H) bf16

    # Hoisted input-gate matmul: emb @ W_x for ALL T in one matmul, plus the
    # (step-invariant) context contribution ctx @ W_c, plus b_ih.
    gi_ctx = jnp.dot(ctx.astype(jnp.bfloat16), wihc_ref[...],
                     preferred_element_type=jnp.float32) + bih            # (tb, 3H)
    gi_x = jnp.dot(emb_ref[...].reshape(T * TB, E), wihx_ref[...],
                   preferred_element_type=jnp.float32)                    # (T*tb, 3H)
    gi_scratch[...] = gi_x.reshape(T, TB, 3 * H) + gi_ctx[None, :, :]

    def step(t, h):
        gi = gi_scratch[t]                                                # (tb, 3H)
        gh = jnp.dot(h.astype(jnp.bfloat16), whh,
                     preferred_element_type=jnp.float32) + bhh            # (tb, 3H)
        r = jax.nn.sigmoid(gi[:, 0:H] + gh[:, 0:H])
        z = jax.nn.sigmoid(gi[:, H:2 * H] + gh[:, H:2 * H])
        n = jnp.tanh(gi[:, 2 * H:3 * H] + r * gh[:, 2 * H:3 * H])
        h_new = (1.0 - z) * n + z * h
        hs_ref[t] = h_new.astype(hs_ref.dtype)   # contiguous leading-axis bf16 store
        return h_new

    # Full unroll only while T is small; cap at 4 otherwise (vreg pressure).
    unroll = True if T <= 8 else 4
    h_final = lax.fori_loop(0, T, step, h0, unroll=unroll)
    state_ref[...] = h_final


# --------------------------------------------------------------------------
# Kernel 2: tiled, pipelined vocab projection  logits = hs @ fc_w + fc_b
# --------------------------------------------------------------------------
def _fc_kernel(hs_ref, w_ref, b_ref, out_ref):
    out_ref[...] = jnp.dot(hs_ref[...], w_ref[...],
                           preferred_element_type=jnp.float32) + b_ref[...]


def _pick_tile(dim, pref, align):
    """Largest tile <= pref that divides dim and is a multiple of align, else full dim."""
    t = (min(pref, dim) // align) * align
    while t >= align:
        if dim % t == 0:
            return t
        t -= align
    return dim


def _num_batch_tiles(B):
    """One kernel-1 batch tile per TensorCore: 1 on v5e/v6e, 2 on v7x-like chips
    (only when B splits into bf16-aligned halves).  Falls back to 1."""
    try:
        kind = jax.devices()[0].device_kind.lower()
    except Exception:
        return 1
    if "v7" in kind and B >= 32 and B % 32 == 0:
        return 2
    return 1


def attention_decoder_forward(tokens, hidden, encoder_outputs, mask, params):
    """tokens (B,T) int32; hidden (1,B,H); encoder_outputs (B,S,H); mask (B,S)."""
    B, T = tokens.shape
    h0 = hidden[0]                                   # (B, H)
    H = h0.shape[1]
    S = encoder_outputs.shape[1]
    E = params["embedding"].shape[1]
    A = params["attn_w1"].shape[1]
    V = params["fc_w"].shape[1]

    # Glue (outside the kernels): embedding gather done time-major and pre-cast
    # to bf16 (kernel consumes bf16 anyway -> half the DMA bytes); additive mask
    # precomputed once.
    emb_t = params["embedding"][tokens.T].astype(jnp.bfloat16)   # (T, B, E) bf16
    mask_add = (mask.astype(jnp.float32) - 1.0) * 1e9            # 0 keep / -1e9 masked

    grid_b = _num_batch_tiles(B)
    tb = B // grid_b

    def const2(b):
        return (0, 0)

    hs, state, attnw = pl.pallas_call(
        _attn_gru_kernel,
        grid=(grid_b,),
        in_specs=[
            pl.BlockSpec((T, tb, E), lambda b: (0, b, 0)),      # embedded tokens (bf16)
            pl.BlockSpec((tb, H), lambda b: (b, 0)),            # h0
            pl.BlockSpec((tb, S, H), lambda b: (b, 0, 0)),      # encoder outputs (f32)
            pl.BlockSpec((tb, S), lambda b: (b, 0)),            # additive mask
            pl.BlockSpec((H, A), const2),                       # attn W1 (bf16)
            pl.BlockSpec((1, A), const2),                       # attn b1
            pl.BlockSpec((H, A), const2),                       # attn W2 (bf16)
            pl.BlockSpec((1, A), const2),                       # attn b2
            pl.BlockSpec((1, A), const2),                       # attn v
            pl.BlockSpec((1, 1), const2),                       # attn v bias
            pl.BlockSpec((E, 3 * H), const2),                   # W_ih token rows (bf16)
            pl.BlockSpec((H, 3 * H), const2),                   # W_ih context rows (bf16)
            pl.BlockSpec((H, 3 * H), const2),                   # W_hh (bf16)
            pl.BlockSpec((1, 3 * H), const2),                   # b_ih
            pl.BlockSpec((1, 3 * H), const2),                   # b_hh
        ],
        out_specs=[
            pl.BlockSpec((T, tb, H), lambda b: (0, b, 0)),      # hidden states (bf16)
            pl.BlockSpec((tb, H), lambda b: (b, 0)),            # final state
            pl.BlockSpec((tb, S), lambda b: (b, 0)),            # attention weights
        ],
        out_shape=(
            jax.ShapeDtypeStruct((T, B, H), jnp.bfloat16),
            jax.ShapeDtypeStruct((B, H), jnp.float32),
            jax.ShapeDtypeStruct((B, S), jnp.float32),
        ),
        scratch_shapes=[pltpu.VMEM((T, tb, 3 * H), jnp.float32)],
        compiler_params=pltpu.CompilerParams(
            dimension_semantics=("parallel",),
            vmem_limit_bytes=32 * 1024 * 1024),
    )(emb_t, h0, encoder_outputs, mask_add,
      params["attn_w1"], params["attn_b1"], params["attn_w2"], params["attn_b2"],
      params["attn_v"], params["attn_vb"],
      params["gru_wih_x"], params["gru_wih_c"], params["gru_whh"],
      params["gru_bih"], params["gru_bhh"])

    # ---- vocab projection ----
    # Transpose the SMALL bf16 hs (T,B,H)->(B,T,H) here (cheap glue) so the big
    # f32 logits never need a separate HBM transpose pass: kernel 2 writes them
    # directly in (B,T,V) row order and the final reshape is free.
    M = B * T
    hs_bm = jnp.transpose(hs, (1, 0, 2)).reshape(M, H)           # (B*T, H) bf16
    tm = _pick_tile(M, 512, 16)     # bf16 lhs -> 16-multiple sublane tiles
    tn = _pick_tile(V, 1024, 128)   # lane-dense output tiles
    logits_flat = pl.pallas_call(
        _fc_kernel,
        grid=(M // tm, V // tn),
        in_specs=[
            pl.BlockSpec((tm, H), lambda i, j: (i, 0)),
            pl.BlockSpec((H, tn), lambda i, j: (0, j)),
            pl.BlockSpec((1, tn), lambda i, j: (0, j)),
        ],
        out_specs=pl.BlockSpec((tm, tn), lambda i, j: (i, j)),
        out_shape=jax.ShapeDtypeStruct((M, V), jnp.float32),
        compiler_params=pltpu.CompilerParams(
            dimension_semantics=("parallel", "parallel"),
            vmem_limit_bytes=32 * 1024 * 1024),
    )(hs_bm, params["fc_w"], params["fc_b"])

    # Match PyTorch return shapes: (B,T,V), (num_layers,B,H), (B,S,1).
    logits = logits_flat.reshape(B, T, V)       # free reshape (row order is b-major)
    return logits, state[None, :, :], attnw[:, :, None]


def make_params(key, vocab_size, embedding_dim, dec_units, attn_hidden):
    ks = jax.random.split(key, 13)
    s = 0.1
    E, H, A, V = embedding_dim, dec_units, attn_hidden, vocab_size
    bf16 = jnp.bfloat16
    return {
        "embedding": s * jax.random.normal(ks[0], (V, E), jnp.float32),
        # ConcatAttention: W1, W2 : Linear(H -> A); V : Linear(A -> 1)
        "attn_w1": (s * jax.random.normal(ks[1], (H, A), jnp.float32)).astype(bf16),
        "attn_b1": s * jax.random.normal(ks[2], (1, A), jnp.float32),
        "attn_w2": (s * jax.random.normal(ks[3], (H, A), jnp.float32)).astype(bf16),
        "attn_b2": s * jax.random.normal(ks[4], (1, A), jnp.float32),
        "attn_v": s * jax.random.normal(ks[5], (1, A), jnp.float32),
        "attn_vb": s * jax.random.normal(ks[6], (1, 1), jnp.float32),
        # GRU(E+H -> H): weight_ih split into its E (token) and H (context)
        # row blocks, stored transposed for right-multiply, gate order r,z,n.
        "gru_wih_x": (s * jax.random.normal(ks[7], (E, 3 * H), jnp.float32)).astype(bf16),
        "gru_wih_c": (s * jax.random.normal(ks[8], (H, 3 * H), jnp.float32)).astype(bf16),
        "gru_whh": (s * jax.random.normal(ks[9], (H, 3 * H), jnp.float32)).astype(bf16),
        "gru_bih": s * jax.random.normal(ks[10], (1, 3 * H), jnp.float32),
        "gru_bhh": s * jax.random.normal(ks[11], (1, 3 * H), jnp.float32),
        # fc: Linear(H -> V), stored bf16 for the MXU (f32 accumulation in-kernel).
        "fc_w": (s * jax.random.normal(ks[12], (H, V), jnp.float32)).astype(bf16),
        "fc_b": jnp.zeros((1, V), jnp.float32),
    }


if __name__ == "__main__":
    # Small, lane-aligned shapes consistent with the module's forward.
    B, T, S = 16, 8, 16          # batch, decoder seq len, encoder seq len
    dec_units, embedding_dim = 128, 128
    attn_hidden = 128
    vocab_size = 512

    key = jax.random.PRNGKey(0)
    kp, kt, kh, ke = jax.random.split(key, 4)

    params = make_params(kp, vocab_size, embedding_dim, dec_units, attn_hidden)

    tokens = jax.random.randint(kt, (B, T), 0, vocab_size, dtype=jnp.int32)
    hidden = 0.1 * jax.random.normal(kh, (1, B, dec_units), jnp.float32)
    encoder_outputs = 0.1 * jax.random.normal(ke, (B, S, dec_units), jnp.float32)
    mask = jnp.ones((B, S), jnp.float32)   # TODO(synk): pass real padding mask if needed

    logits, state, attn_w = attention_decoder_forward(
        tokens, hidden, encoder_outputs, mask, params)
    jax.block_until_ready((logits, state, attn_w))

    assert logits.shape == (B, T, vocab_size)
    assert state.shape == (1, B, dec_units)
    assert attn_w.shape == (B, S, 1)
    print("KERNEL_OK")
</pallas_src>

<mosaic_0001>
module attributes {stable_mosaic.version = 11 : i64} {
  func.func @_attn_gru_kernel(%arg0: i32, %arg1: memref<8x16x128xbf16, #tpu.memory_space<vmem>>, %arg2: memref<16x128xf32, #tpu.memory_space<vmem>>, %arg3: memref<16x16x128xf32, #tpu.memory_space<vmem>>, %arg4: memref<16x16xf32, #tpu.memory_space<vmem>>, %arg5: memref<128x128xbf16, #tpu.memory_space<vmem>>, %arg6: memref<1x128xf32, #tpu.memory_space<vmem>>, %arg7: memref<128x128xbf16, #tpu.memory_space<vmem>>, %arg8: memref<1x128xf32, #tpu.memory_space<vmem>>, %arg9: memref<1x128xf32, #tpu.memory_space<vmem>>, %arg10: memref<1x1xf32, #tpu.memory_space<vmem>>, %arg11: memref<128x384xbf16, #tpu.memory_space<vmem>>, %arg12: memref<128x384xbf16, #tpu.memory_space<vmem>>, %arg13: memref<128x384xbf16, #tpu.memory_space<vmem>>, %arg14: memref<1x384xf32, #tpu.memory_space<vmem>>, %arg15: memref<1x384xf32, #tpu.memory_space<vmem>>, %arg16: memref<8x16x128xbf16, #tpu.memory_space<vmem>>, %arg17: memref<16x128xf32, #tpu.memory_space<vmem>>, %arg18: memref<16x16xf32, #tpu.memory_space<vmem>>, %arg19: memref<8x16x384xf32, #tpu.memory_space<vmem>>) attributes {dimension_semantics = [#tpu.dimension_semantics<parallel>], iteration_bounds = array<i64: 1>, scalar_prefetch = 0 : i64, scratch_operands = 1 : i64, tpu.core_type = #tpu.core_type<tc>, window_params = [{transform_indices = @transform_0, window_bounds = array<i64: 8, 16, 128>}, {transform_indices = @transform_1, window_bounds = array<i64: 16, 128>}, {transform_indices = @transform_2, window_bounds = array<i64: 16, 16, 128>}, {transform_indices = @transform_3, window_bounds = array<i64: 16, 16>}, {pipeline_mode = #tpu.pipeline_mode<synchronous>, transform_indices = @transform_4, window_bounds = array<i64: 128, 128>}, {pipeline_mode = #tpu.pipeline_mode<synchronous>, transform_indices = @transform_5, window_bounds = array<i64: 1, 128>}, {pipeline_mode = #tpu.pipeline_mode<synchronous>, transform_indices = @transform_6, window_bounds = array<i64: 128, 128>}, {pipeline_mode = #tpu.pipeline_mode<synchronous>, transform_indices = @transform_7, window_bounds = array<i64: 1, 128>}, {pipeline_mode = #tpu.pipeline_mode<synchronous>, transform_indices = @transform_8, window_bounds = array<i64: 1, 128>}, {pipeline_mode = #tpu.pipeline_mode<synchronous>, transform_indices = @transform_9, window_bounds = array<i64: 1, 1>}, {pipeline_mode = #tpu.pipeline_mode<synchronous>, transform_indices = @transform_10, window_bounds = array<i64: 128, 384>}, {pipeline_mode = #tpu.pipeline_mode<synchronous>, transform_indices = @transform_11, window_bounds = array<i64: 128, 384>}, {pipeline_mode = #tpu.pipeline_mode<synchronous>, transform_indices = @transform_12, window_bounds = array<i64: 128, 384>}, {pipeline_mode = #tpu.pipeline_mode<synchronous>, transform_indices = @transform_13, window_bounds = array<i64: 1, 384>}, {pipeline_mode = #tpu.pipeline_mode<synchronous>, transform_indices = @transform_14, window_bounds = array<i64: 1, 384>}, {transform_indices = @transform_15, window_bounds = array<i64: 8, 16, 128>}, {transform_indices = @transform_16, window_bounds = array<i64: 16, 128>}, {transform_indices = @transform_17, window_bounds = array<i64: 16, 16>}]} {
    %c0 = arith.constant 0 : index
    %c0_0 = arith.constant 0 : index
    %c0_1 = arith.constant 0 : index
    %0 = vector.load %arg3[%c0, %c0_0, %c0_1] : memref<16x16x128xf32, #tpu.memory_space<vmem>>, vector<16x16x128xf32>
    %c0_2 = arith.constant 0 : index
    %c0_3 = arith.constant 0 : index
    %1 = vector.load %arg2[%c0_2, %c0_3] : memref<16x128xf32, #tpu.memory_space<vmem>>, vector<16x128xf32>
    %2 = vector.shape_cast %0 : vector<16x16x128xf32> to vector<256x128xf32>
    %3 = arith.truncf %2 : vector<256x128xf32> to vector<256x128xbf16>
    %c0_4 = arith.constant 0 : index
    %c0_5 = arith.constant 0 : index
    %4 = vector.load %arg5[%c0_4, %c0_5] : memref<128x128xbf16, #tpu.memory_space<vmem>>, vector<128x128xbf16>
    %cst = arith.constant dense<0.000000e+00> : vector<256x128xf32>
    %5 = tpu.matmul %3, %4, %cst {dimension_numbers = #tpu.dot_dimension_numbers<[1], [0], [0], [1], [0, 0, 1, 1], [], []>} : vector<256x128xbf16>, vector<128x128xbf16>, vector<256x128xf32> -> vector<256x128xf32>
    %c0_6 = arith.constant 0 : index
    %c0_7 = arith.constant 0 : index
    %6 = vector.load %arg6[%c0_6, %c0_7] : memref<1x128xf32, #tpu.memory_space<vmem>>, vector<1x128xf32>
    %7 = vector.broadcast %6 : vector<1x128xf32> to vector<256x128xf32>
    %8 = arith.addf %5, %7 : vector<256x128xf32>
    %9 = arith.truncf %1 : vector<16x128xf32> to vector<16x128xbf16>
    %c0_8 = arith.constant 0 : index
    %c0_9 = arith.constant 0 : index
    %10 = vector.load %arg7[%c0_8, %c0_9] : memref<128x128xbf16, #tpu.memory_space<vmem>>, vector<128x128xbf16>
    %cst_10 = arith.constant dense<0.000000e+00> : vector<16x128xf32>
    %11 = tpu.matmul %9, %10, %cst_10 {dimension_numbers = #tpu.dot_dimension_numbers<[1], [0], [0], [1], [0, 0, 1, 1], [], []>} : vector<16x128xbf16>, vector<128x128xbf16>, vector<16x128xf32> -> vector<16x128xf32>
    %c0_11 = arith.constant 0 : index
    %c0_12 = arith.constant 0 : index
    %12 = vector.load %arg8[%c0_11, %c0_12] : memref<1x128xf32, #tpu.memory_space<vmem>>, vector<1x128xf32>
    %13 = vector.broadcast %12 : vector<1x128xf32> to vector<16x128xf32>
    %14 = arith.addf %11, %13 : vector<16x128xf32>
    %15 = vector.shape_cast %8 : vector<256x128xf32> to vector<16x16x128xf32>
    %16 = vector.shape_cast %14 : vector<16x128xf32> to vector<16x1x128xf32>
    %17 = vector.broadcast %16 : vector<16x1x128xf32> to vector<16x16x128xf32>
    %18 = arith.addf %15, %17 : vector<16x16x128xf32>
    %19 = math.tanh %18 : vector<16x16x128xf32>
    %c0_13 = arith.constant 0 : index
    %c0_14 = arith.constant 0 : index
    %20 = vector.load %arg9[%c0_13, %c0_14] : memref<1x128xf32, #tpu.memory_space<vmem>>, vector<1x128xf32>
    %21 = vector.shape_cast %20 : vector<1x128xf32> to vector<1x1x128xf32>
    %22 = vector.broadcast %21 : vector<1x1x128xf32> to vector<16x16x128xf32>
    %23 = arith.mulf %19, %22 : vector<16x16x128xf32>
    %cst_15 = arith.constant dense<0.000000e+00> : vector<16x16xf32>
    %24 = vector.multi_reduction <add>, %23, %cst_15 [2] : vector<16x16x128xf32> to vector<16x16xf32>
    %c0_16 = arith.constant 0 : index
    %c0_17 = arith.constant 0 : index
    %25 = vector.load %arg10[%c0_16, %c0_17] : memref<1x1xf32, #tpu.memory_space<vmem>>, vector<1x1xf32>
    %26 = vector.broadcast %25 : vector<1x1xf32> to vector<16x16xf32>
    %27 = arith.addf %24, %26 : vector<16x16xf32>
    %c0_18 = arith.constant 0 : index
    %c0_19 = arith.constant 0 : index
    %28 = vector.load %arg4[%c0_18, %c0_19] : memref<16x16xf32, #tpu.memory_space<vmem>>, vector<16x16xf32>
    %29 = arith.addf %27, %28 : vector<16x16xf32>
    %cst_20 = arith.constant dense<0xFF800000> : vector<16xf32>
    %30 = vector.multi_reduction <maximumf>, %29, %cst_20 [1] : vector<16x16xf32> to vector<16xf32>
    %31 = vector.shape_cast %30 : vector<16xf32> to vector<16x1xf32>
    %32 = vector.broadcast %31 : vector<16x1xf32> to vector<16x16xf32>
    %33 = arith.subf %29, %32 : vector<16x16xf32>
    %34 = math.exp %33 : vector<16x16xf32>
    %cst_21 = arith.constant dense<0.000000e+00> : vector<16xf32>
    %35 = vector.multi_reduction <add>, %34, %cst_21 [1] : vector<16x16xf32> to vector<16xf32>
    %36 = vector.shape_cast %35 : vector<16xf32> to vector<16x1xf32>
    %37 = tpu.reciprocal %36 : vector<16x1xf32> -> vector<16x1xf32>
    %38 = vector.broadcast %37 : vector<16x1xf32> to vector<16x16xf32>
    %39 = arith.mulf %34, %38 : vector<16x16xf32>
    %c0_22 = arith.constant 0 : index
    %c0_23 = arith.constant 0 : index
    %40 = vector.load %arg18[%c0_22, %c0_23] : memref<16x16xf32, #tpu.memory_space<vmem>>, vector<16x16xf32>
    tpu.vector_store %arg18[%c0_22, %c0_23], %39 {strides = array<i32>} : memref<16x16xf32, #tpu.memory_space<vmem>>, vector<16x16xf32>,
    %41 = vector.shape_cast %39 : vector<16x16xf32> to vector<16x16x1xf32>
    %42 = vector.broadcast %41 : vector<16x16x1xf32> to vector<16x16x128xf32>
    %43 = arith.mulf %42, %0 : vector<16x16x128xf32>
    %cst_24 = arith.constant dense<0.000000e+00> : vector<16x128xf32>
    %44 = vector.multi_reduction <add>, %43, %cst_24 [1] : vector<16x16x128xf32> to vector<16x128xf32>
    %c0_25 = arith.constant 0 : index
    %c0_26 = arith.constant 0 : index
    %45 = vector.load %arg14[%c0_25, %c0_26] : memref<1x384xf32, #tpu.memory_space<vmem>>, vector<1x384xf32>
    %c0_27 = arith.constant 0 : index
    %c0_28 = arith.constant 0 : index
    %46 = vector.load %arg15[%c0_27, %c0_28] : memref<1x384xf32, #tpu.memory_space<vmem>>, vector<1x384xf32>
    %c0_29 = arith.constant 0 : index
    %c0_30 = arith.constant 0 : index
    %47 = vector.load %arg13[%c0_29, %c0_30] : memref<128x384xbf16, #tpu.memory_space<vmem>>, vector<128x384xbf16>
    %48 = arith.truncf %44 : vector<16x128xf32> to vector<16x128xbf16>
    %c0_31 = arith.constant 0 : index
    %c0_32 = arith.constant 0 : index
    %49 = vector.load %arg12[%c0_31, %c0_32] : memref<128x384xbf16, #tpu.memory_space<vmem>>, vector<128x384xbf16>
    %cst_33 = arith.constant dense<0.000000e+00> : vector<16x384xf32>
    %50 = tpu.matmul %48, %49, %cst_33 {dimension_numbers = #tpu.dot_dimension_numbers<[1], [0], [0], [1], [0, 0, 1, 1], [], []>} : vector<16x128xbf16>, vector<128x384xbf16>, vector<16x384xf32> -> vector<16x384xf32>
    %51 = vector.broadcast %45 : vector<1x384xf32> to vector<16x384xf32>
    %52 = arith.addf %50, %51 : vector<16x384xf32>
    %c0_34 = arith.constant 0 : index
    %c0_35 = arith.constant 0 : index
    %c0_36 = arith.constant 0 : index
    %53 = vector.load %arg1[%c0_34, %c0_35, %c0_36] : memref<8x16x128xbf16, #tpu.memory_space<vmem>>, vector<8x16x128xbf16>
    %54 = vector.shape_cast %53 : vector<8x16x128xbf16> to vector<128x128xbf16>
    %c0_37 = arith.constant 0 : index
    %c0_38 = arith.constant 0 : index
    %55 = vector.load %arg11[%c0_37, %c0_38] : memref<128x384xbf16, #tpu.memory_space<vmem>>, vector<128x384xbf16>
    %cst_39 = arith.constant dense<0.000000e+00> : vector<128x384xf32>
    %56 = tpu.matmul %54, %55, %cst_39 {dimension_numbers = #tpu.dot_dimension_numbers<[1], [0], [0], [1], [0, 0, 1, 1], [], []>} : vector<128x128xbf16>, vector<128x384xbf16>, vector<128x384xf32> -> vector<128x384xf32>
    %57 = vector.shape_cast %56 : vector<128x384xf32> to vector<8x16x384xf32>
    %58 = vector.shape_cast %52 : vector<16x384xf32> to vector<1x16x384xf32>
    %59 = vector.broadcast %58 : vector<1x16x384xf32> to vector<8x16x384xf32>
    %60 = arith.addf %57, %59 : vector<8x16x384xf32>
    %c0_40 = arith.constant 0 : index
    %c0_41 = arith.constant 0 : index
    %c0_42 = arith.constant 0 : index
    %61 = vector.load %arg19[%c0_40, %c0_41, %c0_42] : memref<8x16x384xf32, #tpu.memory_space<vmem>>, vector<8x16x384xf32>
    tpu.vector_store %arg19[%c0_40, %c0_41, %c0_42], %60 {strides = array<i32>} : memref<8x16x384xf32, #tpu.memory_space<vmem>>, vector<8x16x384xf32>,
    %c0_i32 = arith.constant 0 : i32
    %62 = arith.index_cast %c0_i32 : i32 to index
    %c0_43 = arith.constant 0 : index
    %c0_44 = arith.constant 0 : index
    %63 = vector.load %arg19[%62, %c0_43, %c0_44] : memref<8x16x384xf32, #tpu.memory_space<vmem>>, vector<1x16x384xf32>
    %64 = vector.shape_cast %63 : vector<1x16x384xf32> to vector<16x384xf32>
    %65 = arith.truncf %1 : vector<16x128xf32> to vector<16x128xbf16>
    %cst_45 = arith.constant dense<0.000000e+00> : vector<16x384xf32>
    %66 = tpu.matmul %65, %47, %cst_45 {dimension_numbers = #tpu.dot_dimension_numbers<[1], [0], [0], [1], [0, 0, 1, 1], [], []>} : vector<16x128xbf16>, vector<128x384xbf16>, vector<16x384xf32> -> vector<16x384xf32>
    %67 = vector.broadcast %46 : vector<1x384xf32> to vector<16x384xf32>
    %68 = arith.addf %66, %67 : vector<16x384xf32>
    %69 = vector.extract_strided_slice %64 {offsets = [0, 0], sizes = [16, 128], strides = [1, 1]} : vector<16x384xf32> to vector<16x128xf32>
    %70 = vector.extract_strided_slice %68 {offsets = [0, 0], sizes = [16, 128], strides = [1, 1]} : vector<16x384xf32> to vector<16x128xf32>
    %71 = arith.addf %69, %70 : vector<16x128xf32>
    %72 = arith.negf %71 : vector<16x128xf32>
    %73 = math.exp %72 : vector<16x128xf32>
    %cst_46 = arith.constant 1.000000e+00 : f32
    %74 = vector.broadcast %cst_46 : f32 to vector<16x128xf32>
    %75 = arith.addf %74, %73 : vector<16x128xf32>
    %76 = arith.divf %74, %75 : vector<16x128xf32>
    %77 = vector.extract_strided_slice %64 {offsets = [0, 128], sizes = [16, 128], strides = [1, 1]} : vector<16x384xf32> to vector<16x128xf32>
    %78 = vector.extract_strided_slice %68 {offsets = [0, 128], sizes = [16, 128], strides = [1, 1]} : vector<16x384xf32> to vector<16x128xf32>
    %79 = arith.addf %77, %78 : vector<16x128xf32>
    %80 = arith.negf %79 : vector<16x128xf32>
    %81 = math.exp %80 : vector<16x128xf32>
    %cst_47 = arith.constant 1.000000e+00 : f32
    %82 = vector.broadcast %cst_47 : f32 to vector<16x128xf32>
    %83 = arith.addf %82, %81 : vector<16x128xf32>
    %84 = arith.divf %82, %83 : vector<16x128xf32>
    %85 = vector.extract_strided_slice %64 {offsets = [0, 256], sizes = [16, 128], strides = [1, 1]} : vector<16x384xf32> to vector<16x128xf32>
    %86 = vector.extract_strided_slice %68 {offsets = [0, 256], sizes = [16, 128], strides = [1, 1]} : vector<16x384xf32> to vector<16x128xf32>
    %87 = arith.mulf %76, %86 : vector<16x128xf32>
    %88 = arith.addf %85, %87 : vector<16x128xf32>
    %89 = math.tanh %88 : vector<16x128xf32>
    %cst_48 = arith.constant 1.000000e+00 : f32
    %90 = vector.broadcast %cst_48 : f32 to vector<16x128xf32>
    %91 = arith.subf %90, %84 : vector<16x128xf32>
    %92 = arith.mulf %91, %89 : vector<16x128xf32>
    %93 = arith.mulf %84, %1 : vector<16x128xf32>
    %94 = arith.addf %92, %93 : vector<16x128xf32>
    %95 = arith.truncf %94 : vector<16x128xf32> to vector<16x128xbf16>
    %96 = arith.index_cast %c0_i32 : i32 to index
    %c0_49 = arith.constant 0 : index
    %c0_50 = arith.constant 0 : index
    %97 = vector.load %arg16[%96, %c0_49, %c0_50] : memref<8x16x128xbf16, #tpu.memory_space<vmem>>, vector<1x16x128xbf16>
    %98 = vector.shape_cast %97 : vector<1x16x128xbf16> to vector<16x128xbf16>
    %99 = vector.shape_cast %95 : vector<16x128xbf16> to vector<1x16x128xbf16>
    tpu.vector_store %arg16[%96, %c0_49, %c0_50], %99 {strides = array<i32>} : memref<8x16x128xbf16, #tpu.memory_space<vmem>>, vector<1x16x128xbf16>,
    %c1_i32 = arith.constant 1 : i32
    %100 = arith.index_cast %c1_i32 : i32 to index
    %c0_51 = arith.constant 0 : index
    %c0_52 = arith.constant 0 : index
    %101 = vector.load %arg19[%100, %c0_51, %c0_52] : memref<8x16x384xf32, #tpu.memory_space<vmem>>, vector<1x16x384xf32>
    %102 = vector.shape_cast %101 : vector<1x16x384xf32> to vector<16x384xf32>
    %103 = arith.truncf %94 : vector<16x128xf32> to vector<16x128xbf16>
    %cst_53 = arith.constant dense<0.000000e+00> : vector<16x384xf32>
    %104 = tpu.matmul %103, %47, %cst_53 {dimension_numbers = #tpu.dot_dimension_numbers<[1], [0], [0], [1], [0, 0, 1, 1], [], []>} : vector<16x128xbf16>, vector<128x384xbf16>, vector<16x384xf32> -> vector<16x384xf32>
    %105 = vector.broadcast %46 : vector<1x384xf32> to vector<16x384xf32>
    %106 = arith.addf %104, %105 : vector<16x384xf32>
    %107 = vector.extract_strided_slice %102 {offsets = [0, 0], sizes = [16, 128], strides = [1, 1]} : vector<16x384xf32> to vector<16x128xf32>
    %108 = vector.extract_strided_slice %106 {offsets = [0, 0], sizes = [16, 128], strides = [1, 1]} : vector<16x384xf32> to vector<16x128xf32>
    %109 = arith.addf %107, %108 : vector<16x128xf32>
    %110 = arith.negf %109 : vector<16x128xf32>
    %111 = math.exp %110 : vector<16x128xf32>
    %cst_54 = arith.constant 1.000000e+00 : f32
    %112 = vector.broadcast %cst_54 : f32 to vector<16x128xf32>
    %113 = arith.addf %112, %111 : vector<16x128xf32>
    %114 = arith.divf %112, %113 : vector<16x128xf32>
    %115 = vector.extract_strided_slice %102 {offsets = [0, 128], sizes = [16, 128], strides = [1, 1]} : vector<16x384xf32> to vector<16x128xf32>
    %116 = vector.extract_strided_slice %106 {offsets = [0, 128], sizes = [16, 128], strides = [1, 1]} : vector<16x384xf32> to vector<16x128xf32>
    %117 = arith.addf %115, %116 : vector<16x128xf32>
    %118 = arith.negf %117 : vector<16x128xf32>
    %119 = math.exp %118 : vector<16x128xf32>
    %cst_55 = arith.constant 1.000000e+00 : f32
    %120 = vector.broadcast %cst_55 : f32 to vector<16x128xf32>
    %121 = arith.addf %120, %119 : vector<16x128xf32>
    %122 = arith.divf %120, %121 : vector<16x128xf32>
    %123 = vector.extract_strided_slice %102 {offsets = [0, 256], sizes = [16, 128], strides = [1, 1]} : vector<16x384xf32> to vector<16x128xf32>
    %124 = vector.extract_strided_slice %106 {offsets = [0, 256], sizes = [16, 128], strides = [1, 1]} : vector<16x384xf32> to vector<16x128xf32>
    %125 = arith.mulf %114, %124 : vector<16x128xf32>
    %126 = arith.addf %123, %125 : vector<16x128xf32>
    %127 = math.tanh %126 : vector<16x128xf32>
    %cst_56 = arith.constant 1.000000e+00 : f32
    %128 = vector.broadcast %cst_56 : f32 to vector<16x128xf32>
    %129 = arith.subf %128, %122 : vector<16x128xf32>
    %130 = arith.mulf %129, %127 : vector<16x128xf32>
    %131 = arith.mulf %122, %94 : vector<16x128xf32>
    %132 = arith.addf %130, %131 : vector<16x128xf32>
    %133 = arith.truncf %132 : vector<16x128xf32> to vector<16x128xbf16>
    %134 = arith.index_cast %c1_i32 : i32 to index
    %c0_57 = arith.constant 0 : index
    %c0_58 = arith.constant 0 : index
    %135 = vector.load %arg16[%134, %c0_57, %c0_58] : memref<8x16x128xbf16, #tpu.memory_space<vmem>>, vector<1x16x128xbf16>
    %136 = vector.shape_cast %135 : vector<1x16x128xbf16> to vector<16x128xbf16>
    %137 = vector.shape_cast %133 : vector<16x128xbf16> to vector<1x16x128xbf16>
    tpu.vector_store %arg16[%134, %c0_57, %c0_58], %137 {strides = array<i32>} : memref<8x16x128xbf16, #tpu.memory_space<vmem>>, vector<1x16x128xbf16>,
    %c2_i32 = arith.constant 2 : i32
    %138 = arith.index_cast %c2_i32 : i32 to index
    %c0_59 = arith.constant 0 : index
    %c0_60 = arith.constant 0 : index
    %139 = vector.load %arg19[%138, %c0_59, %c0_60] : memref<8x16x384xf32, #tpu.memory_space<vmem>>, vector<1x16x384xf32>
    %140 = vector.shape_cast %139 : vector<1x16x384xf32> to vector<16x384xf32>
    %141 = arith.truncf %132 : vector<16x128xf32> to vector<16x128xbf16>
    %cst_61 = arith.constant dense<0.000000e+00> : vector<16x384xf32>
    %142 = tpu.matmul %141, %47, %cst_61 {dimension_numbers = #tpu.dot_dimension_numbers<[1], [0], [0], [1], [0, 0, 1, 1], [], []>} : vector<16x128xbf16>, vector<128x384xbf16>, vector<16x384xf32> -> vector<16x384xf32>
    %143 = vector.broadcast %46 : vector<1x384xf32> to vector<16x384xf32>
    %144 = arith.addf %142, %143 : vector<16x384xf32>
    %145 = vector.extract_strided_slice %140 {offsets = [0, 0], sizes = [16, 128], strides = [1, 1]} : vector<16x384xf32> to vector<16x128xf32>
    %146 = vector.extract_strided_slice %144 {offsets = [0, 0], sizes = [16, 128], strides = [1, 1]} : vector<16x384xf32> to vector<16x128xf32>
    %147 = arith.addf %145, %146 : vector<16x128xf32>
    %148 = arith.negf %147 : vector<16x128xf32>
    %149 = math.exp %148 : vector<16x128xf32>
    %cst_62 = arith.constant 1.000000e+00 : f32
    %150 = vector.broadcast %cst_62 : f32 to vector<16x128xf32>
    %151 = arith.addf %150, %149 : vector<16x128xf32>
    %152 = arith.divf %150, %151 : vector<16x128xf32>
    %153 = vector.extract_strided_slice %140 {offsets = [0, 128], sizes = [16, 128], strides = [1, 1]} : vector<16x384xf32> to vector<16x128xf32>
    %154 = vector.extract_strided_slice %144 {offsets = [0, 128], sizes = [16, 128], strides = [1, 1]} : vector<16x384xf32> to vector<16x128xf32>
    %155 = arith.addf %153, %154 : vector<16x128xf32>
    %156 = arith.negf %155 : vector<16x128xf32>
    %157 = math.exp %156 : vector<16x128xf32>
    %cst_63 = arith.constant 1.000000e+00 : f32
    %158 = vector.broadcast %cst_63 : f32 to vector<16x128xf32>
    %159 = arith.addf %158, %157 : vector<16x128xf32>
    %160 = arith.divf %158, %159 : vector<16x128xf32>
    %161 = vector.extract_strided_slice %140 {offsets = [0, 256], sizes = [16, 128], strides = [1, 1]} : vector<16x384xf32> to vector<16x128xf32>
    %162 = vector.extract_strided_slice %144 {offsets = [0, 256], sizes = [16, 128], strides = [1, 1]} : vector<16x384xf32> to vector<16x128xf32>
    %163 = arith.mulf %152, %162 : vector<16x128xf32>
    %164 = arith.addf %161, %163 : vector<16x128xf32>
    %165 = math.tanh %164 : vector<16x128xf32>
    %cst_64 = arith.constant 1.000000e+00 : f32
    %166 = vector.broadcast %cst_64 : f32 to vector<16x128xf32>
    %167 = arith.subf %166, %160 : vector<16x128xf32>
    %168 = arith.mulf %167, %165 : vector<16x128xf32>
    %169 = arith.mulf %160, %132 : vector<16x128xf32>
    %170 = arith.addf %168, %169 : vector<16x128xf32>
    %171 = arith.truncf %170 : vector<16x128xf32> to vector<16x128xbf16>
    %172 = arith.index_cast %c2_i32 : i32 to index
    %c0_65 = arith.constant 0 : index
    %c0_66 = arith.constant 0 : index
    %173 = vector.load %arg16[%172, %c0_65, %c0_66] : memref<8x16x128xbf16, #tpu.memory_space<vmem>>, vector<1x16x128xbf16>
    %174 = vector.shape_cast %173 : vector<1x16x128xbf16> to vector<16x128xbf16>
    %175 = vector.shape_cast %171 : vector<16x128xbf16> to vector<1x16x128xbf16>
    tpu.vector_store %arg16[%172, %c0_65, %c0_66], %175 {strides = array<i32>} : memref<8x16x128xbf16, #tpu.memory_space<vmem>>, vector<1x16x128xbf16>,
    %c3_i32 = arith.constant 3 : i32
    %176 = arith.index_cast %c3_i32 : i32 to index
    %c0_67 = arith.constant 0 : index
    %c0_68 = arith.constant 0 : index
    %177 = vector.load %arg19[%176, %c0_67, %c0_68] : memref<8x16x384xf32, #tpu.memory_space<vmem>>, vector<1x16x384xf32>
    %178 = vector.shape_cast %177 : vector<1x16x384xf32> to vector<16x384xf32>
    %179 = arith.truncf %170 : vector<16x128xf32> to vector<16x128xbf16>
    %cst_69 = arith.constant dense<0.000000e+00> : vector<16x384xf32>
    %180 = tpu.matmul %179, %47, %cst_69 {dimension_numbers = #tpu.dot_dimension_numbers<[1], [0], [0], [1], [0, 0, 1, 1], [], []>} : vector<16x128xbf16>, vector<128x384xbf16>, vector<16x384xf32> -> vector<16x384xf32>
    %181 = vector.broadcast %46 : vector<1x384xf32> to vector<16x384xf32>
    %182 = arith.addf %180, %181 : vector<16x384xf32>
    %183 = vector.extract_strided_slice %178 {offsets = [0, 0], sizes = [16, 128], strides = [1, 1]} : vector<16x384xf32> to vector<16x128xf32>
    %184 = vector.extract_strided_slice %182 {offsets = [0, 0], sizes = [16, 128], strides = [1, 1]} : vector<16x384xf32> to vector<16x128xf32>
    %185 = arith.addf %183, %184 : vector<16x128xf32>
    %186 = arith.negf %185 : vector<16x128xf32>
    %187 = math.exp %186 : vector<16x128xf32>
    %cst_70 = arith.constant 1.000000e+00 : f32
    %188 = vector.broadcast %cst_70 : f32 to vector<16x128xf32>
    %189 = arith.addf %188, %187 : vector<16x128xf32>
    %190 = arith.divf %188, %189 : vector<16x128xf32>
    %191 = vector.extract_strided_slice %178 {offsets = [0, 128], sizes = [16, 128], strides = [1, 1]} : vector<16x384xf32> to vector<16x128xf32>
    %192 = vector.extract_strided_slice %182 {offsets = [0, 128], sizes = [16, 128], strides = [1, 1]} : vector<16x384xf32> to vector<16x128xf32>
    %193 = arith.addf %191, %192 : vector<16x128xf32>
    %194 = arith.negf %193 : vector<16x128xf32>
    %195 = math.exp %194 : vector<16x128xf32>
    %cst_71 = arith.constant 1.000000e+00 : f32
    %196 = vector.broadcast %cst_71 : f32 to vector<16x128xf32>
    %197 = arith.addf %196, %195 : vector<16x128xf32>
    %198 = arith.divf %196, %197 : vector<16x128xf32>
    %199 = vector.extract_strided_slice %178 {offsets = [0, 256], sizes = [16, 128], strides = [1, 1]} : vector<16x384xf32> to vector<16x128xf32>
    %200 = vector.extract_strided_slice %182 {offsets = [0, 256], sizes = [16, 128], strides = [1, 1]} : vector<16x384xf32> to vector<16x128xf32>
    %201 = arith.mulf %190, %200 : vector<16x128xf32>
    %202 = arith.addf %199, %201 : vector<16x128xf32>
    %203 = math.tanh %202 : vector<16x128xf32>
    %cst_72 = arith.constant 1.000000e+00 : f32
    %204 = vector.broadcast %cst_72 : f32 to vector<16x128xf32>
    %205 = arith.subf %204, %198 : vector<16x128xf32>
    %206 = arith.mulf %205, %203 : vector<16x128xf32>
    %207 = arith.mulf %198, %170 : vector<16x128xf32>
    %208 = arith.addf %206, %207 : vector<16x128xf32>
    %209 = arith.truncf %208 : vector<16x128xf32> to vector<16x128xbf16>
    %210 = arith.index_cast %c3_i32 : i32 to index
    %c0_73 = arith.constant 0 : index
    %c0_74 = arith.constant 0 : index
    %211 = vector.load %arg16[%210, %c0_73, %c0_74] : memref<8x16x128xbf16, #tpu.memory_space<vmem>>, vector<1x16x128xbf16>
    %212 = vector.shape_cast %211 : vector<1x16x128xbf16> to vector<16x128xbf16>
    %213 = vector.shape_cast %209 : vector<16x128xbf16> to vector<1x16x128xbf16>
    tpu.vector_store %arg16[%210, %c0_73, %c0_74], %213 {strides = array<i32>} : memref<8x16x128xbf16, #tpu.memory_space<vmem>>, vector<1x16x128xbf16>,
    %c4_i32 = arith.constant 4 : i32
    %214 = arith.index_cast %c4_i32 : i32 to index
    %c0_75 = arith.constant 0 : index
    %c0_76 = arith.constant 0 : index
    %215 = vector.load %arg19[%214, %c0_75, %c0_76] : memref<8x16x384xf32, #tpu.memory_space<vmem>>, vector<1x16x384xf32>
    %216 = vector.shape_cast %215 : vector<1x16x384xf32> to vector<16x384xf32>
    %217 = arith.truncf %208 : vector<16x128xf32> to vector<16x128xbf16>
    %cst_77 = arith.constant dense<0.000000e+00> : vector<16x384xf32>
    %218 = tpu.matmul %217, %47, %cst_77 {dimension_numbers = #tpu.dot_dimension_numbers<[1], [0], [0], [1], [0, 0, 1, 1], [], []>} : vector<16x128xbf16>, vector<128x384xbf16>, vector<16x384xf32> -> vector<16x384xf32>
    %219 = vector.broadcast %46 : vector<1x384xf32> to vector<16x384xf32>
    %220 = arith.addf %218, %219 : vector<16x384xf32>
    %221 = vector.extract_strided_slice %216 {offsets = [0, 0], sizes = [16, 128], strides = [1, 1]} : vector<16x384xf32> to vector<16x128xf32>
    %222 = vector.extract_strided_slice %220 {offsets = [0, 0], sizes = [16, 128], strides = [1, 1]} : vector<16x384xf32> to vector<16x128xf32>
    %223 = arith.addf %221, %222 : vector<16x128xf32>
    %224 = arith.negf %223 : vector<16x128xf32>
    %225 = math.exp %224 : vector<16x128xf32>
    %cst_78 = arith.constant 1.000000e+00 : f32
    %226 = vector.broadcast %cst_78 : f32 to vector<16x128xf32>
    %227 = arith.addf %226, %225 : vector<16x128xf32>
    %228 = arith.divf %226, %227 : vector<16x128xf32>
    %229 = vector.extract_strided_slice %216 {offsets = [0, 128], sizes = [16, 128], strides = [1, 1]} : vector<16x384xf32> to vector<16x128xf32>
    %230 = vector.extract_strided_slice %220 {offsets = [0, 128], sizes = [16, 128], strides = [1, 1]} : vector<16x384xf32> to vector<16x128xf32>
    %231 = arith.addf %229, %230 : vector<16x128xf32>
    %232 = arith.negf %231 : vector<16x128xf32>
    %233 = math.exp %232 : vector<16x128xf32>
    %cst_79 = arith.constant 1.000000e+00 : f32
    %234 = vector.broadcast %cst_79 : f32 to vector<16x128xf32>
    %235 = arith.addf %234, %233 : vector<16x128xf32>
    %236 = arith.divf %234, %235 : vector<16x128xf32>
    %237 = vector.extract_strided_slice %216 {offsets = [0, 256], sizes = [16, 128], strides = [1, 1]} : vector<16x384xf32> to vector<16x128xf32>
    %238 = vector.extract_strided_slice %220 {offsets = [0, 256], sizes = [16, 128], strides = [1, 1]} : vector<16x384xf32> to vector<16x128xf32>
    %239 = arith.mulf %228, %238 : vector<16x128xf32>
    %240 = arith.addf %237, %239 : vector<16x128xf32>
    %241 = math.tanh %240 : vector<16x128xf32>
    %cst_80 = arith.constant 1.000000e+00 : f32
    %242 = vector.broadcast %cst_80 : f32 to vector<16x128xf32>
    %243 = arith.subf %242, %236 : vector<16x128xf32>
    %244 = arith.mulf %243, %241 : vector<16x128xf32>
    %245 = arith.mulf %236, %208 : vector<16x128xf32>
    %246 = arith.addf %244, %245 : vector<16x128xf32>
    %247 = arith.truncf %246 : vector<16x128xf32> to vector<16x128xbf16>
    %248 = arith.index_cast %c4_i32 : i32 to index
    %c0_81 = arith.constant 0 : index
    %c0_82 = arith.constant 0 : index
    %249 = vector.load %arg16[%248, %c0_81, %c0_82] : memref<8x16x128xbf16, #tpu.memory_space<vmem>>, vector<1x16x128xbf16>
    %250 = vector.shape_cast %249 : vector<1x16x128xbf16> to vector<16x128xbf16>
    %251 = vector.shape_cast %247 : vector<16x128xbf16> to vector<1x16x128xbf16>
    tpu.vector_store %arg16[%248, %c0_81, %c0_82], %251 {strides = array<i32>} : memref<8x16x128xbf16, #tpu.memory_space<vmem>>, vector<1x16x128xbf16>,
    %c5_i32 = arith.constant 5 : i32
    %252 = arith.index_cast %c5_i32 : i32 to index
    %c0_83 = arith.constant 0 : index
    %c0_84 = arith.constant 0 : index
    %253 = vector.load %arg19[%252, %c0_83, %c0_84] : memref<8x16x384xf32, #tpu.memory_space<vmem>>, vector<1x16x384xf32>
    %254 = vector.shape_cast %253 : vector<1x16x384xf32> to vector<16x384xf32>
    %255 = arith.truncf %246 : vector<16x128xf32> to vector<16x128xbf16>
    %cst_85 = arith.constant dense<0.000000e+00> : vector<16x384xf32>
    %256 = tpu.matmul %255, %47, %cst_85 {dimension_numbers = #tpu.dot_dimension_numbers<[1], [0], [0], [1], [0, 0, 1, 1], [], []>} : vector<16x128xbf16>, vector<128x384xbf16>, vector<16x384xf32> -> vector<16x384xf32>
    %257 = vector.broadcast %46 : vector<1x384xf32> to vector<16x384xf32>
    %258 = arith.addf %256, %257 : vector<16x384xf32>
    %259 = vector.extract_strided_slice %254 {offsets = [0, 0], sizes = [16, 128], strides = [1, 1]} : vector<16x384xf32> to vector<16x128xf32>
    %260 = vector.extract_strided_slice %258 {offsets = [0, 0], sizes = [16, 128], strides = [1, 1]} : vector<16x384xf32> to vector<16x128xf32>
    %261 = arith.addf %259, %260 : vector<16x128xf32>
    %262 = arith.negf %261 : vector<16x128xf32>
    %263 = math.exp %262 : vector<16x128xf32>
    %cst_86 = arith.constant 1.000000e+00 : f32
    %264 = vector.broadcast %cst_86 : f32 to vector<16x128xf32>
    %265 = arith.addf %264, %263 : vector<16x128xf32>
    %266 = arith.divf %264, %265 : vector<16x128xf32>
    %267 = vector.extract_strided_slice %254 {offsets = [0, 128], sizes = [16, 128], strides = [1, 1]} : vector<16x384xf32> to vector<16x128xf32>
    %268 = vector.extract_strided_slice %258 {offsets = [0, 128], sizes = [16, 128], strides = [1, 1]} : vector<16x384xf32> to vector<16x128xf32>
    %269 = arith.addf %267, %268 : vector<16x128xf32>
    %270 = arith.negf %269 : vector<16x128xf32>
    %271 = math.exp %270 : vector<16x128xf32>
    %cst_87 = arith.constant 1.000000e+00 : f32
    %272 = vector.broadcast %cst_87 : f32 to vector<16x128xf32>
    %273 = arith.addf %272, %271 : vector<16x128xf32>
    %274 = arith.divf %272, %273 : vector<16x128xf32>
    %275 = vector.extract_strided_slice %254 {offsets = [0, 256], sizes = [16, 128], strides = [1, 1]} : vector<16x384xf32> to vector<16x128xf32>
    %276 = vector.extract_strided_slice %258 {offsets = [0, 256], sizes = [16, 128], strides = [1, 1]} : vector<16x384xf32> to vector<16x128xf32>
    %277 = arith.mulf %266, %276 : vector<16x128xf32>
    %278 = arith.addf %275, %277 : vector<16x128xf32>
    %279 = math.tanh %278 : vector<16x128xf32>
    %cst_88 = arith.constant 1.000000e+00 : f32
    %280 = vector.broadcast %cst_88 : f32 to vector<16x128xf32>
    %281 = arith.subf %280, %274 : vector<16x128xf32>
    %282 = arith.mulf %281, %279 : vector<16x128xf32>
    %283 = arith.mulf %274, %246 : vector<16x128xf32>
    %284 = arith.addf %282, %283 : vector<16x128xf32>
    %285 = arith.truncf %284 : vector<16x128xf32> to vector<16x128xbf16>
    %286 = arith.index_cast %c5_i32 : i32 to index
    %c0_89 = arith.constant 0 : index
    %c0_90 = arith.constant 0 : index
    %287 = vector.load %arg16[%286, %c0_89, %c0_90] : memref<8x16x128xbf16, #tpu.memory_space<vmem>>, vector<1x16x128xbf16>
    %288 = vector.shape_cast %287 : vector<1x16x128xbf16> to vector<16x128xbf16>
    %289 = vector.shape_cast %285 : vector<16x128xbf16> to vector<1x16x128xbf16>
    tpu.vector_store %arg16[%286, %c0_89, %c0_90], %289 {strides = array<i32>} : memref<8x16x128xbf16, #tpu.memory_space<vmem>>, vector<1x16x128xbf16>,
    %c6_i32 = arith.constant 6 : i32
    %290 = arith.index_cast %c6_i32 : i32 to index
    %c0_91 = arith.constant 0 : index
    %c0_92 = arith.constant 0 : index
    %291 = vector.load %arg19[%290, %c0_91, %c0_92] : memref<8x16x384xf32, #tpu.memory_space<vmem>>, vector<1x16x384xf32>
    %292 = vector.shape_cast %291 : vector<1x16x384xf32> to vector<16x384xf32>
    %293 = arith.truncf %284 : vector<16x128xf32> to vector<16x128xbf16>
    %cst_93 = arith.constant dense<0.000000e+00> : vector<16x384xf32>
    %294 = tpu.matmul %293, %47, %cst_93 {dimension_numbers = #tpu.dot_dimension_numbers<[1], [0], [0], [1], [0, 0, 1, 1], [], []>} : vector<16x128xbf16>, vector<128x384xbf16>, vector<16x384xf32> -> vector<16x384xf32>
    %295 = vector.broadcast %46 : vector<1x384xf32> to vector<16x384xf32>
    %296 = arith.addf %294, %295 : vector<16x384xf32>
    %297 = vector.extract_strided_slice %292 {offsets = [0, 0], sizes = [16, 128], strides = [1, 1]} : vector<16x384xf32> to vector<16x128xf32>
    %298 = vector.extract_strided_slice %296 {offsets = [0, 0], sizes = [16, 128], strides = [1, 1]} : vector<16x384xf32> to vector<16x128xf32>
    %299 = arith.addf %297, %298 : vector<16x128xf32>
    %300 = arith.negf %299 : vector<16x128xf32>
    %301 = math.exp %300 : vector<16x128xf32>
    %cst_94 = arith.constant 1.000000e+00 : f32
    %302 = vector.broadcast %cst_94 : f32 to vector<16x128xf32>
    %303 = arith.addf %302, %301 : vector<16x128xf32>
    %304 = arith.divf %302, %303 : vector<16x128xf32>
    %305 = vector.extract_strided_slice %292 {offsets = [0, 128], sizes = [16, 128], strides = [1, 1]} : vector<16x384xf32> to vector<16x128xf32>
    %306 = vector.extract_strided_slice %296 {offsets = [0, 128], sizes = [16, 128], strides = [1, 1]} : vector<16x384xf32> to vector<16x128xf32>
    %307 = arith.addf %305, %306 : vector<16x128xf32>
    %308 = arith.negf %307 : vector<16x128xf32>
    %309 = math.exp %308 : vector<16x128xf32>
    %cst_95 = arith.constant 1.000000e+00 : f32
    %310 = vector.broadcast %cst_95 : f32 to vector<16x128xf32>
    %311 = arith.addf %310, %309 : vector<16x128xf32>
    %312 = arith.divf %310, %311 : vector<16x128xf32>
    %313 = vector.extract_strided_slice %292 {offsets = [0, 256], sizes = [16, 128], strides = [1, 1]} : vector<16x384xf32> to vector<16x128xf32>
    %314 = vector.extract_strided_slice %296 {offsets = [0, 256], sizes = [16, 128], strides = [1, 1]} : vector<16x384xf32> to vector<16x128xf32>
    %315 = arith.mulf %304, %314 : vector<16x128xf32>
    %316 = arith.addf %313, %315 : vector<16x128xf32>
    %317 = math.tanh %316 : vector<16x128xf32>
    %cst_96 = arith.constant 1.000000e+00 : f32
    %318 = vector.broadcast %cst_96 : f32 to vector<16x128xf32>
    %319 = arith.subf %318, %312 : vector<16x128xf32>
    %320 = arith.mulf %319, %317 : vector<16x128xf32>
    %321 = arith.mulf %312, %284 : vector<16x128xf32>
    %322 = arith.addf %320, %321 : vector<16x128xf32>
    %323 = arith.truncf %322 : vector<16x128xf32> to vector<16x128xbf16>
    %324 = arith.index_cast %c6_i32 : i32 to index
    %c0_97 = arith.constant 0 : index
    %c0_98 = arith.constant 0 : index
    %325 = vector.load %arg16[%324, %c0_97, %c0_98] : memref<8x16x128xbf16, #tpu.memory_space<vmem>>, vector<1x16x128xbf16>
    %326 = vector.shape_cast %325 : vector<1x16x128xbf16> to vector<16x128xbf16>
    %327 = vector.shape_cast %323 : vector<16x128xbf16> to vector<1x16x128xbf16>
    tpu.vector_store %arg16[%324, %c0_97, %c0_98], %327 {strides = array<i32>} : memref<8x16x128xbf16, #tpu.memory_space<vmem>>, vector<1x16x128xbf16>,
    %c7_i32 = arith.constant 7 : i32
    %328 = arith.index_cast %c7_i32 : i32 to index
    %c0_99 = arith.constant 0 : index
    %c0_100 = arith.constant 0 : index
    %329 = vector.load %arg19[%328, %c0_99, %c0_100] : memref<8x16x384xf32, #tpu.memory_space<vmem>>, vector<1x16x384xf32>
    %330 = vector.shape_cast %329 : vector<1x16x384xf32> to vector<16x384xf32>
    %331 = arith.truncf %322 : vector<16x128xf32> to vector<16x128xbf16>
    %cst_101 = arith.constant dense<0.000000e+00> : vector<16x384xf32>
    %332 = tpu.matmul %331, %47, %cst_101 {dimension_numbers = #tpu.dot_dimension_numbers<[1], [0], [0], [1], [0, 0, 1, 1], [], []>} : vector<16x128xbf16>, vector<128x384xbf16>, vector<16x384xf32> -> vector<16x384xf32>
    %333 = vector.broadcast %46 : vector<1x384xf32> to vector<16x384xf32>
    %334 = arith.addf %332, %333 : vector<16x384xf32>
    %335 = vector.extract_strided_slice %330 {offsets = [0, 0], sizes = [16, 128], strides = [1, 1]} : vector<16x384xf32> to vector<16x128xf32>
    %336 = vector.extract_strided_slice %334 {offsets = [0, 0], sizes = [16, 128], strides = [1, 1]} : vector<16x384xf32> to vector<16x128xf32>
    %337 = arith.addf %335, %336 : vector<16x128xf32>
    %338 = arith.negf %337 : vector<16x128xf32>
    %339 = math.exp %338 : vector<16x128xf32>
    %cst_102 = arith.constant 1.000000e+00 : f32
    %340 = vector.broadcast %cst_102 : f32 to vector<16x128xf32>
    %341 = arith.addf %340, %339 : vector<16x128xf32>
    %342 = arith.divf %340, %341 : vector<16x128xf32>
    %343 = vector.extract_strided_slice %330 {offsets = [0, 128], sizes = [16, 128], strides = [1, 1]} : vector<16x384xf32> to vector<16x128xf32>
    %344 = vector.extract_strided_slice %334 {offsets = [0, 128], sizes = [16, 128], strides = [1, 1]} : vector<16x384xf32> to vector<16x128xf32>
    %345 = arith.addf %343, %344 : vector<16x128xf32>
    %346 = arith.negf %345 : vector<16x128xf32>
    %347 = math.exp %346 : vector<16x128xf32>
    %cst_103 = arith.constant 1.000000e+00 : f32
    %348 = vector.broadcast %cst_103 : f32 to vector<16x128xf32>
    %349 = arith.addf %348, %347 : vector<16x128xf32>
    %350 = arith.divf %348, %349 : vector<16x128xf32>
    %351 = vector.extract_strided_slice %330 {offsets = [0, 256], sizes = [16, 128], strides = [1, 1]} : vector<16x384xf32> to vector<16x128xf32>
    %352 = vector.extract_strided_slice %334 {offsets = [0, 256], sizes = [16, 128], strides = [1, 1]} : vector<16x384xf32> to vector<16x128xf32>
    %353 = arith.mulf %342, %352 : vector<16x128xf32>
    %354 = arith.addf %351, %353 : vector<16x128xf32>
    %355 = math.tanh %354 : vector<16x128xf32>
    %cst_104 = arith.constant 1.000000e+00 : f32
    %356 = vector.broadcast %cst_104 : f32 to vector<16x128xf32>
    %357 = arith.subf %356, %350 : vector<16x128xf32>
    %358 = arith.mulf %357, %355 : vector<16x128xf32>
    %359 = arith.mulf %350, %322 : vector<16x128xf32>
    %360 = arith.addf %358, %359 : vector<16x128xf32>
    %361 = arith.truncf %360 : vector<16x128xf32> to vector<16x128xbf16>
    %362 = arith.index_cast %c7_i32 : i32 to index
    %c0_105 = arith.constant 0 : index
    %c0_106 = arith.constant 0 : index
    %363 = vector.load %arg16[%362, %c0_105, %c0_106] : memref<8x16x128xbf16, #tpu.memory_space<vmem>>, vector<1x16x128xbf16>
    %364 = vector.shape_cast %363 : vector<1x16x128xbf16> to vector<16x128xbf16>
    %365 = vector.shape_cast %361 : vector<16x128xbf16> to vector<1x16x128xbf16>
    tpu.vector_store %arg16[%362, %c0_105, %c0_106], %365 {strides = array<i32>} : memref<8x16x128xbf16, #tpu.memory_space<vmem>>, vector<1x16x128xbf16>,
    %c8_i32 = arith.constant 8 : i32
    %c0_107 = arith.constant 0 : index
    %c0_108 = arith.constant 0 : index
    %366 = vector.load %arg17[%c0_107, %c0_108] : memref<16x128xf32, #tpu.memory_space<vmem>>, vector<16x128xf32>
    tpu.vector_store %arg17[%c0_107, %c0_108], %360 {strides = array<i32>} : memref<16x128xf32, #tpu.memory_space<vmem>>, vector<16x128xf32>,
    return
  }
  func.func @transform_0(%arg0: i32) -> (i32, i32, i32) {
    %c0_i32 = arith.constant 0 : i32
    %c0_i32_0 = arith.constant 0 : i32
    %c0_i32_1 = arith.constant 0 : i32
    return %c0_i32, %arg0, %c0_i32_0 : i32, i32, i32
  }
  func.func @transform_1(%arg0: i32) -> (i32, i32) {
    %c0_i32 = arith.constant 0 : i32
    %c0_i32_0 = arith.constant 0 : i32
    return %arg0, %c0_i32 : i32, i32
  }
  func.func @transform_2(%arg0: i32) -> (i32, i32, i32) {
    %c0_i32 = arith.constant 0 : i32
    %c0_i32_0 = arith.constant 0 : i32
    %c0_i32_1 = arith.constant 0 : i32
    return %arg0, %c0_i32, %c0_i32_0 : i32, i32, i32
  }
  func.func @transform_3(%arg0: i32) -> (i32, i32) {
    %c0_i32 = arith.constant 0 : i32
    %c0_i32_0 = arith.constant 0 : i32
    return %arg0, %c0_i32 : i32, i32
  }
  func.func @transform_4(%arg0: i32) -> (i32, i32) {
    %c0_i32 = arith.constant 0 : i32
    %c0_i32_0 = arith.constant 0 : i32
    %c0_i32_1 = arith.constant 0 : i32
    return %c0_i32, %c0_i32_0 : i32, i32
  }
  func.func @transform_5(%arg0: i32) -> (i32, i32) {
    %c0_i32 = arith.constant 0 : i32
    %c0_i32_0 = arith.constant 0 : i32
    %c0_i32_1 = arith.constant 0 : i32
    return %c0_i32, %c0_i32_0 : i32, i32
  }
  func.func @transform_6(%arg0: i32) -> (i32, i32) {
    %c0_i32 = arith.constant 0 : i32
    %c0_i32_0 = arith.constant 0 : i32
    %c0_i32_1 = arith.constant 0 : i32
    return %c0_i32, %c0_i32_0 : i32, i32
  }
  func.func @transform_7(%arg0: i32) -> (i32, i32) {
    %c0_i32 = arith.constant 0 : i32
    %c0_i32_0 = arith.constant 0 : i32
    %c0_i32_1 = arith.constant 0 : i32
    return %c0_i32, %c0_i32_0 : i32, i32
  }
  func.func @transform_8(%arg0: i32) -> (i32, i32) {
    %c0_i32 = arith.constant 0 : i32
    %c0_i32_0 = arith.constant 0 : i32
    %c0_i32_1 = arith.constant 0 : i32
    return %c0_i32, %c0_i32_0 : i32, i32
  }
  func.func @transform_9(%arg0: i32) -> (i32, i32) {
    %c0_i32 = arith.constant 0 : i32
    %c0_i32_0 = arith.constant 0 : i32
    %c0_i32_1 = arith.constant 0 : i32
    return %c0_i32, %c0_i32_0 : i32, i32
  }
  func.func @transform_10(%arg0: i32) -> (i32, i32) {
    %c0_i32 = arith.constant 0 : i32
    %c0_i32_0 = arith.constant 0 : i32
    %c0_i32_1 = arith.constant 0 : i32
    return %c0_i32, %c0_i32_0 : i32, i32
  }
  func.func @transform_11(%arg0: i32) -> (i32, i32) {
    %c0_i32 = arith.constant 0 : i32
    %c0_i32_0 = arith.constant 0 : i32
    %c0_i32_1 = arith.constant 0 : i32
    return %c0_i32, %c0_i32_0 : i32, i32
  }
  func.func @transform_12(%arg0: i32) -> (i32, i32) {
    %c0_i32 = arith.constant 0 : i32
    %c0_i32_0 = arith.constant 0 : i32
    %c0_i32_1 = arith.constant 0 : i32
    return %c0_i32, %c0_i32_0 : i32, i32
  }
  func.func @transform_13(%arg0: i32) -> (i32, i32) {
    %c0_i32 = arith.constant 0 : i32
    %c0_i32_0 = arith.constant 0 : i32
    %c0_i32_1 = arith.constant 0 : i32
    return %c0_i32, %c0_i32_0 : i32, i32
  }
  func.func @transform_14(%arg0: i32) -> (i32, i32) {
    %c0_i32 = arith.constant 0 : i32
    %c0_i32_0 = arith.constant 0 : i32
    %c0_i32_1 = arith.constant 0 : i32
    return %c0_i32, %c0_i32_0 : i32, i32
  }
  func.func @transform_15(%arg0: i32) -> (i32, i32, i32) {
    %c0_i32 = arith.constant 0 : i32
    %c0_i32_0 = arith.constant 0 : i32
    %c0_i32_1 = arith.constant 0 : i32
    return %c0_i32, %arg0, %c0_i32_0 : i32, i32, i32
  }
  func.func @transform_16(%arg0: i32) -> (i32, i32) {
    %c0_i32 = arith.constant 0 : i32
    %c0_i32_0 = arith.constant 0 : i32
    return %arg0, %c0_i32 : i32, i32
  }
  func.func @transform_17(%arg0: i32) -> (i32, i32) {
    %c0_i32 = arith.constant 0 : i32
    %c0_i32_0 = arith.constant 0 : i32
    return %arg0, %c0_i32 : i32, i32
  }
}

</mosaic_0001>

<llo_original>
// kernel: tpu_custom_call.1
$region0: #{tpu_custom_call.1}
  #allocation0 [shape = 'u32[]', space=smem, size = 0x4, offset = 0x4, fixed_abs, tag = 'smem constant byte address 0x4 - core index']
  #allocation1 [shape = 'u32[144,128]{1,0:T(1,128)}', space=vmem, size = 0x12000, scoped, tag = 'internal scratch']
  #allocation2 [shape = 'f32[8,16,384]{2,1,0:T(8,128)}', space=vmem, size = 0x30000, scoped, tag = 'scratch operand']
  #allocation3 [shape = 'f32[1,1]{1,0:T(1,128)S(1)}', space=vmem, size = 0x200, scoped, tag = 'scoped memory for tpu_custom_call.1']
  %s0 = inlined_call_operand.hbm [shape: bf16[8,16,128], index: 0, kind: input, shape index: {}]
  %s1 = inlined_call_operand.hbm [shape: f32[16,128], index: 1, kind: input, shape index: {}]
  %s2 = inlined_call_operand.hbm [shape: f32[16,16,128], index: 2, kind: input, shape index: {}]
  %s3 = inlined_call_operand.hbm [shape: f32[16,16], index: 3, kind: input, shape index: {}]
  %s4 = inlined_call_operand.hbm [shape: bf16[128,128], index: 4, kind: input, shape index: {}]
  %s5 = inlined_call_operand.vmem [shape: f32[1,128], index: 5, kind: input, shape index: {}]
  %s6 = inlined_call_operand.hbm [shape: bf16[128,128], index: 6, kind: input, shape index: {}]
  %s7 = inlined_call_operand.vmem [shape: f32[1,128], index: 7, kind: input, shape index: {}]
  %s8 = inlined_call_operand.vmem [shape: f32[1,128], index: 8, kind: input, shape index: {}]
  %s9 = inlined_call_operand.<no memory space> [shape: f32[1,1], index: 9, kind: input, shape index: {}]
  %s10 = inlined_call_operand.hbm [shape: bf16[128,384], index: 10, kind: input, shape index: {}]
  %s11 = inlined_call_operand.hbm [shape: bf16[128,384], index: 11, kind: input, shape index: {}]
  %s12 = inlined_call_operand.hbm [shape: bf16[128,384], index: 12, kind: input, shape index: {}]
  %s13 = inlined_call_operand.vmem [shape: f32[1,384], index: 13, kind: input, shape index: {}]
  %s14 = inlined_call_operand.vmem [shape: f32[1,384], index: 14, kind: input, shape index: {}]
  %s15 = inlined_call_operand.hbm [shape: bf16[8,16,128], index: 15, kind: output, shape index: {0}]
  %s16 = inlined_call_operand.hbm [shape: f32[16,128], index: 16, kind: output, shape index: {1}]
  %s17 = inlined_call_operand.hbm [shape: f32[16,16], index: 17, kind: output, shape index: {2}]
  %18 = xla_tuple %s15, %s16, %s17
  %s19 = sld [smem:[#allocation0]]
  $region122: #{tpu_custom_call.1} parent=0
    _
  %s21 = ssub.s32 1, %s19
  %s22 = scalar_select 0, %s21, %s19
  %v23 = vstv %s9
  %24 = vst [vmem:[#allocation3] sm:$0x1] %v23
  $region1: #{tpu_custom_call.1} parent=0
    #allocation4 [shape = 'u8[32768]{0}', space=vmem, size = 0x8000, scoped, tag = 'input window, operand 0, single buffered']
    #allocation5 [shape = 's32[1]{0}', space=sflag, size = 0x4, scoped, tag = 'scoped memory for tpu_custom_call.1']
    #allocation6 [shape = 's32[1]{0}', space=sflag, size = 0x4, scoped, tag = 'scoped memory for tpu_custom_call.1']
    #allocation7 [shape = 'u8[8192]{0}', space=vmem, size = 0x2000, scoped, tag = 'input window, operand 1, single buffered']
    #allocation8 [shape = 's32[1]{0}', space=sflag, size = 0x4, scoped, tag = 'scoped memory for tpu_custom_call.1']
    #allocation9 [shape = 'u8[131072]{0}', space=vmem, size = 0x20000, scoped, tag = 'input window, operand 2, single buffered']
    #allocation10 [shape = 'u8[8192]{0}', space=vmem, size = 0x2000, scoped, tag = 'input window, operand 3, single buffered']
    #allocation11 [shape = 's32[1]{0}', space=sflag, size = 0x4, scoped, tag = 'scoped memory for tpu_custom_call.1']
    #allocation12 [shape = 'u8[32768]{0}', space=vmem, size = 0x8000, scoped, tag = 'input window, operand 4, single buffered']
    #allocation13 [shape = 'u8[32768]{0}', space=vmem, size = 0x8000, scoped, tag = 'input window, operand 6, single buffered']
    #allocation14 [shape = 's32[1]{0}', space=sflag, size = 0x4, scoped, tag = 'scoped memory for tpu_custom_call.1']
    #allocation15 [shape = 'u8[98304]{0}', space=vmem, size = 0x18000, scoped, tag = 'input window, operand 10, single buffered']
    #allocation16 [shape = 'u8[98304]{0}', space=vmem, size = 0x18000, scoped, tag = 'input window, operand 11, single buffered']
    #allocation17 [shape = 's32[1]{0}', space=sflag, size = 0x4, scoped, tag = 'scoped memory for tpu_custom_call.1']
    #allocation18 [shape = 'u8[98304]{0}', space=vmem, size = 0x18000, scoped, tag = 'input window, operand 12, single buffered']
    #allocation19 [shape = 'u8[32768]{0}', space=vmem, size = 0x8000, scoped, tag = 'output window, operand 0, single buffered']
    #allocation20 [shape = 'u8[8192]{0}', space=vmem, size = 0x2000, scoped, tag = 'output window, operand 1, single buffered']
    #allocation21 [shape = 's32[1]{0}', space=sflag, size = 0x4, scoped, tag = 'scoped memory for tpu_custom_call.1']
    #allocation22 [shape = 'u8[8192]{0}', space=vmem, size = 0x2000, scoped, tag = 'output window, operand 2, single buffered']
    %25 = vsyncpa [#allocation5], 0
    %26 = vsyncpa [#allocation8], 0
    %27 = vsyncpa [#allocation11], 0
    %28 = vsyncpa [#allocation14], 0
    %29 = vsyncpa [#allocation17], 0
    %30 = vsyncpa [#allocation6], 0
    %31 = vsyncpa [#allocation21], 0
    // Predicated region
    $region2: #{tpu_custom_call.1} parent=1 // pred_check
      _
    $region3: #{tpu_custom_call.1} parent=1 // pred_check_branch
      %33 = sbr.rel (0) target = $region5
    $region4: #{tpu_custom_call.1} parent=1 // pred_region
      %s35 = ssub.s32 1024, 1024
      %36 = vsyncadd [#allocation5], %s35
      %s37 = sshll.u32 [#allocation4], 4
      %s38 = int_to_ptr.vmem [resolvable:$true] %s37
      %43 = dma.hbm_to_vmem [thread:$0]  %s0, 1024, %s38, [#allocation5], 64, 64, 4
    $region5: #{tpu_custom_call.1} parent=1 // pred_fallthru
      _
    // Predicated region
    $region6: #{tpu_custom_call.1} parent=1 // pred_check
      _
    $region7: #{tpu_custom_call.1} parent=1 // pred_check_branch
      %45 = sbr.rel (0) target = $region9
    $region8: #{tpu_custom_call.1} parent=1 // pred_region
      %s47 = ssub.s32 256, 256
      %48 = vsyncadd [#allocation8], %s47
      %s49 = sshll.u32 [#allocation7], 4
      %s50 = int_to_ptr.vmem [resolvable:$true] %s49
      %55 = dma.hbm_to_vmem [thread:$0]  %s1, 256, %s50, [#allocation8], 128, 128, 8
    $region9: #{tpu_custom_call.1} parent=1 // pred_fallthru
      _
    // Predicated region
    $region10: #{tpu_custom_call.1} parent=1 // pred_check
      _
    $region11: #{tpu_custom_call.1} parent=1 // pred_check_branch
      %57 = sbr.rel (0) target = $region13
    $region12: #{tpu_custom_call.1} parent=1 // pred_region
      %s59 = ssub.s32 4096, 4096
      %60 = vsyncadd [#allocation8], %s59
      %s61 = sshll.u32 [#allocation9], 4
      %s62 = int_to_ptr.vmem [resolvable:$true] %s61
      %67 = dma.hbm_to_vmem [thread:$0]  %s2, 4096, %s62, [#allocation8], 128, 128, 8
    $region13: #{tpu_custom_call.1} parent=1 // pred_fallthru
      _
    // Predicated region
    $region14: #{tpu_custom_call.1} parent=1 // pred_check
      _
    $region15: #{tpu_custom_call.1} parent=1 // pred_check_branch
      %69 = sbr.rel (0) target = $region17
    $region16: #{tpu_custom_call.1} parent=1 // pred_region
      %s71 = ssub.s32 256, 256
      %72 = vsyncadd [#allocation11], %s71
      %s73 = sshll.u32 [#allocation10], 4
      %s74 = int_to_ptr.vmem [resolvable:$true] %s73
      %79 = dma.hbm_to_vmem [thread:$0]  %s3, 256, %s74, [#allocation11], 128, 128, 8
    $region17: #{tpu_custom_call.1} parent=1 // pred_fallthru
      _
    // Predicated region
    $region18: #{tpu_custom_call.1} parent=1 // pred_check
      _
    $region19: #{tpu_custom_call.1} parent=1 // pred_check_branch
      %81 = sbr.rel (0) target = $region21
    $region20: #{tpu_custom_call.1} parent=1 // pred_region
      %s83 = ssub.s32 1024, 1024
      %84 = vsyncadd [#allocation11], %s83
      %s85 = sshll.u32 [#allocation12], 4
      %s86 = int_to_ptr.vmem [resolvable:$true] %s85
      %91 = dma.hbm_to_vmem [thread:$0]  %s4, 1024, %s86, [#allocation11], 64, 64, 4
    $region21: #{tpu_custom_call.1} parent=1 // pred_fallthru
      _
    // Predicated region
    $region22: #{tpu_custom_call.1} parent=1 // pred_check
      _
    $region23: #{tpu_custom_call.1} parent=1 // pred_check_branch
      %93 = sbr.rel (0) target = $region25
    $region24: #{tpu_custom_call.1} parent=1 // pred_region
      _
    $region25: #{tpu_custom_call.1} parent=1 // pred_fallthru
      _
    // Predicated region
    $region26: #{tpu_custom_call.1} parent=1 // pred_check
      _
    $region27: #{tpu_custom_call.1} parent=1 // pred_check_branch
      %95 = sbr.rel (0) target = $region29
    $region28: #{tpu_custom_call.1} parent=1 // pred_region
      %s97 = ssub.s32 1024, 1024
      %98 = vsyncadd [#allocation14], %s97
      %s99 = sshll.u32 [#allocation13], 4
      %s100 = int_to_ptr.vmem [resolvable:$true] %s99
      %105 = dma.hbm_to_vmem [thread:$0]  %s6, 1024, %s100, [#allocation14], 64, 64, 4
    $region29: #{tpu_custom_call.1} parent=1 // pred_fallthru
      _
    // Predicated region
    $region30: #{tpu_custom_call.1} parent=1 // pred_check
      _
    $region31: #{tpu_custom_call.1} parent=1 // pred_check_branch
      %107 = sbr.rel (0) target = $region33
    $region32: #{tpu_custom_call.1} parent=1 // pred_region
      _
    $region33: #{tpu_custom_call.1} parent=1 // pred_fallthru
      _
    // Predicated region
    $region34: #{tpu_custom_call.1} parent=1 // pred_check
      _
    $region35: #{tpu_custom_call.1} parent=1 // pred_check_branch
      %109 = sbr.rel (0) target = $region37
    $region36: #{tpu_custom_call.1} parent=1 // pred_region
      _
    $region37: #{tpu_custom_call.1} parent=1 // pred_fallthru
      _
    // Predicated region
    $region38: #{tpu_custom_call.1} parent=1 // pred_check
      _
    $region39: #{tpu_custom_call.1} parent=1 // pred_check_branch
      %111 = sbr.rel (0) target = $region41
    $region40: #{tpu_custom_call.1} parent=1 // pred_region
      _
    $region41: #{tpu_custom_call.1} parent=1 // pred_fallthru
      _
    // Predicated region
    $region42: #{tpu_custom_call.1} parent=1 // pred_check
      _
    $region43: #{tpu_custom_call.1} parent=1 // pred_check_branch
      %113 = sbr.rel (0) target = $region45
    $region44: #{tpu_custom_call.1} parent=1 // pred_region
      %s115 = ssub.s32 3072, 3072
      %116 = vsyncadd [#allocation14], %s115
      %s117 = sshll.u32 [#allocation15], 4
      %s118 = int_to_ptr.vmem [resolvable:$true] %s117
      %123 = dma.hbm_to_vmem [thread:$0]  %s10, 3072, %s118, [#allocation14], 192, 192, 12
    $region45: #{tpu_custom_call.1} parent=1 // pred_fallthru
      _
    // Predicated region
    $region46: #{tpu_custom_call.1} parent=1 // pred_check
      _
    $region47: #{tpu_custom_call.1} parent=1 // pred_check_branch
      %125 = sbr.rel (0) target = $region49
    $region48: #{tpu_custom_call.1} parent=1 // pred_region
      %s127 = ssub.s32 3072, 3072
      %128 = vsyncadd [#allocation17], %s127
      %s129 = sshll.u32 [#allocation16], 4
      %s130 = int_to_ptr.vmem [resolvable:$true] %s129
      %135 = dma.hbm_to_vmem [thread:$0]  %s11, 3072, %s130, [#allocation17], 192, 192, 12
    $region49: #{tpu_custom_call.1} parent=1 // pred_fallthru
      _
    // Predicated region
    $region50: #{tpu_custom_call.1} parent=1 // pred_check
      _
    $region51: #{tpu_custom_call.1} parent=1 // pred_check_branch
      %137 = sbr.rel (0) target = $region53
    $region52: #{tpu_custom_call.1} parent=1 // pred_region
      %s139 = ssub.s32 3072, 3072
      %140 = vsyncadd [#allocation17], %s139
      %s141 = sshll.u32 [#allocation18], 4
      %s142 = int_to_ptr.vmem [resolvable:$true] %s141
      %147 = dma.hbm_to_vmem [thread:$0]  %s12, 3072, %s142, [#allocation17], 192, 192, 12
    $region53: #{tpu_custom_call.1} parent=1 // pred_fallthru
      _
    // Predicated region
    $region54: #{tpu_custom_call.1} parent=1 // pred_check
      _
    $region55: #{tpu_custom_call.1} parent=1 // pred_check_branch
      %149 = sbr.rel (0) target = $region57
    $region56: #{tpu_custom_call.1} parent=1 // pred_region
      _
    $region57: #{tpu_custom_call.1} parent=1 // pred_fallthru
      _
    // Predicated region
    $region58: #{tpu_custom_call.1} parent=1 // pred_check
      _
    $region59: #{tpu_custom_call.1} parent=1 // pred_check_branch
      %151 = sbr.rel (0) target = $region61
    $region60: #{tpu_custom_call.1} parent=1 // pred_region
      _
    $region61: #{tpu_custom_call.1} parent=1 // pred_fallthru
      _
    // Predicated region
    $region62: #{tpu_custom_call.1} parent=1 // pred_check
      _
    $region63: #{tpu_custom_call.1} parent=1 // pred_check_branch
      %153 = sbr.rel (0) target = $region65
    $region64: #{tpu_custom_call.1} parent=1 // pred_region
      %154 = dma.done [#allocation5], 1024
    $region65: #{tpu_custom_call.1} parent=1 // pred_fallthru
      _
    // Predicated region
    $region66: #{tpu_custom_call.1} parent=1 // pred_check
      _
    $region67: #{tpu_custom_call.1} parent=1 // pred_check_branch
      %156 = sbr.rel (0) target = $region69
    $region68: #{tpu_custom_call.1} parent=1 // pred_region
      %157 = dma.done [#allocation8], 256
    $region69: #{tpu_custom_call.1} parent=1 // pred_fallthru
      _
    // Predicated region
    $region70: #{tpu_custom_call.1} parent=1 // pred_check
      _
    $region71: #{tpu_custom_call.1} parent=1 // pred_check_branch
      %159 = sbr.rel (0) target = $region73
    $region72: #{tpu_custom_call.1} parent=1 // pred_region
      %160 = dma.done [#allocation8], 4096
    $region73: #{tpu_custom_call.1} parent=1 // pred_fallthru
      _
    // Predicated region
    $region74: #{tpu_custom_call.1} parent=1 // pred_check
      _
    $region75: #{tpu_custom_call.1} parent=1 // pred_check_branch
      %162 = sbr.rel (0) target = $region77
    $region76: #{tpu_custom_call.1} parent=1 // pred_region
      %163 = dma.done [#allocation11], 256
    $region77: #{tpu_custom_call.1} parent=1 // pred_fallthru
      _
    // Predicated region
    $region78: #{tpu_custom_call.1} parent=1 // pred_check
      _
    $region79: #{tpu_custom_call.1} parent=1 // pred_check_branch
      %165 = sbr.rel (0) target = $region81
    $region80: #{tpu_custom_call.1} parent=1 // pred_region
      %166 = dma.done [#allocation11], 1024
    $region81: #{tpu_custom_call.1} parent=1 // pred_fallthru
      _
    // Predicated region
    $region82: #{tpu_custom_call.1} parent=1 // pred_check
      _
    $region83: #{tpu_custom_call.1} parent=1 // pred_check_branch
      %168 = sbr.rel (0) target = $region85
    $region84: #{tpu_custom_call.1} parent=1 // pred_region
      %169 = dma.done [#allocation14], 1024
    $region85: #{tpu_custom_call.1} parent=1 // pred_fallthru
      _
    // Predicated region
    $region86: #{tpu_custom_call.1} parent=1 // pred_check
      _
    $region87: #{tpu_custom_call.1} parent=1 // pred_check_branch
      %171 = sbr.rel (0) target = $region89
    $region88: #{tpu_custom_call.1} parent=1 // pred_region
      %172 = dma.done [#allocation14], 3072
    $region89: #{tpu_custom_call.1} parent=1 // pred_fallthru
      _
    // Predicated region
    $region90: #{tpu_custom_call.1} parent=1 // pred_check
      _
    $region91: #{tpu_custom_call.1} parent=1 // pred_check_branch
      %174 = sbr.rel (0) target = $region93
    $region92: #{tpu_custom_call.1} parent=1 // pred_region
      %175 = dma.done [#allocation17], 3072
    $region93: #{tpu_custom_call.1} parent=1 // pred_fallthru
      _
    // Predicated region
    $region94: #{tpu_custom_call.1} parent=1 // pred_check
      _
    $region95: #{tpu_custom_call.1} parent=1 // pred_check_branch
      %177 = sbr.rel (0) target = $region97
    $region96: #{tpu_custom_call.1} parent=1 // pred_region
      %178 = dma.done [#allocation17], 3072
    $region97: #{tpu_custom_call.1} parent=1 // pred_fallthru
      _
    %v180 = vld [vmem:[#allocation9] sm:$0xff]
    %v181 = vld [vmem:[#allocation9 + $0x8] sm:$0xff]
    %v182 = vld [vmem:[#allocation9 + $0x10] sm:$0xff]
    %v183 = vld [vmem:[#allocation9 + $0x18] sm:$0xff]
    %v184 = vld [vmem:[#allocation9 + $0x20] sm:$0xff]
    %v185 = vld [vmem:[#allocation9 + $0x28] sm:$0xff]
    %v186 = vld [vmem:[#allocation9 + $0x30] sm:$0xff]
    %v187 = vld [vmem:[#allocation9 + $0x38] sm:$0xff]
    %v188 = vld [vmem:[#allocation9 + $0x40] sm:$0xff]
    %v189 = vld [vmem:[#allocation9 + $0x48] sm:$0xff]
    %v190 = vld [vmem:[#allocation9 + $0x50] sm:$0xff]
    %v191 = vld [vmem:[#allocation9 + $0x58] sm:$0xff]
    %v192 = vld [vmem:[#allocation9 + $0x60] sm:$0xff]
    %v193 = vld [vmem:[#allocation9 + $0x68] sm:$0xff]
    %v194 = vld [vmem:[#allocation9 + $0x70] sm:$0xff]
    %v195 = vld [vmem:[#allocation9 + $0x78] sm:$0xff]
    %v196 = vld [vmem:[#allocation9 + $0x80] sm:$0xff]
    %v197 = vld [vmem:[#allocation9 + $0x88] sm:$0xff]
    %v198 = vld [vmem:[#allocation9 + $0x90] sm:$0xff]
    %v199 = vld [vmem:[#allocation9 + $0x98] sm:$0xff]
    %v200 = vld [vmem:[#allocation9 + $0xa0] sm:$0xff]
    %v201 = vld [vmem:[#allocation9 + $0xa8] sm:$0xff]
    %v202 = vld [vmem:[#allocation9 + $0xb0] sm:$0xff]
    %v203 = vld [vmem:[#allocation9 + $0xb8] sm:$0xff]
    %v204 = vld [vmem:[#allocation9 + $0xc0] sm:$0xff]
    %v205 = vld [vmem:[#allocation9 + $0xc8] sm:$0xff]
    %v206 = vld [vmem:[#allocation9 + $0xd0] sm:$0xff]
    %v207 = vld [vmem:[#allocation9 + $0xd8] sm:$0xff]
    %v208 = vld [vmem:[#allocation9 + $0xe0] sm:$0xff]
    %v209 = vld [vmem:[#allocation9 + $0xe8] sm:$0xff]
    %v210 = vld [vmem:[#allocation9 + $0xf0] sm:$0xff]
    %v211 = vld [vmem:[#allocation9 + $0xf8] sm:$0xff]
    %v212 = vld [vmem:[#allocation7] sm:$0xff]
    %v213 = vld [vmem:[#allocation7 + $0x8] sm:$0xff]
    %v214 = vpack.c.bf16 %v181, %v180
    %v215 = vpack.c.bf16 %v183, %v182
    %v216 = vpack.c.bf16 %v185, %v184
    %v217 = vpack.c.bf16 %v187, %v186
    %v218 = vpack.c.bf16 %v189, %v188
    %v219 = vpack.c.bf16 %v191, %v190
    %v220 = vpack.c.bf16 %v193, %v192
    %v221 = vpack.c.bf16 %v195, %v194
    %v222 = vpack.c.bf16 %v197, %v196
    %v223 = vpack.c.bf16 %v199, %v198
    %v224 = vpack.c.bf16 %v201, %v200
    %v225 = vpack.c.bf16 %v203, %v202
    %v226 = vpack.c.bf16 %v205, %v204
    %v227 = vpack.c.bf16 %v207, %v206
    %v228 = vpack.c.bf16 %v209, %v208
    %v229 = vpack.c.bf16 %v211, %v210
    %v230 = vld [vmem:[#allocation12] sm:$0xf]
    %v231 = vld [vmem:[#allocation12 + $0x4] sm:$0xf]
    %v232 = vld [vmem:[#allocation12 + $0x8] sm:$0xf]
    %v233 = vld [vmem:[#allocation12 + $0xc] sm:$0xf]
    %v234 = vld [vmem:[#allocation12 + $0x10] sm:$0xf]
    %v235 = vld [vmem:[#allocation12 + $0x14] sm:$0xf]
    %v236 = vld [vmem:[#allocation12 + $0x18] sm:$0xf]
    %v237 = vld [vmem:[#allocation12 + $0x1c] sm:$0xf]
    %v238 = vld [vmem:[#allocation12 + $0x20] sm:$0xf]
    %v239 = vld [vmem:[#allocation12 + $0x24] sm:$0xf]
    %v240 = vld [vmem:[#allocation12 + $0x28] sm:$0xf]
    %v241 = vld [vmem:[#allocation12 + $0x2c] sm:$0xf]
    %v242 = vld [vmem:[#allocation12 + $0x30] sm:$0xf]
    %v243 = vld [vmem:[#allocation12 + $0x34] sm:$0xf]
    %v244 = vld [vmem:[#allocation12 + $0x38] sm:$0xf]
    %v245 = vld [vmem:[#allocation12 + $0x3c] sm:$0xf]
    %v246 = vld [vmem:[%s5] sm:$0x1]
    %v248 = vlaneseq
    %v249 = vshrl.u32 %v248, 7
    %v250 = vsub.s32 0, %v249
    %v251 = vrot.slane %v246, %v250
    %v269 = vunpack.c.l.b16 %v230
    %v270 = vunpack.c.l.b16 %v231
    %v271 = vunpack.c.l.b16 %v232
    %v272 = vunpack.c.l.b16 %v233
    %v273 = vunpack.c.l.b16 %v234
    %v274 = vunpack.c.l.b16 %v235
    %v275 = vunpack.c.l.b16 %v236
    %v276 = vunpack.c.l.b16 %v237
    %v277 = vunpack.c.l.b16 %v238
    %v278 = vunpack.c.l.b16 %v239
    %v279 = vunpack.c.l.b16 %v240
    %v280 = vunpack.c.l.b16 %v241
    %v281 = vunpack.c.l.b16 %v242
    %v282 = vunpack.c.l.b16 %v243
    %v283 = vunpack.c.l.b16 %v244
    %v284 = vunpack.c.l.b16 %v245
    %v285 = vpack.c.b16 %v270, %v269
    %v286 = vpack.c.b16 %v272, %v271
    %v287 = vpack.c.b16 %v274, %v273
    %v288 = vpack.c.b16 %v276, %v275
    %v289 = vpack.c.b16 %v278, %v277
    %v290 = vpack.c.b16 %v280, %v279
    %v291 = vpack.c.b16 %v282, %v281
    %v292 = vpack.c.b16 %v284, %v283
    %301 = vmatprep.subr.bf16.mxu0 0
    %302 = vmatpush1.bf16.msra.mxu0 %v285
    %303 = vmatprep.subr.bf16.mxu0 0
    %304 = vmatpush1.bf16.msra.mxu0 %v286
    %305 = vmatprep.subr.bf16.mxu0 0
    %306 = vmatpush1.bf16.msra.mxu0 %v287
    %307 = vmatprep.subr.bf16.mxu0 0
    %308 = vmatpush1.bf16.msra.mxu0 %v288
    %309 = vmatprep.subr.bf16.mxu0 0
    %310 = vmatpush1.bf16.msra.mxu0 %v289
    %311 = vmatprep.subr.bf16.mxu0 0
    %312 = vmatpush1.bf16.msra.mxu0 %v290
    %313 = vmatprep.subr.bf16.mxu0 0
    %314 = vmatpush1.bf16.msra.mxu0 %v291
    %315 = vmatprep.subr.bf16.mxu0 0
    %316 = vmatpush1.bf16.msra.mxu0 %v292
    %317 = vmatprep.subr.bf16.mxu0 0
    %318 = vmatpush1.bf16.msra.mxu0 0
    %319 = vmatprep.subr.bf16.mxu0 0
    %320 = vmatpush1.bf16.msra.mxu0 0
    %321 = vmatprep.subr.bf16.mxu0 0
    %322 = vmatpush1.bf16.msra.mxu0 0
    %323 = vmatprep.subr.bf16.mxu0 0
    %324 = vmatpush1.bf16.msra.mxu0 0
    %325 = vmatprep.subr.bf16.mxu0 0
    %326 = vmatpush1.bf16.msra.mxu0 0
    %327 = vmatprep.subr.bf16.mxu0 0
    %328 = vmatpush1.bf16.msra.mxu0 0
    %329 = vmatprep.subr.bf16.mxu0 0
    %330 = vmatpush1.bf16.msra.mxu0 0
    %331 = vmatprep.subr.bf16.mxu0 0
    %332 = vmatpush1.bf16.msra.mxu0 0
    %333 = vmatprep.mubr.bf16.mxu0 0
    %334 = vmatmul.mubr.bf16.gmra.mrb[0].mxu0 %v214
    %v335 = vpop.f32.mrb[0].mxu0
    %v336 = vadd.f32 %v251, %v335
    %v337 = vpop.f32.mrb[0].mxu0
    %v338 = vpop.f32.mrb[0].mxu0
    %v339 = vadd.f32 %v251, %v338
    %v340 = vpop.f32.mrb[0].mxu0
    %341 = vmatprep.mubr.bf16.mxu0 0
    %342 = vmatmul.mubr.bf16.gmra.mrb[0].mxu0 %v215
    %v343 = vpop.f32.mrb[0].mxu0
    %v344 = vadd.f32 %v251, %v343
    %v345 = vpop.f32.mrb[0].mxu0
    %v346 = vpop.f32.mrb[0].mxu0
    %v347 = vadd.f32 %v251, %v346
    %v348 = vpop.f32.mrb[0].mxu0
    %349 = vmatprep.mubr.bf16.mxu0 0
    %350 = vmatmul.mubr.bf16.gmra.mrb[0].mxu0 %v216
    %v351 = vpop.f32.mrb[0].mxu0
    %v352 = vadd.f32 %v251, %v351
    %v353 = vpop.f32.mrb[0].mxu0
    %v354 = vpop.f32.mrb[0].mxu0
    %v355 = vadd.f32 %v251, %v354
    %v356 = vpop.f32.mrb[0].mxu0
    %357 = vmatprep.mubr.bf16.mxu0 0
    %358 = vmatmul.mubr.bf16.gmra.mrb[0].mxu0 %v217
    %v359 = vpop.f32.mrb[0].mxu0
    %v360 = vadd.f32 %v251, %v359
    %v361 = vpop.f32.mrb[0].mxu0
    %v362 = vpop.f32.mrb[0].mxu0
    %v363 = vadd.f32 %v251, %v362
    %v364 = vpop.f32.mrb[0].mxu0
    %365 = vmatprep.mubr.bf16.mxu0 0
    %366 = vmatmul.mubr.bf16.gmra.mrb[0].mxu0 %v218
    %v367 = vpop.f32.mrb[0].mxu0
    %v368 = vadd.f32 %v251, %v367
    %v369 = vpop.f32.mrb[0].mxu0
    %v370 = vpop.f32.mrb[0].mxu0
    %v371 = vadd.f32 %v251, %v370
    %v372 = vpop.f32.mrb[0].mxu0
    %373 = vmatprep.mubr.bf16.mxu0 0
    %374 = vmatmul.mubr.bf16.gmra.mrb[0].mxu0 %v219
    %v375 = vpop.f32.mrb[0].mxu0
    %v376 = vadd.f32 %v251, %v375
    %v377 = vpop.f32.mrb[0].mxu0
    %v378 = vpop.f32.mrb[0].mxu0
    %v379 = vadd.f32 %v251, %v378
    %v380 = vpop.f32.mrb[0].mxu0
    %381 = vmatprep.mubr.bf16.mxu0 0
    %382 = vmatmul.mubr.bf16.gmra.mrb[0].mxu0 %v220
    %v383 = vpop.f32.mrb[0].mxu0
    %v384 = vadd.f32 %v251, %v383
    %v385 = vpop.f32.mrb[0].mxu0
    %v386 = vpop.f32.mrb[0].mxu0
    %v387 = vadd.f32 %v251, %v386
    %v388 = vpop.f32.mrb[0].mxu0
    %389 = vmatprep.mubr.bf16.mxu0 0
    %390 = vmatmul.mubr.bf16.gmra.mrb[0].mxu0 %v221
    %v391 = vpop.f32.mrb[0].mxu0
    %v392 = vadd.f32 %v251, %v391
    %v393 = vpop.f32.mrb[0].mxu0
    %v394 = vpop.f32.mrb[0].mxu0
    %v395 = vadd.f32 %v251, %v394
    %v396 = vpop.f32.mrb[0].mxu0
    %397 = vmatprep.mubr.bf16.mxu0 0
    %398 = vmatmul.mubr.bf16.gmra.mrb[0].mxu0 %v222
    %v399 = vpop.f32.mrb[0].mxu0
    %v400 = vadd.f32 %v251, %v399
    %v401 = vpop.f32.mrb[0].mxu0
    %v402 = vpop.f32.mrb[0].mxu0
    %v403 = vadd.f32 %v251, %v402
    %v404 = vpop.f32.mrb[0].mxu0
    %405 = vmatprep.mubr.bf16.mxu0 0
    %406 = vmatmul.mubr.bf16.gmra.mrb[0].mxu0 %v223
    %v407 = vpop.f32.mrb[0].mxu0
    %v408 = vadd.f32 %v251, %v407
    %v409 = vpop.f32.mrb[0].mxu0
    %v410 = vpop.f32.mrb[0].mxu0
    %v411 = vadd.f32 %v251, %v410
    %v412 = vpop.f32.mrb[0].mxu0
    %413 = vmatprep.mubr.bf16.mxu0 0
    %414 = vmatmul.mubr.bf16.gmra.mrb[0].mxu0 %v224
    %v415 = vpop.f32.mrb[0].mxu0
    %v416 = vadd.f32 %v251, %v415
    %v417 = vpop.f32.mrb[0].mxu0
    %v418 = vpop.f32.mrb[0].mxu0
    %v419 = vadd.f32 %v251, %v418
    %v420 = vpop.f32.mrb[0].mxu0
    %421 = vmatprep.mubr.bf16.mxu0 0
    %422 = vmatmul.mubr.bf16.gmra.mrb[0].mxu0 %v225
    %v423 = vpop.f32.mrb[0].mxu0
    %v424 = vadd.f32 %v251, %v423
    %v425 = vpop.f32.mrb[0].mxu0
    %v426 = vpop.f32.mrb[0].mxu0
    %v427 = vadd.f32 %v251, %v426
    %v428 = vpop.f32.mrb[0].mxu0
    %429 = vmatprep.mubr.bf16.mxu0 0
    %430 = vmatmul.mubr.bf16.gmra.mrb[0].mxu0 %v226
    %v431 = vpop.f32.mrb[0].mxu0
    %v432 = vadd.f32 %v251, %v431
    %v433 = vpop.f32.mrb[0].mxu0
    %v434 = vpop.f32.mrb[0].mxu0
    %v435 = vadd.f32 %v251, %v434
    %v436 = vpop.f32.mrb[0].mxu0
    %437 = vmatprep.mubr.bf16.mxu0 0
    %438 = vmatmul.mubr.bf16.gmra.mrb[0].mxu0 %v227
    %v439 = vpop.f32.mrb[0].mxu0
    %v440 = vadd.f32 %v251, %v439
    %v441 = vpop.f32.mrb[0].mxu0
    %v442 = vpop.f32.mrb[0].mxu0
    %v443 = vadd.f32 %v251, %v442
    %v444 = vpop.f32.mrb[0].mxu0
    %445 = vmatprep.mubr.bf16.mxu0 0
    %446 = vmatmul.mubr.bf16.gmra.mrb[0].mxu0 %v228
    %v447 = vpop.f32.mrb[0].mxu0
    %v448 = vadd.f32 %v251, %v447
    %v449 = vpop.f32.mrb[0].mxu0
    %v450 = vpop.f32.mrb[0].mxu0
    %v451 = vadd.f32 %v251, %v450
    %v452 = vpop.f32.mrb[0].mxu0
    %453 = vmatprep.mubr.bf16.mxu0 0
    %454 = vmatmul.mubr.bf16.gmra.mrb[0].mxu0 %v229
    %v455 = vpop.f32.mrb[0].mxu0
    %v456 = vadd.f32 %v251, %v455
    %v457 = vpop.f32.mrb[0].mxu0
    %v458 = vpop.f32.mrb[0].mxu0
    %v459 = vadd.f32 %v251, %v458
    %v460 = vpop.f32.mrb[0].mxu0
    %461 = vdwg.mxu0
    %v462 = vpack.c.bf16 %v213, %v212
    %v463 = vld [vmem:[#allocation13] sm:$0xf]
    %v464 = vld [vmem:[#allocation13 + $0x4] sm:$0xf]
    %v465 = vld [vmem:[#allocation13 + $0x8] sm:$0xf]
    %v466 = vld [vmem:[#allocation13 + $0xc] sm:$0xf]
    %v467 = vld [vmem:[#allocation13 + $0x10] sm:$0xf]
    %v468 = vld [vmem:[#allocation13 + $0x14] sm:$0xf]
    %v469 = vld [vmem:[#allocation13 + $0x18] sm:$0xf]
    %v470 = vld [vmem:[#allocation13 + $0x1c] sm:$0xf]
    %v471 = vld [vmem:[#allocation13 + $0x20] sm:$0xf]
    %v472 = vld [vmem:[#allocation13 + $0x24] sm:$0xf]
    %v473 = vld [vmem:[#allocation13 + $0x28] sm:$0xf]
    %v474 = vld [vmem:[#allocation13 + $0x2c] sm:$0xf]
    %v475 = vld [vmem:[#allocation13 + $0x30] sm:$0xf]
    %v476 = vld [vmem:[#allocation13 + $0x34] sm:$0xf]
    %v477 = vld [vmem:[#allocation13 + $0x38] sm:$0xf]
    %v478 = vld [vmem:[#allocation13 + $0x3c] sm:$0xf]
    %v479 = vld [vmem:[%s7] sm:$0x1]
    %v481 = vlaneseq
    %v482 = vshrl.u32 %v481, 7
    %v483 = vsub.s32 0, %v482
    %v484 = vrot.slane %v479, %v483
    %v502 = vunpack.c.l.b16 %v463
    %v503 = vunpack.c.l.b16 %v464
    %v504 = vunpack.c.l.b16 %v465
    %v505 = vunpack.c.l.b16 %v466
    %v506 = vunpack.c.l.b16 %v467
    %v507 = vunpack.c.l.b16 %v468
    %v508 = vunpack.c.l.b16 %v469
    %v509 = vunpack.c.l.b16 %v470
    %v510 = vunpack.c.l.b16 %v471
    %v511 = vunpack.c.l.b16 %v472
    %v512 = vunpack.c.l.b16 %v473
    %v513 = vunpack.c.l.b16 %v474
    %v514 = vunpack.c.l.b16 %v475
    %v515 = vunpack.c.l.b16 %v476
    %v516 = vunpack.c.l.b16 %v477
    %v517 = vunpack.c.l.b16 %v478
    %v518 = vpack.c.b16 %v503, %v502
    %v519 = vpack.c.b16 %v505, %v504
    %v520 = vpack.c.b16 %v507, %v506
    %v521 = vpack.c.b16 %v509, %v508
    %v522 = vpack.c.b16 %v511, %v510
    %v523 = vpack.c.b16 %v513, %v512
    %v524 = vpack.c.b16 %v515, %v514
    %v525 = vpack.c.b16 %v517, %v516
    %534 = vmatprep.subr.bf16.mxu0 0
    %535 = vmatpush1.bf16.msra.mxu0 %v518
    %536 = vmatprep.subr.bf16.mxu0 0
    %537 = vmatpush1.bf16.msra.mxu0 %v519
    %538 = vmatprep.subr.bf16.mxu0 0
    %539 = vmatpush1.bf16.msra.mxu0 %v520
    %540 = vmatprep.subr.bf16.mxu0 0
    %541 = vmatpush1.bf16.msra.mxu0 %v521
    %542 = vmatprep.subr.bf16.mxu0 0
    %543 = vmatpush1.bf16.msra.mxu0 %v522
    %544 = vmatprep.subr.bf16.mxu0 0
    %545 = vmatpush1.bf16.msra.mxu0 %v523
    %546 = vmatprep.subr.bf16.mxu0 0
    %547 = vmatpush1.bf16.msra.mxu0 %v524
    %548 = vmatprep.subr.bf16.mxu0 0
    %549 = vmatpush1.bf16.msra.mxu0 %v525
    %550 = vmatprep.subr.bf16.mxu0 0
    %551 = vmatpush1.bf16.msra.mxu0 0
    %552 = vmatprep.subr.bf16.mxu0 0
    %553 = vmatpush1.bf16.msra.mxu0 0
    %554 = vmatprep.subr.bf16.mxu0 0
    %555 = vmatpush1.bf16.msra.mxu0 0
    %556 = vmatprep.subr.bf16.mxu0 0
    %557 = vmatpush1.bf16.msra.mxu0 0
    %558 = vmatprep.subr.bf16.mxu0 0
    %559 = vmatpush1.bf16.msra.mxu0 0
    %560 = vmatprep.subr.bf16.mxu0 0
    %561 = vmatpush1.bf16.msra.mxu0 0
    %562 = vmatprep.subr.bf16.mxu0 0
    %563 = vmatpush1.bf16.msra.mxu0 0
    %564 = vmatprep.subr.bf16.mxu0 0
    %565 = vmatpush1.bf16.msra.mxu0 0
    %566 = vmatprep.mubr.bf16.mxu0 0
    %567 = vmatmul.mubr.bf16.gmra.mrb[0].mxu0 %v462
    %v568 = vpop.f32.mrb[0].mxu0
    %v569 = vadd.f32 %v484, %v568
    %v570 = vpop.f32.mrb[0].mxu0
    %v571 = vpop.f32.mrb[0].mxu0
    %v572 = vadd.f32 %v484, %v571
    %v573 = vpop.f32.mrb[0].mxu0
    %574 = vdwg.mxu0
    %v577 = vcombine.high %v569, %v569
    %v579 = vunpack.c.l.s4 1966171168
    %v580 = vunpack.c.0.s8 %v579
    %v581 = vlaneseq
    %v582 = vshrl.u32 %v581, 7
    %v583 = vsub.s32 %v580, %v582
    %v584 = vrot.slane %v569, %v583
    %v586 = vunpack.c.l.s4 1966171168
    %v587 = vunpack.c.0.s8 %v586
    %v588 = vlaneseq
    %v589 = vshrl.u32 %v588, 7
    %v590 = vsub.s32 %v587, %v589
    %v591 = vrot.slane %v577, %v590
    %v592 = vcombine.high %v584, %v584
    %v593 = vcombine.high %v591, %v591
    %v595 = vunpack.c.l.s4 1966171168
    %v596 = vunpack.c.0.s8 %v595
    %v597 = vlaneseq
    %v598 = vshrl.u32 %v597, 7
    %v599 = vsub.s32 %v596, %v598
    %v600 = vrot.slane %v584, %v599
    %v602 = vunpack.c.l.s4 1966171168
    %v603 = vunpack.c.0.s8 %v602
    %v604 = vlaneseq
    %v605 = vshrl.u32 %v604, 7
    %v606 = vsub.s32 %v603, %v605
    %v607 = vrot.slane %v591, %v606
    %v609 = vunpack.c.l.s4 1966171168
    %v610 = vunpack.c.0.s8 %v609
    %v611 = vlaneseq
    %v612 = vshrl.u32 %v611, 7
    %v613 = vsub.s32 %v610, %v612
    %v614 = vrot.slane %v592, %v613
    %v616 = vunpack.c.l.s4 1966171168
    %v617 = vunpack.c.0.s8 %v616
    %v618 = vlaneseq
    %v619 = vshrl.u32 %v618, 7
    %v620 = vsub.s32 %v617, %v619
    %v621 = vrot.slane %v593, %v620
    %v622 = vcombine.high %v600, %v600
    %v623 = vcombine.high %v607, %v607
    %v624 = vcombine.high %v614, %v614
    %v625 = vcombine.high %v621, %v621
    %v626 = vcombine.high %v572, %v572
    %v628 = vunpack.c.l.s4 1966171168
    %v629 = vunpack.c.0.s8 %v628
    %v630 = vlaneseq
    %v631 = vshrl.u32 %v630, 7
    %v632 = vsub.s32 %v629, %v631
    %v633 = vrot.slane %v572, %v632
    %v635 = vunpack.c.l.s4 1966171168
    %v636 = vunpack.c.0.s8 %v635
    %v637 = vlaneseq
    %v638 = vshrl.u32 %v637, 7
    %v639 = vsub.s32 %v636, %v638
    %v640 = vrot.slane %v626, %v639
    %v641 = vcombine.high %v633, %v633
    %v642 = vcombine.high %v640, %v640
    %v644 = vunpack.c.l.s4 1966171168
    %v645 = vunpack.c.0.s8 %v644
    %v646 = vlaneseq
    %v647 = vshrl.u32 %v646, 7
    %v648 = vsub.s32 %v645, %v647
    %v649 = vrot.slane %v633, %v648
    %v651 = vunpack.c.l.s4 1966171168
    %v652 = vunpack.c.0.s8 %v651
    %v653 = vlaneseq
    %v654 = vshrl.u32 %v653, 7
    %v655 = vsub.s32 %v652, %v654
    %v656 = vrot.slane %v640, %v655
    %v658 = vunpack.c.l.s4 1966171168
    %v659 = vunpack.c.0.s8 %v658
    %v660 = vlaneseq
    %v661 = vshrl.u32 %v660, 7
    %v662 = vsub.s32 %v659, %v661
    %v663 = vrot.slane %v641, %v662
    %v665 = vunpack.c.l.s4 1966171168
    %v666 = vunpack.c.0.s8 %v665
    %v667 = vlaneseq
    %v668 = vshrl.u32 %v667, 7
    %v669 = vsub.s32 %v666, %v668
    %v670 = vrot.slane %v642, %v669
    %v671 = vcombine.high %v649, %v649
    %v672 = vcombine.high %v656, %v656
    %v673 = vcombine.high %v663, %v663
    %v674 = vcombine.high %v670, %v670
    %v675 = vlaneseq
    %v676 = vshrl.u32 %v675, 7
    %v677 = vsub.s32 0, %v676
    %v678 = vrot.slane %v600, %v677
    %v679 = vlaneseq
    %v680 = vshrl.u32 %v679, 7
    %v681 = vsub.s32 0, %v680
    %v682 = vrot.slane %v614, %v681
    %v683 = vlaneseq
    %v684 = vshrl.u32 %v683, 7
    %v685 = vsub.s32 0, %v684
    %v686 = vrot.slane %v622, %v685
    %v687 = vlaneseq
    %v688 = vshrl.u32 %v687, 7
    %v689 = vsub.s32 0, %v688
    %v690 = vrot.slane %v624, %v689
    %v691 = vlaneseq
    %v692 = vshrl.u32 %v691, 7
    %v693 = vsub.s32 0, %v692
    %v694 = vrot.slane %v607, %v693
    %v695 = vlaneseq
    %v696 = vshrl.u32 %v695, 7
    %v697 = vsub.s32 0, %v696
    %v698 = vrot.slane %v621, %v697
    %v699 = vlaneseq
    %v700 = vshrl.u32 %v699, 7
    %v701 = vsub.s32 0, %v700
    %v702 = vrot.slane %v623, %v701
    %v703 = vlaneseq
    %v704 = vshrl.u32 %v703, 7
    %v705 = vsub.s32 0, %v704
    %v706 = vrot.slane %v625, %v705
    %v707 = vlaneseq
    %v708 = vshrl.u32 %v707, 7
    %v709 = vsub.s32 0, %v708
    %v710 = vrot.slane %v649, %v709
    %v711 = vlaneseq
    %v712 = vshrl.u32 %v711, 7
    %v713 = vsub.s32 0, %v712
    %v714 = vrot.slane %v663, %v713
    %v715 = vlaneseq
    %v716 = vshrl.u32 %v715, 7
    %v717 = vsub.s32 0, %v716
    %v718 = vrot.slane %v671, %v717
    %v719 = vlaneseq
    %v720 = vshrl.u32 %v719, 7
    %v721 = vsub.s32 0, %v720
    %v722 = vrot.slane %v673, %v721
    %v723 = vlaneseq
    %v724 = vshrl.u32 %v723, 7
    %v725 = vsub.s32 0, %v724
    %v726 = vrot.slane %v656, %v725
    %v727 = vlaneseq
    %v728 = vshrl.u32 %v727, 7
    %v729 = vsub.s32 0, %v728
    %v730 = vrot.slane %v670, %v729
    %v731 = vlaneseq
    %v732 = vshrl.u32 %v731, 7
    %v733 = vsub.s32 0, %v732
    %v734 = vrot.slane %v672, %v733
    %v735 = vlaneseq
    %v736 = vshrl.u32 %v735, 7
    %v737 = vsub.s32 0, %v736
    %v738 = vrot.slane %v674, %v737
    %v755 = vadd.f32 %v336, %v678
    %v756 = vadd.f32 %v339, %v678
    %v757 = vadd.f32 %v344, %v682
    %v758 = vadd.f32 %v347, %v682
    %v759 = vadd.f32 %v352, %v686
    %v760 = vadd.f32 %v355, %v686
    %v761 = vadd.f32 %v360, %v690
    %v762 = vadd.f32 %v363, %v690
    %v763 = vadd.f32 %v368, %v694
    %v764 = vadd.f32 %v371, %v694
    %v765 = vadd.f32 %v376, %v698
    %v766 = vadd.f32 %v379, %v698
    %v767 = vadd.f32 %v384, %v702
    %v768 = vadd.f32 %v387, %v702
    %v769 = vadd.f32 %v392, %v706
    %v770 = vadd.f32 %v395, %v706
    %v771 = vadd.f32 %v400, %v710
    %v772 = vadd.f32 %v403, %v710
    %v773 = vadd.f32 %v408, %v714
    %v774 = vadd.f32 %v411, %v714
    %v775 = vadd.f32 %v416, %v718
    %v776 = vadd.f32 %v419, %v718
    %v777 = vadd.f32 %v424, %v722
    %v778 = vadd.f32 %v427, %v722
    %v779 = vadd.f32 %v432, %v726
    %v780 = vadd.f32 %v435, %v726
    %v781 = vadd.f32 %v440, %v730
    %v782 = vadd.f32 %v443, %v730
    %v783 = vadd.f32 %v448, %v734
    %v784 = vadd.f32 %v451, %v734
    %v785 = vadd.f32 %v456, %v738
    %v786 = vadd.f32 %v459, %v738
    %v787 = vtanh.pop %v755
    %v788 = vtanh.pop %v756
    %v789 = vtanh.pop %v757
    %v790 = vtanh.pop %v758
    %v791 = vtanh.pop %v759
    %v792 = vtanh.pop %v760
    %v793 = vtanh.pop %v761
    %v794 = vtanh.pop %v762
    %v795 = vtanh.pop %v763
    %v796 = vtanh.pop %v764
    %v797 = vtanh.pop %v765
    %v798 = vtanh.pop %v766
    %v799 = vtanh.pop %v767
    %v800 = vtanh.pop %v768
    %v801 = vtanh.pop %v769
    %v802 = vtanh.pop %v770
    %v803 = vtanh.pop %v771
    %v804 = vtanh.pop %v772
    %v805 = vtanh.pop %v773
    %v806 = vtanh.pop %v774
    %v807 = vtanh.pop %v775
    %v808 = vtanh.pop %v776
    %v809 = vtanh.pop %v777
    %v810 = vtanh.pop %v778
    %v811 = vtanh.pop %v779
    %v812 = vtanh.pop %v780
    %v813 = vtanh.pop %v781
    %v814 = vtanh.pop %v782
    %v815 = vtanh.pop %v783
    %v816 = vtanh.pop %v784
    %v817 = vtanh.pop %v785
    %v818 = vtanh.pop %v786
    %v819 = vld [vmem:[%s8] sm:$0x1]
    %v821 = vlaneseq
    %v822 = vshrl.u32 %v821, 7
    %v823 = vsub.s32 0, %v822
    %v824 = vrot.slane %v819, %v823
    %v826 = vmul.f32 %v787, %v824
    %v827 = vmul.f32 %v788, %v824
    %v828 = vmul.f32 %v789, %v824
    %v829 = vmul.f32 %v790, %v824
    %v830 = vmul.f32 %v791, %v824
    %v831 = vmul.f32 %v792, %v824
    %v832 = vmul.f32 %v793, %v824
    %v833 = vmul.f32 %v794, %v824
    %v834 = vmul.f32 %v795, %v824
    %v835 = vmul.f32 %v796, %v824
    %v836 = vmul.f32 %v797, %v824
    %v837 = vmul.f32 %v798, %v824
    %v838 = vmul.f32 %v799, %v824
    %v839 = vmul.f32 %v800, %v824
    %v840 = vmul.f32 %v801, %v824
    %v841 = vmul.f32 %v802, %v824
    %v842 = vmul.f32 %v803, %v824
    %v843 = vmul.f32 %v804, %v824
    %v844 = vmul.f32 %v805, %v824
    %v845 = vmul.f32 %v806, %v824
    %v846 = vmul.f32 %v807, %v824
    %v847 = vmul.f32 %v808, %v824
    %v848 = vmul.f32 %v809, %v824
    %v849 = vmul.f32 %v810, %v824
    %v850 = vmul.f32 %v811, %v824
    %v851 = vmul.f32 %v812, %v824
    %v852 = vmul.f32 %v813, %v824
    %v853 = vmul.f32 %v814, %v824
    %v854 = vmul.f32 %v815, %v824
    %v855 = vmul.f32 %v816, %v824
    %v856 = vmul.f32 %v817, %v824
    %v857 = vmul.f32 %v818, %v824
    %858 = vadd.xlane.f32.xlu0 %v826
    %v859 = vpop.xlane.xlu0 %858
    %860 = vadd.xlane.f32.xlu0 %v827
    %v861 = vpop.xlane.xlu0 %860
    %862 = vadd.xlane.f32.xlu0 %v828
    %v863 = vpop.xlane.xlu0 %862
    %864 = vadd.xlane.f32.xlu0 %v829
    %v865 = vpop.xlane.xlu0 %864
    %866 = vadd.xlane.f32.xlu0 %v830
    %v867 = vpop.xlane.xlu0 %866
    %868 = vadd.xlane.f32.xlu0 %v831
    %v869 = vpop.xlane.xlu0 %868
    %870 = vadd.xlane.f32.xlu0 %v832
    %v871 = vpop.xlane.xlu0 %870
    %872 = vadd.xlane.f32.xlu0 %v833
    %v873 = vpop.xlane.xlu0 %872
    %874 = vadd.xlane.f32.xlu0 %v834
    %v875 = vpop.xlane.xlu0 %874
    %876 = vadd.xlane.f32.xlu0 %v835
    %v877 = vpop.xlane.xlu0 %876
    %878 = vadd.xlane.f32.xlu0 %v836
    %v879 = vpop.xlane.xlu0 %878
    %880 = vadd.xlane.f32.xlu0 %v837
    %v881 = vpop.xlane.xlu0 %880
    %882 = vadd.xlane.f32.xlu0 %v838
    %v883 = vpop.xlane.xlu0 %882
    %884 = vadd.xlane.f32.xlu0 %v839
    %v885 = vpop.xlane.xlu0 %884
    %886 = vadd.xlane.f32.xlu0 %v840
    %v887 = vpop.xlane.xlu0 %886
    %888 = vadd.xlane.f32.xlu0 %v841
    %v889 = vpop.xlane.xlu0 %888
    %890 = vadd.xlane.f32.xlu0 %v842
    %v891 = vpop.xlane.xlu0 %890
    %892 = vadd.xlane.f32.xlu0 %v843
    %v893 = vpop.xlane.xlu0 %892
    %894 = vadd.xlane.f32.xlu0 %v844
    %v895 = vpop.xlane.xlu0 %894
    %896 = vadd.xlane.f32.xlu0 %v845
    %v897 = vpop.xlane.xlu0 %896
    %898 = vadd.xlane.f32.xlu0 %v846
    %v899 = vpop.xlane.xlu0 %898
    %900 = vadd.xlane.f32.xlu0 %v847
    %v901 = vpop.xlane.xlu0 %900
    %902 = vadd.xlane.f32.xlu0 %v848
    %v903 = vpop.xlane.xlu0 %902
    %904 = vadd.xlane.f32.xlu0 %v849
    %v905 = vpop.xlane.xlu0 %904
    %906 = vadd.xlane.f32.xlu0 %v850
    %v907 = vpop.xlane.xlu0 %906
    %908 = vadd.xlane.f32.xlu0 %v851
    %v909 = vpop.xlane.xlu0 %908
    %910 = vadd.xlane.f32.xlu0 %v852
    %v911 = vpop.xlane.xlu0 %910
    %912 = vadd.xlane.f32.xlu0 %v853
    %v913 = vpop.xlane.xlu0 %912
    %914 = vadd.xlane.f32.xlu0 %v854
    %v915 = vpop.xlane.xlu0 %914
    %916 = vadd.xlane.f32.xlu0 %v855
    %v917 = vpop.xlane.xlu0 %916
    %918 = vadd.xlane.f32.xlu0 %v856
    %v919 = vpop.xlane.xlu0 %918
    %920 = vadd.xlane.f32.xlu0 %v857
    %v921 = vpop.xlane.xlu0 %920
    %v922 = vld [vmem:[#allocation3] sm:$0x1]
    %v924 = vlaneseq
    %v925 = vshrl.u32 %v924, 7
    %v926 = vsub.s32 0, %v925
    %v927 = vrot.slane %v922, %v926
    %928 = vset.pattern.permute.xlu0 0
    %929 = vperm.xlu0 %928, %v927
    %v930 = vpop.permute.xlu0 %929
    %v932 = vadd.f32 %v859, %v930
    %v933 = vadd.f32 %v861, %v930
    %v934 = vadd.f32 %v863, %v930
    %v935 = vadd.f32 %v865, %v930
    %v936 = vadd.f32 %v867, %v930
    %v937 = vadd.f32 %v869, %v930
    %v938 = vadd.f32 %v871, %v930
    %v939 = vadd.f32 %v873, %v930
    %v940 = vadd.f32 %v875, %v930
    %v941 = vadd.f32 %v877, %v930
    %v942 = vadd.f32 %v879, %v930
    %v943 = vadd.f32 %v881, %v930
    %v944 = vadd.f32 %v883, %v930
    %v945 = vadd.f32 %v885, %v930
    %v946 = vadd.f32 %v887, %v930
    %v947 = vadd.f32 %v889, %v930
    %v948 = vadd.f32 %v891, %v930
    %v949 = vadd.f32 %v893, %v930
    %v950 = vadd.f32 %v895, %v930
    %v951 = vadd.f32 %v897, %v930
    %v952 = vadd.f32 %v899, %v930
    %v953 = vadd.f32 %v901, %v930
    %v954 = vadd.f32 %v903, %v930
    %v955 = vadd.f32 %v905, %v930
    %v956 = vadd.f32 %v907, %v930
    %v957 = vadd.f32 %v909, %v930
    %v958 = vadd.f32 %v911, %v930
    %v959 = vadd.f32 %v913, %v930
    %v960 = vadd.f32 %v915, %v930
    %v961 = vadd.f32 %v917, %v930
    %v962 = vadd.f32 %v919, %v930
    %v963 = vadd.f32 %v921, %v930
    %v964 = vld [vmem:[#allocation10] sm:$0xff]
    %v965 = vld [vmem:[#allocation10 + $0x8] sm:$0xff]
    %v968 = vlaneseq
    %v969 = vshrl.u32 %v968, 7
    %v970 = vsub.s32 0, %v969
    %v971 = vrot.slane %v964, %v970
    %973 = vbcast.lane.b32.xlu0 %v971, 256
    %v974 = vpop.permute.xlu0 %973
    %s976 = sor.u32 256, 8
    %977 = vbcast.lane.b32.xlu0 %v971, %s976
    %v978 = vpop.permute.xlu0 %977
    %v979 = vlaneseq
    %v980 = vshrl.u32 %v979, 7
    %v981 = vsub.s32 1, %v980
    %v982 = vrot.slane %v964, %v981
    %984 = vbcast.lane.b32.xlu0 %v982, 256
    %v985 = vpop.permute.xlu0 %984
    %s987 = sor.u32 256, 8
    %988 = vbcast.lane.b32.xlu0 %v982, %s987
    %v989 = vpop.permute.xlu0 %988
    %v990 = vlaneseq
    %v991 = vshrl.u32 %v990, 7
    %v992 = vsub.s32 2, %v991
    %v993 = vrot.slane %v964, %v992
    %995 = vbcast.lane.b32.xlu0 %v993, 256
    %v996 = vpop.permute.xlu0 %995
    %s998 = sor.u32 256, 8
    %999 = vbcast.lane.b32.xlu0 %v993, %s998
    %v1000 = vpop.permute.xlu0 %999
    %v1001 = vlaneseq
    %v1002 = vshrl.u32 %v1001, 7
    %v1003 = vsub.s32 3, %v1002
    %v1004 = vrot.slane %v964, %v1003
    %1006 = vbcast.lane.b32.xlu0 %v1004, 256
    %v1007 = vpop.permute.xlu0 %1006
    %s1009 = sor.u32 256, 8
    %1010 = vbcast.lane.b32.xlu0 %v1004, %s1009
    %v1011 = vpop.permute.xlu0 %1010
    %v1012 = vlaneseq
    %v1013 = vshrl.u32 %v1012, 7
    %v1014 = vsub.s32 4, %v1013
    %v1015 = vrot.slane %v964, %v1014
    %1017 = vbcast.lane.b32.xlu0 %v1015, 256
    %v1018 = vpop.permute.xlu0 %1017
    %s1020 = sor.u32 256, 8
    %1021 = vbcast.lane.b32.xlu0 %v1015, %s1020
    %v1022 = vpop.permute.xlu0 %1021
    %v1023 = vlaneseq
    %v1024 = vshrl.u32 %v1023, 7
    %v1025 = vsub.s32 5, %v1024
    %v1026 = vrot.slane %v964, %v1025
    %1028 = vbcast.lane.b32.xlu0 %v1026, 256
    %v1029 = vpop.permute.xlu0 %1028
    %s1031 = sor.u32 256, 8
    %1032 = vbcast.lane.b32.xlu0 %v1026, %s1031
    %v1033 = vpop.permute.xlu0 %1032
    %v1034 = vlaneseq
    %v1035 = vshrl.u32 %v1034, 7
    %v1036 = vsub.s32 6, %v1035
    %v1037 = vrot.slane %v964, %v1036
    %1039 = vbcast.lane.b32.xlu0 %v1037, 256
    %v1040 = vpop.permute.xlu0 %1039
    %s1042 = sor.u32 256, 8
    %1043 = vbcast.lane.b32.xlu0 %v1037, %s1042
    %v1044 = vpop.permute.xlu0 %1043
    %v1045 = vlaneseq
    %v1046 = vshrl.u32 %v1045, 7
    %v1047 = vsub.s32 7, %v1046
    %v1048 = vrot.slane %v964, %v1047
    %1050 = vbcast.lane.b32.xlu0 %v1048, 256
    %v1051 = vpop.permute.xlu0 %1050
    %s1053 = sor.u32 256, 8
    %1054 = vbcast.lane.b32.xlu0 %v1048, %s1053
    %v1055 = vpop.permute.xlu0 %1054
    %v1056 = vlaneseq
    %v1057 = vshrl.u32 %v1056, 7
    %v1058 = vsub.s32 0, %v1057
    %v1059 = vrot.slane %v965, %v1058
    %1061 = vbcast.lane.b32.xlu0 %v1059, 256
    %v1062 = vpop.permute.xlu0 %1061
    %s1064 = sor.u32 256, 8
    %1065 = vbcast.lane.b32.xlu0 %v1059, %s1064
    %v1066 = vpop.permute.xlu0 %1065
    %v1067 = vlaneseq
    %v1068 = vshrl.u32 %v1067, 7
    %v1069 = vsub.s32 1, %v1068
    %v1070 = vrot.slane %v965, %v1069
    %1072 = vbcast.lane.b32.xlu0 %v1070, 256
    %v1073 = vpop.permute.xlu0 %1072
    %s1075 = sor.u32 256, 8
    %1076 = vbcast.lane.b32.xlu0 %v1070, %s1075
    %v1077 = vpop.permute.xlu0 %1076
    %v1078 = vlaneseq
    %v1079 = vshrl.u32 %v1078, 7
    %v1080 = vsub.s32 2, %v1079
    %v1081 = vrot.slane %v965, %v1080
    %1083 = vbcast.lane.b32.xlu0 %v1081, 256
    %v1084 = vpop.permute.xlu0 %1083
    %s1086 = sor.u32 256, 8
    %1087 = vbcast.lane.b32.xlu0 %v1081, %s1086
    %v1088 = vpop.permute.xlu0 %1087
    %v1089 = vlaneseq
    %v1090 = vshrl.u32 %v1089, 7
    %v1091 = vsub.s32 3, %v1090
    %v1092 = vrot.slane %v965, %v1091
    %1094 = vbcast.lane.b32.xlu0 %v1092, 256
    %v1095 = vpop.permute.xlu0 %1094
    %s1097 = sor.u32 256, 8
    %1098 = vbcast.lane.b32.xlu0 %v1092, %s1097
    %v1099 = vpop.permute.xlu0 %1098
    %v1100 = vlaneseq
    %v1101 = vshrl.u32 %v1100, 7
    %v1102 = vsub.s32 4, %v1101
    %v1103 = vrot.slane %v965, %v1102
    %1105 = vbcast.lane.b32.xlu0 %v1103, 256
    %v1106 = vpop.permute.xlu0 %1105
    %s1108 = sor.u32 256, 8
    %1109 = vbcast.lane.b32.xlu0 %v1103, %s1108
    %v1110 = vpop.permute.xlu0 %1109
    %v1111 = vlaneseq
    %v1112 = vshrl.u32 %v1111, 7
    %v1113 = vsub.s32 5, %v1112
    %v1114 = vrot.slane %v965, %v1113
    %1116 = vbcast.lane.b32.xlu0 %v1114, 256
    %v1117 = vpop.permute.xlu0 %1116
    %s1119 = sor.u32 256, 8
    %1120 = vbcast.lane.b32.xlu0 %v1114, %s1119
    %v1121 = vpop.permute.xlu0 %1120
    %v1122 = vlaneseq
    %v1123 = vshrl.u32 %v1122, 7
    %v1124 = vsub.s32 6, %v1123
    %v1125 = vrot.slane %v965, %v1124
    %1127 = vbcast.lane.b32.xlu0 %v1125, 256
    %v1128 = vpop.permute.xlu0 %1127
    %s1130 = sor.u32 256, 8
    %1131 = vbcast.lane.b32.xlu0 %v1125, %s1130
    %v1132 = vpop.permute.xlu0 %1131
    %v1133 = vlaneseq
    %v1134 = vshrl.u32 %v1133, 7
    %v1135 = vsub.s32 7, %v1134
    %v1136 = vrot.slane %v965, %v1135
    %1138 = vbcast.lane.b32.xlu0 %v1136, 256
    %v1139 = vpop.permute.xlu0 %1138
    %s1141 = sor.u32 256, 8
    %1142 = vbcast.lane.b32.xlu0 %v1136, %s1141
    %v1143 = vpop.permute.xlu0 %1142
    %v1176 = vadd.f32 %v932, %v974
    %v1177 = vadd.f32 %v933, %v978
    %v1178 = vadd.f32 %v934, %v985
    %v1179 = vadd.f32 %v935, %v989
    %v1180 = vadd.f32 %v936, %v996
    %v1181 = vadd.f32 %v937, %v1000
    %v1182 = vadd.f32 %v938, %v1007
    %v1183 = vadd.f32 %v939, %v1011
    %v1184 = vadd.f32 %v940, %v1018
    %v1185 = vadd.f32 %v941, %v1022
    %v1186 = vadd.f32 %v942, %v1029
    %v1187 = vadd.f32 %v943, %v1033
    %v1188 = vadd.f32 %v944, %v1040
    %v1189 = vadd.f32 %v945, %v1044
    %v1190 = vadd.f32 %v946, %v1051
    %v1191 = vadd.f32 %v947, %v1055
    %v1192 = vadd.f32 %v948, %v1062
    %v1193 = vadd.f32 %v949, %v1066
    %v1194 = vadd.f32 %v950, %v1073
    %v1195 = vadd.f32 %v951, %v1077
    %v1196 = vadd.f32 %v952, %v1084
    %v1197 = vadd.f32 %v953, %v1088
    %v1198 = vadd.f32 %v954, %v1095
    %v1199 = vadd.f32 %v955, %v1099
    %v1200 = vadd.f32 %v956, %v1106
    %v1201 = vadd.f32 %v957, %v1110
    %v1202 = vadd.f32 %v958, %v1117
    %v1203 = vadd.f32 %v959, %v1121
    %v1204 = vadd.f32 %v960, %v1128
    %v1205 = vadd.f32 %v961, %v1132
    %v1206 = vadd.f32 %v962, %v1139
    %v1207 = vadd.f32 %v963, %v1143
    %1240 = vset.pattern.permute.xlu0 0
    %1241 = vperm.xlu0 %1240, %v1176
    %v1242 = vpop.permute.xlu0 %1241
    %1243 = vset.pattern.permute.xlu0 0
    %1244 = vperm.xlu0 %1243, %v1177
    %v1245 = vpop.permute.xlu0 %1244
    %1246 = vset.pattern.permute.xlu0 0
    %1247 = vperm.xlu0 %1246, %v1178
    %v1248 = vpop.permute.xlu0 %1247
    %1249 = vset.pattern.permute.xlu0 0
    %1250 = vperm.xlu0 %1249, %v1179
    %v1251 = vpop.permute.xlu0 %1250
    %1252 = vset.pattern.permute.xlu0 0
    %1253 = vperm.xlu0 %1252, %v1180
    %v1254 = vpop.permute.xlu0 %1253
    %1255 = vset.pattern.permute.xlu0 0
    %1256 = vperm.xlu0 %1255, %v1181
    %v1257 = vpop.permute.xlu0 %1256
    %1258 = vset.pattern.permute.xlu0 0
    %1259 = vperm.xlu0 %1258, %v1182
    %v1260 = vpop.permute.xlu0 %1259
    %1261 = vset.pattern.permute.xlu0 0
    %1262 = vperm.xlu0 %1261, %v1183
    %v1263 = vpop.permute.xlu0 %1262
    %1264 = vset.pattern.permute.xlu0 0
    %1265 = vperm.xlu0 %1264, %v1184
    %v1266 = vpop.permute.xlu0 %1265
    %1267 = vset.pattern.permute.xlu0 0
    %1268 = vperm.xlu0 %1267, %v1185
    %v1269 = vpop.permute.xlu0 %1268
    %1270 = vset.pattern.permute.xlu0 0
    %1271 = vperm.xlu0 %1270, %v1186
    %v1272 = vpop.permute.xlu0 %1271
    %1273 = vset.pattern.permute.xlu0 0
    %1274 = vperm.xlu0 %1273, %v1187
    %v1275 = vpop.permute.xlu0 %1274
    %1276 = vset.pattern.permute.xlu0 0
    %1277 = vperm.xlu0 %1276, %v1188
    %v1278 = vpop.permute.xlu0 %1277
    %1279 = vset.pattern.permute.xlu0 0
    %1280 = vperm.xlu0 %1279, %v1189
    %v1281 = vpop.permute.xlu0 %1280
    %1282 = vset.pattern.permute.xlu0 0
    %1283 = vperm.xlu0 %1282, %v1190
    %v1284 = vpop.permute.xlu0 %1283
    %1285 = vset.pattern.permute.xlu0 0
    %1286 = vperm.xlu0 %1285, %v1191
    %v1287 = vpop.permute.xlu0 %1286
    %1288 = vset.pattern.permute.xlu0 0
    %1289 = vperm.xlu0 %1288, %v1192
    %v1290 = vpop.permute.xlu0 %1289
    %1291 = vset.pattern.permute.xlu0 0
    %1292 = vperm.xlu0 %1291, %v1193
    %v1293 = vpop.permute.xlu0 %1292
    %1294 = vset.pattern.permute.xlu0 0
    %1295 = vperm.xlu0 %1294, %v1194
    %v1296 = vpop.permute.xlu0 %1295
    %1297 = vset.pattern.permute.xlu0 0
    %1298 = vperm.xlu0 %1297, %v1195
    %v1299 = vpop.permute.xlu0 %1298
    %1300 = vset.pattern.permute.xlu0 0
    %1301 = vperm.xlu0 %1300, %v1196
    %v1302 = vpop.permute.xlu0 %1301
    %1303 = vset.pattern.permute.xlu0 0
    %1304 = vperm.xlu0 %1303, %v1197
    %v1305 = vpop.permute.xlu0 %1304
    %1306 = vset.pattern.permute.xlu0 0
    %1307 = vperm.xlu0 %1306, %v1198
    %v1308 = vpop.permute.xlu0 %1307
    %1309 = vset.pattern.permute.xlu0 0
    %1310 = vperm.xlu0 %1309, %v1199
    %v1311 = vpop.permute.xlu0 %1310
    %1312 = vset.pattern.permute.xlu0 0
    %1313 = vperm.xlu0 %1312, %v1200
    %v1314 = vpop.permute.xlu0 %1313
    %1315 = vset.pattern.permute.xlu0 0
    %1316 = vperm.xlu0 %1315, %v1201
    %v1317 = vpop.permute.xlu0 %1316
    %1318 = vset.pattern.permute.xlu0 0
    %1319 = vperm.xlu0 %1318, %v1202
    %v1320 = vpop.permute.xlu0 %1319
    %1321 = vset.pattern.permute.xlu0 0
    %1322 = vperm.xlu0 %1321, %v1203
    %v1323 = vpop.permute.xlu0 %1322
    %1324 = vset.pattern.permute.xlu0 0
    %1325 = vperm.xlu0 %1324, %v1204
    %v1326 = vpop.permute.xlu0 %1325
    %1327 = vset.pattern.permute.xlu0 0
    %1328 = vperm.xlu0 %1327, %v1205
    %v1329 = vpop.permute.xlu0 %1328
    %1330 = vset.pattern.permute.xlu0 0
    %1331 = vperm.xlu0 %1330, %v1206
    %v1332 = vpop.permute.xlu0 %1331
    %1333 = vset.pattern.permute.xlu0 0
    %1334 = vperm.xlu0 %1333, %v1207
    %v1335 = vpop.permute.xlu0 %1334
    %v1336 = vlaneseq
    %v1337 = vand.u32 %v1336, 127
    %v1338 = vlaneseq
    %v1339 = vshrl.u32 %v1338, 7
    %v1340 = vsub.s32 %v1337, %v1339
    %v1341 = vrot.slane %v1242, %v1340
    %v1342 = vadd.s32 %v1337, 4294967288
    %v1343 = vlaneseq
    %v1344 = vshrl.u32 %v1343, 7
    %v1345 = vsub.s32 %v1342, %v1344
    %v1346 = vrot.slane %v1245, %v1345
    %vm1347 = vcmask 130112
    %v1348 = vsel %vm1347, %v1346, %v1341
    %v1349 = vlaneseq
    %v1350 = vshrl.u32 %v1349, 7
    %v1351 = vsub.s32 %v1337, %v1350
    %v1352 = vrot.slane %v1248, %v1351
    %v1353 = vlaneseq
    %v1354 = vshrl.u32 %v1353, 7
    %v1355 = vsub.s32 %v1342, %v1354
    %v1356 = vrot.slane %v1251, %v1355
    %v1357 = vsel %vm1347, %v1356, %v1352
    %v1358 = vlaneseq
    %v1359 = vshrl.u32 %v1358, 7
    %v1360 = vsub.s32 %v1337, %v1359
    %v1361 = vrot.slane %v1254, %v1360
    %v1362 = vlaneseq
    %v1363 = vshrl.u32 %v1362, 7
    %v1364 = vsub.s32 %v1342, %v1363
    %v1365 = vrot.slane %v1257, %v1364
    %v1366 = vsel %vm1347, %v1365, %v1361
    %v1367 = vlaneseq
    %v1368 = vshrl.u32 %v1367, 7
    %v1369 = vsub.s32 %v1337, %v1368
    %v1370 = vrot.slane %v1260, %v1369
    %v1371 = vlaneseq
    %v1372 = vshrl.u32 %v1371, 7
    %v1373 = vsub.s32 %v1342, %v1372
    %v1374 = vrot.slane %v1263, %v1373
    %v1375 = vsel %vm1347, %v1374, %v1370
    %v1376 = vlaneseq
    %v1377 = vshrl.u32 %v1376, 7
    %v1378 = vsub.s32 %v1337, %v1377
    %v1379 = vrot.slane %v1266, %v1378
    %v1380 = vlaneseq
    %v1381 = vshrl.u32 %v1380, 7
    %v1382 = vsub.s32 %v1342, %v1381
    %v1383 = vrot.slane %v1269, %v1382
    %v1384 = vsel %vm1347, %v1383, %v1379
    %v1385 = vlaneseq
    %v1386 = vshrl.u32 %v1385, 7
    %v1387 = vsub.s32 %v1337, %v1386
    %v1388 = vrot.slane %v1272, %v1387
    %v1389 = vlaneseq
    %v1390 = vshrl.u32 %v1389, 7
    %v1391 = vsub.s32 %v1342, %v1390
    %v1392 = vrot.slane %v1275, %v1391
    %v1393 = vsel %vm1347, %v1392, %v1388
    %v1394 = vlaneseq
    %v1395 = vshrl.u32 %v1394, 7
    %v1396 = vsub.s32 %v1337, %v1395
    %v1397 = vrot.slane %v1278, %v1396
    %v1398 = vlaneseq
    %v1399 = vshrl.u32 %v1398, 7
    %v1400 = vsub.s32 %v1342, %v1399
    %v1401 = vrot.slane %v1281, %v1400
    %v1402 = vsel %vm1347, %v1401, %v1397
    %v1403 = vlaneseq
    %v1404 = vshrl.u32 %v1403, 7
    %v1405 = vsub.s32 %v1337, %v1404
    %v1406 = vrot.slane %v1284, %v1405
    %v1407 = vlaneseq
    %v1408 = vshrl.u32 %v1407, 7
    %v1409 = vsub.s32 %v1342, %v1408
    %v1410 = vrot.slane %v1287, %v1409
    %v1411 = vsel %vm1347, %v1410, %v1406
    %v1412 = vlaneseq
    %v1413 = vshrl.u32 %v1412, 7
    %v1414 = vsub.s32 %v1337, %v1413
    %v1415 = vrot.slane %v1290, %v1414
    %v1416 = vlaneseq
    %v1417 = vshrl.u32 %v1416, 7
    %v1418 = vsub.s32 %v1342, %v1417
    %v1419 = vrot.slane %v1293, %v1418
    %v1420 = vsel %vm1347, %v1419, %v1415
    %v1421 = vlaneseq
    %v1422 = vshrl.u32 %v1421, 7
    %v1423 = vsub.s32 %v1337, %v1422
    %v1424 = vrot.slane %v1296, %v1423
    %v1425 = vlaneseq
    %v1426 = vshrl.u32 %v1425, 7
    %v1427 = vsub.s32 %v1342, %v1426
    %v1428 = vrot.slane %v1299, %v1427
    %v1429 = vsel %vm1347, %v1428, %v1424
    %v1430 = vlaneseq
    %v1431 = vshrl.u32 %v1430, 7
    %v1432 = vsub.s32 %v1337, %v1431
    %v1433 = vrot.slane %v1302, %v1432
    %v1434 = vlaneseq
    %v1435 = vshrl.u32 %v1434, 7
    %v1436 = vsub.s32 %v1342, %v1435
    %v1437 = vrot.slane %v1305, %v1436
    %v1438 = vsel %vm1347, %v1437, %v1433
    %v1439 = vlaneseq
    %v1440 = vshrl.u32 %v1439, 7
    %v1441 = vsub.s32 %v1337, %v1440
    %v1442 = vrot.slane %v1308, %v1441
    %v1443 = vlaneseq
    %v1444 = vshrl.u32 %v1443, 7
    %v1445 = vsub.s32 %v1342, %v1444
    %v1446 = vrot.slane %v1311, %v1445
    %v1447 = vsel %vm1347, %v1446, %v1442
    %v1448 = vlaneseq
    %v1449 = vshrl.u32 %v1448, 7
    %v1450 = vsub.s32 %v1337, %v1449
    %v1451 = vrot.slane %v1314, %v1450
    %v1452 = vlaneseq
    %v1453 = vshrl.u32 %v1452, 7
    %v1454 = vsub.s32 %v1342, %v1453
    %v1455 = vrot.slane %v1317, %v1454
    %v1456 = vsel %vm1347, %v1455, %v1451
    %v1457 = vlaneseq
    %v1458 = vshrl.u32 %v1457, 7
    %v1459 = vsub.s32 %v1337, %v1458
    %v1460 = vrot.slane %v1320, %v1459
    %v1461 = vlaneseq
    %v1462 = vshrl.u32 %v1461, 7
    %v1463 = vsub.s32 %v1342, %v1462
    %v1464 = vrot.slane %v1323, %v1463
    %v1465 = vsel %vm1347, %v1464, %v1460
    %v1466 = vlaneseq
    %v1467 = vshrl.u32 %v1466, 7
    %v1468 = vsub.s32 %v1337, %v1467
    %v1469 = vrot.slane %v1326, %v1468
    %v1470 = vlaneseq
    %v1471 = vshrl.u32 %v1470, 7
    %v1472 = vsub.s32 %v1342, %v1471
    %v1473 = vrot.slane %v1329, %v1472
    %v1474 = vsel %vm1347, %v1473, %v1469
    %v1475 = vlaneseq
    %v1476 = vshrl.u32 %v1475, 7
    %v1477 = vsub.s32 %v1337, %v1476
    %v1478 = vrot.slane %v1332, %v1477
    %v1479 = vlaneseq
    %v1480 = vshrl.u32 %v1479, 7
    %v1481 = vsub.s32 %v1342, %v1480
    %v1482 = vrot.slane %v1335, %v1481
    %v1483 = vsel %vm1347, %v1482, %v1478
    %vm1484 = vcmask 1041409
    %v1485 = vsel %vm1484, %v1357, %v1348
    %vm1486 = vcmask 1042434
    %v1487 = vsel %vm1486, %v1366, %v1485
    %vm1488 = vcmask 1043459
    %v1489 = vsel %vm1488, %v1375, %v1487
    %vm1490 = vcmask 1044484
    %v1491 = vsel %vm1490, %v1384, %v1489
    %vm1492 = vcmask 1045509
    %v1493 = vsel %vm1492, %v1393, %v1491
    %vm1494 = vcmask 1046534
    %v1495 = vsel %vm1494, %v1402, %v1493
    %vm1496 = vcmask 1047559
    %v1497 = vsel %vm1496, %v1411, %v1495
    %v1498 = vsel %vm1484, %v1429, %v1420
    %v1499 = vsel %vm1486, %v1438, %v1498
    %v1500 = vsel %vm1488, %v1447, %v1499
    %v1501 = vsel %vm1490, %v1456, %v1500
    %v1502 = vsel %vm1492, %v1465, %v1501
    %v1503 = vsel %vm1494, %v1474, %v1502
    %v1504 = vsel %vm1496, %v1483, %v1503
    %vm1507 = vcmask 130048
    %v1508 = vsel %vm1507, %v1497, -inf
    %1509 = vmax.xlane.f32.xlu0 %v1508
    %v1510 = vpop.xlane.xlu0 %1509
    %v1511 = vsel %vm1507, %v1504, -inf
    %1512 = vmax.xlane.f32.xlu0 %v1511
    %v1513 = vpop.xlane.xlu0 %1512
    %v1516 = vlaneseq
    %v1517 = vshrl.u32 %v1516, 7
    %v1518 = vsub.s32 0, %v1517
    %v1519 = vrot.slane %v1510, %v1518
    %v1520 = vlaneseq
    %v1521 = vshrl.u32 %v1520, 7
    %v1522 = vsub.s32 1, %v1521
    %v1523 = vrot.slane %v1510, %v1522
    %v1524 = vlaneseq
    %v1525 = vshrl.u32 %v1524, 7
    %v1526 = vsub.s32 2, %v1525
    %v1527 = vrot.slane %v1510, %v1526
    %v1528 = vlaneseq
    %v1529 = vshrl.u32 %v1528, 7
    %v1530 = vsub.s32 3, %v1529
    %v1531 = vrot.slane %v1510, %v1530
    %v1532 = vlaneseq
    %v1533 = vshrl.u32 %v1532, 7
    %v1534 = vsub.s32 4, %v1533
    %v1535 = vrot.slane %v1510, %v1534
    %v1536 = vlaneseq
    %v1537 = vshrl.u32 %v1536, 7
    %v1538 = vsub.s32 5, %v1537
    %v1539 = vrot.slane %v1510, %v1538
    %v1540 = vlaneseq
    %v1541 = vshrl.u32 %v1540, 7
    %v1542 = vsub.s32 6, %v1541
    %v1543 = vrot.slane %v1510, %v1542
    %v1544 = vlaneseq
    %v1545 = vshrl.u32 %v1544, 7
    %v1546 = vsub.s32 7, %v1545
    %v1547 = vrot.slane %v1510, %v1546
    %v1548 = vlaneseq
    %v1549 = vshrl.u32 %v1548, 7
    %v1550 = vsub.s32 0, %v1549
    %v1551 = vrot.slane %v1513, %v1550
    %v1552 = vlaneseq
    %v1553 = vshrl.u32 %v1552, 7
    %v1554 = vsub.s32 1, %v1553
    %v1555 = vrot.slane %v1513, %v1554
    %v1556 = vlaneseq
    %v1557 = vshrl.u32 %v1556, 7
    %v1558 = vsub.s32 2, %v1557
    %v1559 = vrot.slane %v1513, %v1558
    %v1560 = vlaneseq
    %v1561 = vshrl.u32 %v1560, 7
    %v1562 = vsub.s32 3, %v1561
    %v1563 = vrot.slane %v1513, %v1562
    %v1564 = vlaneseq
    %v1565 = vshrl.u32 %v1564, 7
    %v1566 = vsub.s32 4, %v1565
    %v1567 = vrot.slane %v1513, %v1566
    %v1568 = vlaneseq
    %v1569 = vshrl.u32 %v1568, 7
    %v1570 = vsub.s32 5, %v1569
    %v1571 = vrot.slane %v1513, %v1570
    %v1572 = vlaneseq
    %v1573 = vshrl.u32 %v1572, 7
    %v1574 = vsub.s32 6, %v1573
    %v1575 = vrot.slane %v1513, %v1574
    %v1576 = vlaneseq
    %v1577 = vshrl.u32 %v1576, 7
    %v1578 = vsub.s32 7, %v1577
    %v1579 = vrot.slane %v1513, %v1578
    %v1596 = vsub.f32 %v1176, %v1519
    %v1597 = vsub.f32 %v1177, %v1519
    %v1598 = vsub.f32 %v1178, %v1523
    %v1599 = vsub.f32 %v1179, %v1523
    %v1600 = vsub.f32 %v1180, %v1527
    %v1601 = vsub.f32 %v1181, %v1527
    %v1602 = vsub.f32 %v1182, %v1531
    %v1603 = vsub.f32 %v1183, %v1531
    %v1604 = vsub.f32 %v1184, %v1535
    %v1605 = vsub.f32 %v1185, %v1535
    %v1606 = vsub.f32 %v1186, %v1539
    %v1607 = vsub.f32 %v1187, %v1539
    %v1608 = vsub.f32 %v1188, %v1543
    %v1609 = vsub.f32 %v1189, %v1543
    %v1610 = vsub.f32 %v1190, %v1547
    %v1611 = vsub.f32 %v1191, %v1547
    %v1612 = vsub.f32 %v1192, %v1551
    %v1613 = vsub.f32 %v1193, %v1551
    %v1614 = vsub.f32 %v1194, %v1555
    %v1615 = vsub.f32 %v1195, %v1555
    %v1616 = vsub.f32 %v1196, %v1559
    %v1617 = vsub.f32 %v1197, %v1559
    %v1618 = vsub.f32 %v1198, %v1563
    %v1619 = vsub.f32 %v1199, %v1563
    %v1620 = vsub.f32 %v1200, %v1567
    %v1621 = vsub.f32 %v1201, %v1567
    %v1622 = vsub.f32 %v1202, %v1571
    %v1623 = vsub.f32 %v1203, %v1571
    %v1624 = vsub.f32 %v1204, %v1575
    %v1625 = vsub.f32 %v1205, %v1575
    %v1626 = vsub.f32 %v1206, %v1579
    %v1627 = vsub.f32 %v1207, %v1579
    %v1628 = vmul.f32 %v1596, 1.442695
    %v1629 = vpow.pop %v1628
    %v1630 = vmul.f32 %v1597, 1.442695
    %v1631 = vpow.pop %v1630
    %v1632 = vmul.f32 %v1598, 1.442695
    %v1633 = vpow.pop %v1632
    %v1634 = vmul.f32 %v1599, 1.442695
    %v1635 = vpow.pop %v1634
    %v1636 = vmul.f32 %v1600, 1.442695
    %v1637 = vpow.pop %v1636
    %v1638 = vmul.f32 %v1601, 1.442695
    %v1639 = vpow.pop %v1638
    %v1640 = vmul.f32 %v1602, 1.442695
    %v1641 = vpow.pop %v1640
    %v1642 = vmul.f32 %v1603, 1.442695
    %v1643 = vpow.pop %v1642
    %v1644 = vmul.f32 %v1604, 1.442695
    %v1645 = vpow.pop %v1644
    %v1646 = vmul.f32 %v1605, 1.442695
    %v1647 = vpow.pop %v1646
    %v1648 = vmul.f32 %v1606, 1.442695
    %v1649 = vpow.pop %v1648
    %v1650 = vmul.f32 %v1607, 1.442695
    %v1651 = vpow.pop %v1650
    %v1652 = vmul.f32 %v1608, 1.442695
    %v1653 = vpow.pop %v1652
    %v1654 = vmul.f32 %v1609, 1.442695
    %v1655 = vpow.pop %v1654
    %v1656 = vmul.f32 %v1610, 1.442695
    %v1657 = vpow.pop %v1656
    %v1658 = vmul.f32 %v1611, 1.442695
    %v1659 = vpow.pop %v1658
    %v1660 = vmul.f32 %v1612, 1.442695
    %v1661 = vpow.pop %v1660
    %v1662 = vmul.f32 %v1613, 1.442695
    %v1663 = vpow.pop %v1662
    %v1664 = vmul.f32 %v1614, 1.442695
    %v1665 = vpow.pop %v1664
    %v1666 = vmul.f32 %v1615, 1.442695
    %v1667 = vpow.pop %v1666
    %v1668 = vmul.f32 %v1616, 1.442695
    %v1669 = vpow.pop %v1668
    %v1670 = vmul.f32 %v1617, 1.442695
    %v1671 = vpow.pop %v1670
    %v1672 = vmul.f32 %v1618, 1.442695
    %v1673 = vpow.pop %v1672
    %v1674 = vmul.f32 %v1619, 1.442695
    %v1675 = vpow.pop %v1674
    %v1676 = vmul.f32 %v1620, 1.442695
    %v1677 = vpow.pop %v1676
    %v1678 = vmul.f32 %v1621, 1.442695
    %v1679 = vpow.pop %v1678
    %v1680 = vmul.f32 %v1622, 1.442695
    %v1681 = vpow.pop %v1680
    %v1682 = vmul.f32 %v1623, 1.442695
    %v1683 = vpow.pop %v1682
    %v1684 = vmul.f32 %v1624, 1.442695
    %v1685 = vpow.pop %v1684
    %v1686 = vmul.f32 %v1625, 1.442695
    %v1687 = vpow.pop %v1686
    %v1688 = vmul.f32 %v1626, 1.442695
    %v1689 = vpow.pop %v1688
    %v1690 = vmul.f32 %v1627, 1.442695
    %v1691 = vpow.pop %v1690
    %1724 = vset.pattern.permute.xlu0 0
    %1725 = vperm.xlu0 %1724, %v1629
    %v1726 = vpop.permute.xlu0 %1725
    %1727 = vset.pattern.permute.xlu0 0
    %1728 = vperm.xlu0 %1727, %v1631
    %v1729 = vpop.permute.xlu0 %1728
    %1730 = vset.pattern.permute.xlu0 0
    %1731 = vperm.xlu0 %1730, %v1633
    %v1732 = vpop.permute.xlu0 %1731
    %1733 = vset.pattern.permute.xlu0 0
    %1734 = vperm.xlu0 %1733, %v1635
    %v1735 = vpop.permute.xlu0 %1734
    %1736 = vset.pattern.permute.xlu0 0
    %1737 = vperm.xlu0 %1736, %v1637
    %v1738 = vpop.permute.xlu0 %1737
    %1739 = vset.pattern.permute.xlu0 0
    %1740 = vperm.xlu0 %1739, %v1639
    %v1741 = vpop.permute.xlu0 %1740
    %1742 = vset.pattern.permute.xlu0 0
    %1743 = vperm.xlu0 %1742, %v1641
    %v1744 = vpop.permute.xlu0 %1743
    %1745 = vset.pattern.permute.xlu0 0
    %1746 = vperm.xlu0 %1745, %v1643
    %v1747 = vpop.permute.xlu0 %1746
    %1748 = vset.pattern.permute.xlu0 0
    %1749 = vperm.xlu0 %1748, %v1645
    %v1750 = vpop.permute.xlu0 %1749
    %1751 = vset.pattern.permute.xlu0 0
    %1752 = vperm.xlu0 %1751, %v1647
    %v1753 = vpop.permute.xlu0 %1752
    %1754 = vset.pattern.permute.xlu0 0
    %1755 = vperm.xlu0 %1754, %v1649
    %v1756 = vpop.permute.xlu0 %1755
    %1757 = vset.pattern.permute.xlu0 0
    %1758 = vperm.xlu0 %1757, %v1651
    %v1759 = vpop.permute.xlu0 %1758
    %1760 = vset.pattern.permute.xlu0 0
    %1761 = vperm.xlu0 %1760, %v1653
    %v1762 = vpop.permute.xlu0 %1761
    %1763 = vset.pattern.permute.xlu0 0
    %1764 = vperm.xlu0 %1763, %v1655
    %v1765 = vpop.permute.xlu0 %1764
    %1766 = vset.pattern.permute.xlu0 0
    %1767 = vperm.xlu0 %1766, %v1657
    %v1768 = vpop.permute.xlu0 %1767
    %1769 = vset.pattern.permute.xlu0 0
    %1770 = vperm.xlu0 %1769, %v1659
    %v1771 = vpop.permute.xlu0 %1770
    %1772 = vset.pattern.permute.xlu0 0
    %1773 = vperm.xlu0 %1772, %v1661
    %v1774 = vpop.permute.xlu0 %1773
    %1775 = vset.pattern.permute.xlu0 0
    %1776 = vperm.xlu0 %1775, %v1663
    %v1777 = vpop.permute.xlu0 %1776
    %1778 = vset.pattern.permute.xlu0 0
    %1779 = vperm.xlu0 %1778, %v1665
    %v1780 = vpop.permute.xlu0 %1779
    %1781 = vset.pattern.permute.xlu0 0
    %1782 = vperm.xlu0 %1781, %v1667
    %v1783 = vpop.permute.xlu0 %1782
    %1784 = vset.pattern.permute.xlu0 0
    %1785 = vperm.xlu0 %1784, %v1669
    %v1786 = vpop.permute.xlu0 %1785
    %1787 = vset.pattern.permute.xlu0 0
    %1788 = vperm.xlu0 %1787, %v1671
    %v1789 = vpop.permute.xlu0 %1788
    %1790 = vset.pattern.permute.xlu0 0
    %1791 = vperm.xlu0 %1790, %v1673
    %v1792 = vpop.permute.xlu0 %1791
    %1793 = vset.pattern.permute.xlu0 0
    %1794 = vperm.xlu0 %1793, %v1675
    %v1795 = vpop.permute.xlu0 %1794
    %1796 = vset.pattern.permute.xlu0 0
    %1797 = vperm.xlu0 %1796, %v1677
    %v1798 = vpop.permute.xlu0 %1797
    %1799 = vset.pattern.permute.xlu0 0
    %1800 = vperm.xlu0 %1799, %v1679
    %v1801 = vpop.permute.xlu0 %1800
    %1802 = vset.pattern.permute.xlu0 0
    %1803 = vperm.xlu0 %1802, %v1681
    %v1804 = vpop.permute.xlu0 %1803
    %1805 = vset.pattern.permute.xlu0 0
    %1806 = vperm.xlu0 %1805, %v1683
    %v1807 = vpop.permute.xlu0 %1806
    %1808 = vset.pattern.permute.xlu0 0
    %1809 = vperm.xlu0 %1808, %v1685
    %v1810 = vpop.permute.xlu0 %1809
    %1811 = vset.pattern.permute.xlu0 0
    %1812 = vperm.xlu0 %1811, %v1687
    %v1813 = vpop.permute.xlu0 %1812
    %1814 = vset.pattern.permute.xlu0 0
    %1815 = vperm.xlu0 %1814, %v1689
    %v1816 = vpop.permute.xlu0 %1815
    %1817 = vset.pattern.permute.xlu0 0
    %1818 = vperm.xlu0 %1817, %v1691
    %v1819 = vpop.permute.xlu0 %1818
    %v1820 = vlaneseq
    %v1821 = vshrl.u32 %v1820, 7
    %v1822 = vsub.s32 %v1337, %v1821
    %v1823 = vrot.slane %v1726, %v1822
    %v1824 = vlaneseq
    %v1825 = vshrl.u32 %v1824, 7
    %v1826 = vsub.s32 %v1342, %v1825
    %v1827 = vrot.slane %v1729, %v1826
    %v1828 = vsel %vm1347, %v1827, %v1823
    %v1829 = vlaneseq
    %v1830 = vshrl.u32 %v1829, 7
    %v1831 = vsub.s32 %v1337, %v1830
    %v1832 = vrot.slane %v1732, %v1831
    %v1833 = vlaneseq
    %v1834 = vshrl.u32 %v1833, 7
    %v1835 = vsub.s32 %v1342, %v1834
    %v1836 = vrot.slane %v1735, %v1835
    %v1837 = vsel %vm1347, %v1836, %v1832
    %v1838 = vlaneseq
    %v1839 = vshrl.u32 %v1838, 7
    %v1840 = vsub.s32 %v1337, %v1839
    %v1841 = vrot.slane %v1738, %v1840
    %v1842 = vlaneseq
    %v1843 = vshrl.u32 %v1842, 7
    %v1844 = vsub.s32 %v1342, %v1843
    %v1845 = vrot.slane %v1741, %v1844
    %v1846 = vsel %vm1347, %v1845, %v1841
    %v1847 = vlaneseq
    %v1848 = vshrl.u32 %v1847, 7
    %v1849 = vsub.s32 %v1337, %v1848
    %v1850 = vrot.slane %v1744, %v1849
    %v1851 = vlaneseq
    %v1852 = vshrl.u32 %v1851, 7
    %v1853 = vsub.s32 %v1342, %v1852
    %v1854 = vrot.slane %v1747, %v1853
    %v1855 = vsel %vm1347, %v1854, %v1850
    %v1856 = vlaneseq
    %v1857 = vshrl.u32 %v1856, 7
    %v1858 = vsub.s32 %v1337, %v1857
    %v1859 = vrot.slane %v1750, %v1858
    %v1860 = vlaneseq
    %v1861 = vshrl.u32 %v1860, 7
    %v1862 = vsub.s32 %v1342, %v1861
    %v1863 = vrot.slane %v1753, %v1862
    %v1864 = vsel %vm1347, %v1863, %v1859
    %v1865 = vlaneseq
    %v1866 = vshrl.u32 %v1865, 7
    %v1867 = vsub.s32 %v1337, %v1866
    %v1868 = vrot.slane %v1756, %v1867
    %v1869 = vlaneseq
    %v1870 = vshrl.u32 %v1869, 7
    %v1871 = vsub.s32 %v1342, %v1870
    %v1872 = vrot.slane %v1759, %v1871
    %v1873 = vsel %vm1347, %v1872, %v1868
    %v1874 = vlaneseq
    %v1875 = vshrl.u32 %v1874, 7
    %v1876 = vsub.s32 %v1337, %v1875
    %v1877 = vrot.slane %v1762, %v1876
    %v1878 = vlaneseq
    %v1879 = vshrl.u32 %v1878, 7
    %v1880 = vsub.s32 %v1342, %v1879
    %v1881 = vrot.slane %v1765, %v1880
    %v1882 = vsel %vm1347, %v1881, %v1877
    %v1883 = vlaneseq
    %v1884 = vshrl.u32 %v1883, 7
    %v1885 = vsub.s32 %v1337, %v1884
    %v1886 = vrot.slane %v1768, %v1885
    %v1887 = vlaneseq
    %v1888 = vshrl.u32 %v1887, 7
    %v1889 = vsub.s32 %v1342, %v1888
    %v1890 = vrot.slane %v1771, %v1889
    %v1891 = vsel %vm1347, %v1890, %v1886
    %v1892 = vlaneseq
    %v1893 = vshrl.u32 %v1892, 7
    %v1894 = vsub.s32 %v1337, %v1893
    %v1895 = vrot.slane %v1774, %v1894
    %v1896 = vlaneseq
    %v1897 = vshrl.u32 %v1896, 7
    %v1898 = vsub.s32 %v1342, %v1897
    %v1899 = vrot.slane %v1777, %v1898
    %v1900 = vsel %vm1347, %v1899, %v1895
    %v1901 = vlaneseq
    %v1902 = vshrl.u32 %v1901, 7
    %v1903 = vsub.s32 %v1337, %v1902
    %v1904 = vrot.slane %v1780, %v1903
    %v1905 = vlaneseq
    %v1906 = vshrl.u32 %v1905, 7
    %v1907 = vsub.s32 %v1342, %v1906
    %v1908 = vrot.slane %v1783, %v1907
    %v1909 = vsel %vm1347, %v1908, %v1904
    %v1910 = vlaneseq
    %v1911 = vshrl.u32 %v1910, 7
    %v1912 = vsub.s32 %v1337, %v1911
    %v1913 = vrot.slane %v1786, %v1912
    %v1914 = vlaneseq
    %v1915 = vshrl.u32 %v1914, 7
    %v1916 = vsub.s32 %v1342, %v1915
    %v1917 = vrot.slane %v1789, %v1916
    %v1918 = vsel %vm1347, %v1917, %v1913
    %v1919 = vlaneseq
    %v1920 = vshrl.u32 %v1919, 7
    %v1921 = vsub.s32 %v1337, %v1920
    %v1922 = vrot.slane %v1792, %v1921
    %v1923 = vlaneseq
    %v1924 = vshrl.u32 %v1923, 7
    %v1925 = vsub.s32 %v1342, %v1924
    %v1926 = vrot.slane %v1795, %v1925
    %v1927 = vsel %vm1347, %v1926, %v1922
    %v1928 = vlaneseq
    %v1929 = vshrl.u32 %v1928, 7
    %v1930 = vsub.s32 %v1337, %v1929
    %v1931 = vrot.slane %v1798, %v1930
    %v1932 = vlaneseq
    %v1933 = vshrl.u32 %v1932, 7
    %v1934 = vsub.s32 %v1342, %v1933
    %v1935 = vrot.slane %v1801, %v1934
    %v1936 = vsel %vm1347, %v1935, %v1931
    %v1937 = vlaneseq
    %v1938 = vshrl.u32 %v1937, 7
    %v1939 = vsub.s32 %v1337, %v1938
    %v1940 = vrot.slane %v1804, %v1939
    %v1941 = vlaneseq
    %v1942 = vshrl.u32 %v1941, 7
    %v1943 = vsub.s32 %v1342, %v1942
    %v1944 = vrot.slane %v1807, %v1943
    %v1945 = vsel %vm1347, %v1944, %v1940
    %v1946 = vlaneseq
    %v1947 = vshrl.u32 %v1946, 7
    %v1948 = vsub.s32 %v1337, %v1947
    %v1949 = vrot.slane %v1810, %v1948
    %v1950 = vlaneseq
    %v1951 = vshrl.u32 %v1950, 7
    %v1952 = vsub.s32 %v1342, %v1951
    %v1953 = vrot.slane %v1813, %v1952
    %v1954 = vsel %vm1347, %v1953, %v1949
    %v1955 = vlaneseq
    %v1956 = vshrl.u32 %v1955, 7
    %v1957 = vsub.s32 %v1337, %v1956
    %v1958 = vrot.slane %v1816, %v1957
    %v1959 = vlaneseq
    %v1960 = vshrl.u32 %v1959, 7
    %v1961 = vsub.s32 %v1342, %v1960
    %v1962 = vrot.slane %v1819, %v1961
    %v1963 = vsel %vm1347, %v1962, %v1958
    %v1964 = vsel %vm1484, %v1837, %v1828
    %v1965 = vsel %vm1486, %v1846, %v1964
    %v1966 = vsel %vm1488, %v1855, %v1965
    %v1967 = vsel %vm1490, %v1864, %v1966
    %v1968 = vsel %vm1492, %v1873, %v1967
    %v1969 = vsel %vm1494, %v1882, %v1968
    %v1970 = vsel %vm1496, %v1891, %v1969
    %v1971 = vsel %vm1484, %v1909, %v1900
    %v1972 = vsel %vm1486, %v1918, %v1971
    %v1973 = vsel %vm1488, %v1927, %v1972
    %v1974 = vsel %vm1490, %v1936, %v1973
    %v1975 = vsel %vm1492, %v1945, %v1974
    %v1976 = vsel %vm1494, %v1954, %v1975
    %v1977 = vsel %vm1496, %v1963, %v1976
    %v1980 = vsel %vm1507, %v1970, 0.0
    %1981 = vadd.xlane.f32.xlu0 %v1980
    %v1982 = vpop.xlane.xlu0 %1981
    %v1983 = vsel %vm1507, %v1977, 0.0
    %1984 = vadd.xlane.f32.xlu0 %v1983
    %v1985 = vpop.xlane.xlu0 %1984
    %v1986 = vrcp.pop %v1982
    %v1987 = vrcp.pop %v1985
    %v1990 = vlaneseq
    %v1991 = vshrl.u32 %v1990, 7
    %v1992 = vsub.s32 0, %v1991
    %v1993 = vrot.slane %v1986, %v1992
    %v1994 = vlaneseq
    %v1995 = vshrl.u32 %v1994, 7
    %v1996 = vsub.s32 1, %v1995
    %v1997 = vrot.slane %v1986, %v1996
    %v1998 = vlaneseq
    %v1999 = vshrl.u32 %v1998, 7
    %v2000 = vsub.s32 2, %v1999
    %v2001 = vrot.slane %v1986, %v2000
    %v2002 = vlaneseq
    %v2003 = vshrl.u32 %v2002, 7
    %v2004 = vsub.s32 3, %v2003
    %v2005 = vrot.slane %v1986, %v2004
    %v2006 = vlaneseq
    %v2007 = vshrl.u32 %v2006, 7
    %v2008 = vsub.s32 4, %v2007
    %v2009 = vrot.slane %v1986, %v2008
    %v2010 = vlaneseq
    %v2011 = vshrl.u32 %v2010, 7
    %v2012 = vsub.s32 5, %v2011
    %v2013 = vrot.slane %v1986, %v2012
    %v2014 = vlaneseq
    %v2015 = vshrl.u32 %v2014, 7
    %v2016 = vsub.s32 6, %v2015
    %v2017 = vrot.slane %v1986, %v2016
    %v2018 = vlaneseq
    %v2019 = vshrl.u32 %v2018, 7
    %v2020 = vsub.s32 7, %v2019
    %v2021 = vrot.slane %v1986, %v2020
    %v2022 = vlaneseq
    %v2023 = vshrl.u32 %v2022, 7
    %v2024 = vsub.s32 0, %v2023
    %v2025 = vrot.slane %v1987, %v2024
    %v2026 = vlaneseq
    %v2027 = vshrl.u32 %v2026, 7
    %v2028 = vsub.s32 1, %v2027
    %v2029 = vrot.slane %v1987, %v2028
    %v2030 = vlaneseq
    %v2031 = vshrl.u32 %v2030, 7
    %v2032 = vsub.s32 2, %v2031
    %v2033 = vrot.slane %v1987, %v2032
    %v2034 = vlaneseq
    %v2035 = vshrl.u32 %v2034, 7
    %v2036 = vsub.s32 3, %v2035
    %v2037 = vrot.slane %v1987, %v2036
    %v2038 = vlaneseq
    %v2039 = vshrl.u32 %v2038, 7
    %v2040 = vsub.s32 4, %v2039
    %v2041 = vrot.slane %v1987, %v2040
    %v2042 = vlaneseq
    %v2043 = vshrl.u32 %v2042, 7
    %v2044 = vsub.s32 5, %v2043
    %v2045 = vrot.slane %v1987, %v2044
    %v2046 = vlaneseq
    %v2047 = vshrl.u32 %v2046, 7
    %v2048 = vsub.s32 6, %v2047
    %v2049 = vrot.slane %v1987, %v2048
    %v2050 = vlaneseq
    %v2051 = vshrl.u32 %v2050, 7
    %v2052 = vsub.s32 7, %v2051
    %v2053 = vrot.slane %v1987, %v2052
    %v2070 = vmul.f32 %v1629, %v1993
    %v2071 = vmul.f32 %v1631, %v1993
    %v2072 = vmul.f32 %v1633, %v1997
    %v2073 = vmul.f32 %v1635, %v1997
    %v2074 = vmul.f32 %v1637, %v2001
    %v2075 = vmul.f32 %v1639, %v2001
    %v2076 = vmul.f32 %v1641, %v2005
    %v2077 = vmul.f32 %v1643, %v2005
    %v2078 = vmul.f32 %v1645, %v2009
    %v2079 = vmul.f32 %v1647, %v2009
    %v2080 = vmul.f32 %v1649, %v2013
    %v2081 = vmul.f32 %v1651, %v2013
    %v2082 = vmul.f32 %v1653, %v2017
    %v2083 = vmul.f32 %v1655, %v2017
    %v2084 = vmul.f32 %v1657, %v2021
    %v2085 = vmul.f32 %v1659, %v2021
    %v2086 = vmul.f32 %v1661, %v2025
    %v2087 = vmul.f32 %v1663, %v2025
    %v2088 = vmul.f32 %v1665, %v2029
    %v2089 = vmul.f32 %v1667, %v2029
    %v2090 = vmul.f32 %v1669, %v2033
    %v2091 = vmul.f32 %v1671, %v2033
    %v2092 = vmul.f32 %v1673, %v2037
    %v2093 = vmul.f32 %v1675, %v2037
    %v2094 = vmul.f32 %v1677, %v2041
    %v2095 = vmul.f32 %v1679, %v2041
    %v2096 = vmul.f32 %v1681, %v2045
    %v2097 = vmul.f32 %v1683, %v2045
    %v2098 = vmul.f32 %v1685, %v2049
    %v2099 = vmul.f32 %v1687, %v2049
    %v2100 = vmul.f32 %v1689, %v2053
    %v2101 = vmul.f32 %v1691, %v2053
    %2134 = vset.pattern.permute.xlu0 0
    %2135 = vperm.xlu0 %2134, %v2070
    %v2136 = vpop.permute.xlu0 %2135
    %2137 = vset.pattern.permute.xlu0 0
    %2138 = vperm.xlu0 %2137, %v2071
    %v2139 = vpop.permute.xlu0 %2138
    %2140 = vset.pattern.permute.xlu0 0
    %2141 = vperm.xlu0 %2140, %v2072
    %v2142 = vpop.permute.xlu0 %2141
    %2143 = vset.pattern.permute.xlu0 0
    %2144 = vperm.xlu0 %2143, %v2073
    %v2145 = vpop.permute.xlu0 %2144
    %2146 = vset.pattern.permute.xlu0 0
    %2147 = vperm.xlu0 %2146, %v2074
    %v2148 = vpop.permute.xlu0 %2147
    %2149 = vset.pattern.permute.xlu0 0
    %2150 = vperm.xlu0 %2149, %v2075
    %v2151 = vpop.permute.xlu0 %2150
    %2152 = vset.pattern.permute.xlu0 0
    %2153 = vperm.xlu0 %2152, %v2076
    %v2154 = vpop.permute.xlu0 %2153
    %2155 = vset.pattern.permute.xlu0 0
    %2156 = vperm.xlu0 %2155, %v2077
    %v2157 = vpop.permute.xlu0 %2156
    %2158 = vset.pattern.permute.xlu0 0
    %2159 = vperm.xlu0 %2158, %v2078
    %v2160 = vpop.permute.xlu0 %2159
    %2161 = vset.pattern.permute.xlu0 0
    %2162 = vperm.xlu0 %2161, %v2079
    %v2163 = vpop.permute.xlu0 %2162
    %2164 = vset.pattern.permute.xlu0 0
    %2165 = vperm.xlu0 %2164, %v2080
    %v2166 = vpop.permute.xlu0 %2165
    %2167 = vset.pattern.permute.xlu0 0
    %2168 = vperm.xlu0 %2167, %v2081
    %v2169 = vpop.permute.xlu0 %2168
    %2170 = vset.pattern.permute.xlu0 0
    %2171 = vperm.xlu0 %2170, %v2082
    %v2172 = vpop.permute.xlu0 %2171
    %2173 = vset.pattern.permute.xlu0 0
    %2174 = vperm.xlu0 %2173, %v2083
    %v2175 = vpop.permute.xlu0 %2174
    %2176 = vset.pattern.permute.xlu0 0
    %2177 = vperm.xlu0 %2176, %v2084
    %v2178 = vpop.permute.xlu0 %2177
    %2179 = vset.pattern.permute.xlu0 0
    %2180 = vperm.xlu0 %2179, %v2085
    %v2181 = vpop.permute.xlu0 %2180
    %2182 = vset.pattern.permute.xlu0 0
    %2183 = vperm.xlu0 %2182, %v2086
    %v2184 = vpop.permute.xlu0 %2183
    %2185 = vset.pattern.permute.xlu0 0
    %2186 = vperm.xlu0 %2185, %v2087
    %v2187 = vpop.permute.xlu0 %2186
    %2188 = vset.pattern.permute.xlu0 0
    %2189 = vperm.xlu0 %2188, %v2088
    %v2190 = vpop.permute.xlu0 %2189
    %2191 = vset.pattern.permute.xlu0 0
    %2192 = vperm.xlu0 %2191, %v2089
    %v2193 = vpop.permute.xlu0 %2192
    %2194 = vset.pattern.permute.xlu0 0
    %2195 = vperm.xlu0 %2194, %v2090
    %v2196 = vpop.permute.xlu0 %2195
    %2197 = vset.pattern.permute.xlu0 0
    %2198 = vperm.xlu0 %2197, %v2091
    %v2199 = vpop.permute.xlu0 %2198
    %2200 = vset.pattern.permute.xlu0 0
    %2201 = vperm.xlu0 %2200, %v2092
    %v2202 = vpop.permute.xlu0 %2201
    %2203 = vset.pattern.permute.xlu0 0
    %2204 = vperm.xlu0 %2203, %v2093
    %v2205 = vpop.permute.xlu0 %2204
    %2206 = vset.pattern.permute.xlu0 0
    %2207 = vperm.xlu0 %2206, %v2094
    %v2208 = vpop.permute.xlu0 %2207
    %2209 = vset.pattern.permute.xlu0 0
    %2210 = vperm.xlu0 %2209, %v2095
    %v2211 = vpop.permute.xlu0 %2210
    %2212 = vset.pattern.permute.xlu0 0
    %2213 = vperm.xlu0 %2212, %v2096
    %v2214 = vpop.permute.xlu0 %2213
    %2215 = vset.pattern.permute.xlu0 0
    %2216 = vperm.xlu0 %2215, %v2097
    %v2217 = vpop.permute.xlu0 %2216
    %2218 = vset.pattern.permute.xlu0 0
    %2219 = vperm.xlu0 %2218, %v2098
    %v2220 = vpop.permute.xlu0 %2219
    %2221 = vset.pattern.permute.xlu0 0
    %2222 = vperm.xlu0 %2221, %v2099
    %v2223 = vpop.permute.xlu0 %2222
    %2224 = vset.pattern.permute.xlu0 0
    %2225 = vperm.xlu0 %2224, %v2100
    %v2226 = vpop.permute.xlu0 %2225
    %2227 = vset.pattern.permute.xlu0 0
    %2228 = vperm.xlu0 %2227, %v2101
    %v2229 = vpop.permute.xlu0 %2228
    %v2230 = vlaneseq
    %v2231 = vshrl.u32 %v2230, 7
    %v2232 = vsub.s32 %v1337, %v2231
    %v2233 = vrot.slane %v2136, %v2232
    %v2234 = vlaneseq
    %v2235 = vshrl.u32 %v2234, 7
    %v2236 = vsub.s32 %v1342, %v2235
    %v2237 = vrot.slane %v2139, %v2236
    %v2238 = vsel %vm1347, %v2237, %v2233
    %v2239 = vlaneseq
    %v2240 = vshrl.u32 %v2239, 7
    %v2241 = vsub.s32 %v1337, %v2240
    %v2242 = vrot.slane %v2142, %v2241
    %v2243 = vlaneseq
    %v2244 = vshrl.u32 %v2243, 7
    %v2245 = vsub.s32 %v1342, %v2244
    %v2246 = vrot.slane %v2145, %v2245
    %v2247 = vsel %vm1347, %v2246, %v2242
    %v2248 = vlaneseq
    %v2249 = vshrl.u32 %v2248, 7
    %v2250 = vsub.s32 %v1337, %v2249
    %v2251 = vrot.slane %v2148, %v2250
    %v2252 = vlaneseq
    %v2253 = vshrl.u32 %v2252, 7
    %v2254 = vsub.s32 %v1342, %v2253
    %v2255 = vrot.slane %v2151, %v2254
    %v2256 = vsel %vm1347, %v2255, %v2251
    %v2257 = vlaneseq
    %v2258 = vshrl.u32 %v2257, 7
    %v2259 = vsub.s32 %v1337, %v2258
    %v2260 = vrot.slane %v2154, %v2259
    %v2261 = vlaneseq
    %v2262 = vshrl.u32 %v2261, 7
    %v2263 = vsub.s32 %v1342, %v2262
    %v2264 = vrot.slane %v2157, %v2263
    %v2265 = vsel %vm1347, %v2264, %v2260
    %v2266 = vlaneseq
    %v2267 = vshrl.u32 %v2266, 7
    %v2268 = vsub.s32 %v1337, %v2267
    %v2269 = vrot.slane %v2160, %v2268
    %v2270 = vlaneseq
    %v2271 = vshrl.u32 %v2270, 7
    %v2272 = vsub.s32 %v1342, %v2271
    %v2273 = vrot.slane %v2163, %v2272
    %v2274 = vsel %vm1347, %v2273, %v2269
    %v2275 = vlaneseq
    %v2276 = vshrl.u32 %v2275, 7
    %v2277 = vsub.s32 %v1337, %v2276
    %v2278 = vrot.slane %v2166, %v2277
    %v2279 = vlaneseq
    %v2280 = vshrl.u32 %v2279, 7
    %v2281 = vsub.s32 %v1342, %v2280
    %v2282 = vrot.slane %v2169, %v2281
    %v2283 = vsel %vm1347, %v2282, %v2278
    %v2284 = vlaneseq
    %v2285 = vshrl.u32 %v2284, 7
    %v2286 = vsub.s32 %v1337, %v2285
    %v2287 = vrot.slane %v2172, %v2286
    %v2288 = vlaneseq
    %v2289 = vshrl.u32 %v2288, 7
    %v2290 = vsub.s32 %v1342, %v2289
    %v2291 = vrot.slane %v2175, %v2290
    %v2292 = vsel %vm1347, %v2291, %v2287
    %v2293 = vlaneseq
    %v2294 = vshrl.u32 %v2293, 7
    %v2295 = vsub.s32 %v1337, %v2294
    %v2296 = vrot.slane %v2178, %v2295
    %v2297 = vlaneseq
    %v2298 = vshrl.u32 %v2297, 7
    %v2299 = vsub.s32 %v1342, %v2298
    %v2300 = vrot.slane %v2181, %v2299
    %v2301 = vsel %vm1347, %v2300, %v2296
    %v2302 = vlaneseq
    %v2303 = vshrl.u32 %v2302, 7
    %v2304 = vsub.s32 %v1337, %v2303
    %v2305 = vrot.slane %v2184, %v2304
    %v2306 = vlaneseq
    %v2307 = vshrl.u32 %v2306, 7
    %v2308 = vsub.s32 %v1342, %v2307
    %v2309 = vrot.slane %v2187, %v2308
    %v2310 = vsel %vm1347, %v2309, %v2305
    %v2311 = vlaneseq
    %v2312 = vshrl.u32 %v2311, 7
    %v2313 = vsub.s32 %v1337, %v2312
    %v2314 = vrot.slane %v2190, %v2313
    %v2315 = vlaneseq
    %v2316 = vshrl.u32 %v2315, 7
    %v2317 = vsub.s32 %v1342, %v2316
    %v2318 = vrot.slane %v2193, %v2317
    %v2319 = vsel %vm1347, %v2318, %v2314
    %v2320 = vlaneseq
    %v2321 = vshrl.u32 %v2320, 7
    %v2322 = vsub.s32 %v1337, %v2321
    %v2323 = vrot.slane %v2196, %v2322
    %v2324 = vlaneseq
    %v2325 = vshrl.u32 %v2324, 7
    %v2326 = vsub.s32 %v1342, %v2325
    %v2327 = vrot.slane %v2199, %v2326
    %v2328 = vsel %vm1347, %v2327, %v2323
    %v2329 = vlaneseq
    %v2330 = vshrl.u32 %v2329, 7
    %v2331 = vsub.s32 %v1337, %v2330
    %v2332 = vrot.slane %v2202, %v2331
    %v2333 = vlaneseq
    %v2334 = vshrl.u32 %v2333, 7
    %v2335 = vsub.s32 %v1342, %v2334
    %v2336 = vrot.slane %v2205, %v2335
    %v2337 = vsel %vm1347, %v2336, %v2332
    %v2338 = vlaneseq
    %v2339 = vshrl.u32 %v2338, 7
    %v2340 = vsub.s32 %v1337, %v2339
    %v2341 = vrot.slane %v2208, %v2340
    %v2342 = vlaneseq
    %v2343 = vshrl.u32 %v2342, 7
    %v2344 = vsub.s32 %v1342, %v2343
    %v2345 = vrot.slane %v2211, %v2344
    %v2346 = vsel %vm1347, %v2345, %v2341
    %v2347 = vlaneseq
    %v2348 = vshrl.u32 %v2347, 7
    %v2349 = vsub.s32 %v1337, %v2348
    %v2350 = vrot.slane %v2214, %v2349
    %v2351 = vlaneseq
    %v2352 = vshrl.u32 %v2351, 7
    %v2353 = vsub.s32 %v1342, %v2352
    %v2354 = vrot.slane %v2217, %v2353
    %v2355 = vsel %vm1347, %v2354, %v2350
    %v2356 = vlaneseq
    %v2357 = vshrl.u32 %v2356, 7
    %v2358 = vsub.s32 %v1337, %v2357
    %v2359 = vrot.slane %v2220, %v2358
    %v2360 = vlaneseq
    %v2361 = vshrl.u32 %v2360, 7
    %v2362 = vsub.s32 %v1342, %v2361
    %v2363 = vrot.slane %v2223, %v2362
    %v2364 = vsel %vm1347, %v2363, %v2359
    %v2365 = vlaneseq
    %v2366 = vshrl.u32 %v2365, 7
    %v2367 = vsub.s32 %v1337, %v2366
    %v2368 = vrot.slane %v2226, %v2367
    %v2369 = vlaneseq
    %v2370 = vshrl.u32 %v2369, 7
    %v2371 = vsub.s32 %v1342, %v2370
    %v2372 = vrot.slane %v2229, %v2371
    %v2373 = vsel %vm1347, %v2372, %v2368
    %v2374 = vsel %vm1484, %v2247, %v2238
    %v2375 = vsel %vm1486, %v2256, %v2374
    %v2376 = vsel %vm1488, %v2265, %v2375
    %v2377 = vsel %vm1490, %v2274, %v2376
    %v2378 = vsel %vm1492, %v2283, %v2377
    %v2379 = vsel %vm1494, %v2292, %v2378
    %v2380 = vsel %vm1496, %v2301, %v2379
    %v2381 = vsel %vm1484, %v2319, %v2310
    %v2382 = vsel %vm1486, %v2328, %v2381
    %v2383 = vsel %vm1488, %v2337, %v2382
    %v2384 = vsel %vm1490, %v2346, %v2383
    %v2385 = vsel %vm1492, %v2355, %v2384
    %v2386 = vsel %vm1494, %v2364, %v2385
    %v2387 = vsel %vm1496, %v2373, %v2386
    %2390 = vst.msk [vmem:[#allocation22] sm:$0xff] %vm1507, %v2380
    %2391 = vst.msk [vmem:[#allocation22 + $0x8] sm:$0xff] %vm1507, %v2387
    %v2424 = vmul.f32 %v2136, %v180
    %v2425 = vmul.f32 %v2139, %v181
    %v2426 = vmul.f32 %v2142, %v182
    %v2427 = vmul.f32 %v2145, %v183
    %v2428 = vmul.f32 %v2148, %v184
    %v2429 = vmul.f32 %v2151, %v185
    %v2430 = vmul.f32 %v2154, %v186
    %v2431 = vmul.f32 %v2157, %v187
    %v2432 = vmul.f32 %v2160, %v188
    %v2433 = vmul.f32 %v2163, %v189
    %v2434 = vmul.f32 %v2166, %v190
    %v2435 = vmul.f32 %v2169, %v191
    %v2436 = vmul.f32 %v2172, %v192
    %v2437 = vmul.f32 %v2175, %v193
    %v2438 = vmul.f32 %v2178, %v194
    %v2439 = vmul.f32 %v2181, %v195
    %v2440 = vmul.f32 %v2184, %v196
    %v2441 = vmul.f32 %v2187, %v197
    %v2442 = vmul.f32 %v2190, %v198
    %v2443 = vmul.f32 %v2193, %v199
    %v2444 = vmul.f32 %v2196, %v200
    %v2445 = vmul.f32 %v2199, %v201
    %v2446 = vmul.f32 %v2202, %v202
    %v2447 = vmul.f32 %v2205, %v203
    %v2448 = vmul.f32 %v2208, %v204
    %v2449 = vmul.f32 %v2211, %v205
    %v2450 = vmul.f32 %v2214, %v206
    %v2451 = vmul.f32 %v2217, %v207
    %v2452 = vmul.f32 %v2220, %v208
    %v2453 = vmul.f32 %v2223, %v209
    %v2454 = vmul.f32 %v2226, %v210
    %v2455 = vmul.f32 %v2229, %v211
    %v2456 = vadd.f32 %v2424, %v2425
    %v2457 = vrot.slane %v2456, 4
    %v2458 = vadd.f32 %v2456, %v2457
    %v2459 = vrot.slane %v2458, 2
    %v2460 = vadd.f32 %v2458, %v2459
    %v2461 = vrot.slane %v2460, 1
    %v2462 = vadd.f32 %v2460, %v2461
    %v2463 = vadd.f32 %v2426, %v2427
    %v2464 = vrot.slane %v2463, 4
    %v2465 = vadd.f32 %v2463, %v2464
    %v2466 = vrot.slane %v2465, 2
    %v2467 = vadd.f32 %v2465, %v2466
    %v2468 = vrot.slane %v2467, 1
    %v2469 = vadd.f32 %v2467, %v2468
    %v2470 = vadd.f32 %v2428, %v2429
    %v2471 = vrot.slane %v2470, 4
    %v2472 = vadd.f32 %v2470, %v2471
    %v2473 = vrot.slane %v2472, 2
    %v2474 = vadd.f32 %v2472, %v2473
    %v2475 = vrot.slane %v2474, 1
    %v2476 = vadd.f32 %v2474, %v2475
    %v2477 = vadd.f32 %v2430, %v2431
    %v2478 = vrot.slane %v2477, 4
    %v2479 = vadd.f32 %v2477, %v2478
    %v2480 = vrot.slane %v2479, 2
    %v2481 = vadd.f32 %v2479, %v2480
    %v2482 = vrot.slane %v2481, 1
    %v2483 = vadd.f32 %v2481, %v2482
    %v2484 = vadd.f32 %v2432, %v2433
    %v2485 = vrot.slane %v2484, 4
    %v2486 = vadd.f32 %v2484, %v2485
    %v2487 = vrot.slane %v2486, 2
    %v2488 = vadd.f32 %v2486, %v2487
    %v2489 = vrot.slane %v2488, 1
    %v2490 = vadd.f32 %v2488, %v2489
    %v2491 = vadd.f32 %v2434, %v2435
    %v2492 = vrot.slane %v2491, 4
    %v2493 = vadd.f32 %v2491, %v2492
    %v2494 = vrot.slane %v2493, 2
    %v2495 = vadd.f32 %v2493, %v2494
    %v2496 = vrot.slane %v2495, 1
    %v2497 = vadd.f32 %v2495, %v2496
    %v2498 = vadd.f32 %v2436, %v2437
    %v2499 = vrot.slane %v2498, 4
    %v2500 = vadd.f32 %v2498, %v2499
    %v2501 = vrot.slane %v2500, 2
    %v2502 = vadd.f32 %v2500, %v2501
    %v2503 = vrot.slane %v2502, 1
    %v2504 = vadd.f32 %v2502, %v2503
    %v2505 = vadd.f32 %v2438, %v2439
    %v2506 = vrot.slane %v2505, 4
    %v2507 = vadd.f32 %v2505, %v2506
    %v2508 = vrot.slane %v2507, 2
    %v2509 = vadd.f32 %v2507, %v2508
    %v2510 = vrot.slane %v2509, 1
    %v2511 = vadd.f32 %v2509, %v2510
    %v2512 = vadd.f32 %v2440, %v2441
    %v2513 = vrot.slane %v2512, 4
    %v2514 = vadd.f32 %v2512, %v2513
    %v2515 = vrot.slane %v2514, 2
    %v2516 = vadd.f32 %v2514, %v2515
    %v2517 = vrot.slane %v2516, 1
    %v2518 = vadd.f32 %v2516, %v2517
    %v2519 = vadd.f32 %v2442, %v2443
    %v2520 = vrot.slane %v2519, 4
    %v2521 = vadd.f32 %v2519, %v2520
    %v2522 = vrot.slane %v2521, 2
    %v2523 = vadd.f32 %v2521, %v2522
    %v2524 = vrot.slane %v2523, 1
    %v2525 = vadd.f32 %v2523, %v2524
    %v2526 = vadd.f32 %v2444, %v2445
    %v2527 = vrot.slane %v2526, 4
    %v2528 = vadd.f32 %v2526, %v2527
    %v2529 = vrot.slane %v2528, 2
    %v2530 = vadd.f32 %v2528, %v2529
    %v2531 = vrot.slane %v2530, 1
    %v2532 = vadd.f32 %v2530, %v2531
    %v2533 = vadd.f32 %v2446, %v2447
    %v2534 = vrot.slane %v2533, 4
    %v2535 = vadd.f32 %v2533, %v2534
    %v2536 = vrot.slane %v2535, 2
    %v2537 = vadd.f32 %v2535, %v2536
    %v2538 = vrot.slane %v2537, 1
    %v2539 = vadd.f32 %v2537, %v2538
    %v2540 = vadd.f32 %v2448, %v2449
    %v2541 = vrot.slane %v2540, 4
    %v2542 = vadd.f32 %v2540, %v2541
    %v2543 = vrot.slane %v2542, 2
    %v2544 = vadd.f32 %v2542, %v2543
    %v2545 = vrot.slane %v2544, 1
    %v2546 = vadd.f32 %v2544, %v2545
    %v2547 = vadd.f32 %v2450, %v2451
    %v2548 = vrot.slane %v2547, 4
    %v2549 = vadd.f32 %v2547, %v2548
    %v2550 = vrot.slane %v2549, 2
    %v2551 = vadd.f32 %v2549, %v2550
    %v2552 = vrot.slane %v2551, 1
    %v2553 = vadd.f32 %v2551, %v2552
    %v2554 = vadd.f32 %v2452, %v2453
    %v2555 = vrot.slane %v2554, 4
    %v2556 = vadd.f32 %v2554, %v2555
    %v2557 = vrot.slane %v2556, 2
    %v2558 = vadd.f32 %v2556, %v2557
    %v2559 = vrot.slane %v2558, 1
    %v2560 = vadd.f32 %v2558, %v2559
    %v2561 = vadd.f32 %v2454, %v2455
    %v2562 = vrot.slane %v2561, 4
    %v2563 = vadd.f32 %v2561, %v2562
    %v2564 = vrot.slane %v2563, 2
    %v2565 = vadd.f32 %v2563, %v2564
    %v2566 = vrot.slane %v2565, 1
    %v2567 = vadd.f32 %v2565, %v2566
    %v2568 = vld [vmem:[%s13] sm:$0x7]
    %v2569 = vld [vmem:[%s14] sm:$0x7]
    %v2570 = vld [vmem:[#allocation18] sm:$0xff]
    %v2571 = vld [vmem:[#allocation18 + $0x8] sm:$0xf]
    %v2572 = vld [vmem:[#allocation18 + $0xc] sm:$0xff]
    %v2573 = vld [vmem:[#allocation18 + $0x14] sm:$0xf]
    %v2574 = vld [vmem:[#allocation18 + $0x18] sm:$0xff]
    %v2575 = vld [vmem:[#allocation18 + $0x20] sm:$0xf]
    %v2576 = vld [vmem:[#allocation18 + $0x24] sm:$0xff]
    %v2577 = vld [vmem:[#allocation18 + $0x2c] sm:$0xf]
    %v2578 = vld [vmem:[#allocation18 + $0x30] sm:$0xff]
    %v2579 = vld [vmem:[#allocation18 + $0x38] sm:$0xf]
    %v2580 = vld [vmem:[#allocation18 + $0x3c] sm:$0xff]
    %v2581 = vld [vmem:[#allocation18 + $0x44] sm:$0xf]
    %v2582 = vld [vmem:[#allocation18 + $0x48] sm:$0xff]
    %v2583 = vld [vmem:[#allocation18 + $0x50] sm:$0xf]
    %v2584 = vld [vmem:[#allocation18 + $0x54] sm:$0xff]
    %v2585 = vld [vmem:[#allocation18 + $0x5c] sm:$0xf]
    %v2586 = vld [vmem:[#allocation18 + $0x60] sm:$0xff]
    %v2587 = vld [vmem:[#allocation18 + $0x68] sm:$0xf]
    %v2588 = vld [vmem:[#allocation18 + $0x6c] sm:$0xff]
    %v2589 = vld [vmem:[#allocation18 + $0x74] sm:$0xf]
    %v2590 = vld [vmem:[#allocation18 + $0x78] sm:$0xff]
    %v2591 = vld [vmem:[#allocation18 + $0x80] sm:$0xf]
    %v2592 = vld [vmem:[#allocation18 + $0x84] sm:$0xff]
    %v2593 = vld [vmem:[#allocation18 + $0x8c] sm:$0xf]
    %v2594 = vld [vmem:[#allocation18 + $0x90] sm:$0xff]
    %v2595 = vld [vmem:[#allocation18 + $0x98] sm:$0xf]
    %v2596 = vld [vmem:[#allocation18 + $0x9c] sm:$0xff]
    %v2597 = vld [vmem:[#allocation18 + $0xa4] sm:$0xf]
    %v2598 = vld [vmem:[#allocation18 + $0xa8] sm:$0xff]
    %v2599 = vld [vmem:[#allocation18 + $0xb0] sm:$0xf]
    %v2600 = vld [vmem:[#allocation18 + $0xb4] sm:$0xff]
    %v2601 = vld [vmem:[#allocation18 + $0xbc] sm:$0xf]
    %v2602 = vpack.c.bf16 %v2462, %v2462
    %v2603 = vpack.c.bf16 %v2469, %v2469
    %v2604 = vpack.c.bf16 %v2476, %v2476
    %v2605 = vpack.c.bf16 %v2483, %v2483
    %v2606 = vpack.c.bf16 %v2490, %v2490
    %v2607 = vpack.c.bf16 %v2497, %v2497
    %v2608 = vpack.c.bf16 %v2504, %v2504
    %v2609 = vpack.c.bf16 %v2511, %v2511
    %v2610 = vpack.c.bf16 %v2518, %v2518
    %v2611 = vpack.c.bf16 %v2525, %v2525
    %v2612 = vpack.c.bf16 %v2532, %v2532
    %v2613 = vpack.c.bf16 %v2539, %v2539
    %v2614 = vpack.c.bf16 %v2546, %v2546
    %v2615 = vpack.c.bf16 %v2553, %v2553
    %v2616 = vpack.c.bf16 %v2560, %v2560
    %v2617 = vpack.c.bf16 %v2567, %v2567
    %v2618 = vld [vmem:[#allocation16] sm:$0xff]
    %v2619 = vld [vmem:[#allocation16 + $0x8] sm:$0xf]
    %v2620 = vld [vmem:[#allocation16 + $0xc] sm:$0xff]
    %v2621 = vld [vmem:[#allocation16 + $0x14] sm:$0xf]
    %v2622 = vld [vmem:[#allocation16 + $0x18] sm:$0xff]
    %v2623 = vld [vmem:[#allocation16 + $0x20] sm:$0xf]
    %v2624 = vld [vmem:[#allocation16 + $0x24] sm:$0xff]
    %v2625 = vld [vmem:[#allocation16 + $0x2c] sm:$0xf]
    %v2626 = vld [vmem:[#allocation16 + $0x30] sm:$0xff]
    %v2627 = vld [vmem:[#allocation16 + $0x38] sm:$0xf]
    %v2628 = vld [vmem:[#allocation16 + $0x3c] sm:$0xff]
    %v2629 = vld [vmem:[#allocation16 + $0x44] sm:$0xf]
    %v2630 = vld [vmem:[#allocation16 + $0x48] sm:$0xff]
    %v2631 = vld [vmem:[#allocation16 + $0x50] sm:$0xf]
    %v2632 = vld [vmem:[#allocation16 + $0x54] sm:$0xff]
    %v2633 = vld [vmem:[#allocation16 + $0x5c] sm:$0xf]
    %v2634 = vld [vmem:[#allocation16 + $0x60] sm:$0xff]
    %v2635 = vld [vmem:[#allocation16 + $0x68] sm:$0xf]
    %v2636 = vld [vmem:[#allocation16 + $0x6c] sm:$0xff]
    %v2637 = vld [vmem:[#allocation16 + $0x74] sm:$0xf]
    %v2638 = vld [vmem:[#allocation16 + $0x78] sm:$0xff]
    %v2639 = vld [vmem:[#allocation16 + $0x80] sm:$0xf]
    %v2640 = vld [vmem:[#allocation16 + $0x84] sm:$0xff]
    %v2641 = vld [vmem:[#allocation16 + $0x8c] sm:$0xf]
    %v2642 = vld [vmem:[#allocation16 + $0x90] sm:$0xff]
    %v2643 = vld [vmem:[#allocation16 + $0x98] sm:$0xf]
    %v2644 = vld [vmem:[#allocation16 + $0x9c] sm:$0xff]
    %v2645 = vld [vmem:[#allocation16 + $0xa4] sm:$0xf]
    %v2646 = vld [vmem:[#allocation16 + $0xa8] sm:$0xff]
    %v2647 = vld [vmem:[#allocation16 + $0xb0] sm:$0xf]
    %v2648 = vld [vmem:[#allocation16 + $0xb4] sm:$0xff]
    %v2649 = vld [vmem:[#allocation16 + $0xbc] sm:$0xf]
    %v2651 = vlaneseq
    %v2652 = vshrl.u32 %v2651, 7
    %v2653 = vsub.s32 0, %v2652
    %v2654 = vrot.slane %v2568, %v2653
    %v2655 = vlaneseq
    %v2656 = vshrl.u32 %v2655, 7
    %v2657 = vsub.s32 1, %v2656
    %v2658 = vrot.slane %v2568, %v2657
    %v2659 = vlaneseq
    %v2660 = vshrl.u32 %v2659, 7
    %v2661 = vsub.s32 2, %v2660
    %v2662 = vrot.slane %v2568, %v2661
    %v2682 = vunpack.c.l.b16 %v2602
    %v2683 = vunpack.c.l.b16 %v2603
    %v2684 = vunpack.c.l.b16 %v2604
    %v2685 = vunpack.c.l.b16 %v2605
    %v2686 = vunpack.c.l.b16 %v2606
    %v2687 = vunpack.c.l.b16 %v2607
    %v2688 = vunpack.c.l.b16 %v2608
    %v2689 = vunpack.c.l.b16 %v2609
    %v2690 = vunpack.c.l.b16 %v2610
    %v2691 = vunpack.c.l.b16 %v2611
    %v2692 = vunpack.c.l.b16 %v2612
    %v2693 = vunpack.c.l.b16 %v2613
    %v2694 = vunpack.c.l.b16 %v2614
    %v2695 = vunpack.c.l.b16 %v2615
    %v2696 = vunpack.c.l.b16 %v2616
    %v2697 = vunpack.c.l.b16 %v2617
    %v2698 = vsel %vm1484, %v2683, %v2682
    %v2699 = vsel %vm1486, %v2684, %v2698
    %v2700 = vsel %vm1488, %v2685, %v2699
    %v2701 = vsel %vm1490, %v2686, %v2700
    %v2702 = vsel %vm1492, %v2687, %v2701
    %v2703 = vsel %vm1494, %v2688, %v2702
    %v2704 = vsel %vm1496, %v2689, %v2703
    %v2705 = vsel %vm1484, %v2691, %v2690
    %v2706 = vsel %vm1486, %v2692, %v2705
    %v2707 = vsel %vm1488, %v2693, %v2706
    %v2708 = vsel %vm1490, %v2694, %v2707
    %v2709 = vsel %vm1492, %v2695, %v2708
    %v2710 = vsel %vm1494, %v2696, %v2709
    %v2711 = vsel %vm1496, %v2697, %v2710
    %v2712 = vpack.c.b16 %v2711, %v2704
    %v2746 = vunpack.c.l.b16 %v2618
    %v2747 = vunpack.c.h.b16 %v2618
    %v2748 = vunpack.c.l.b16 %v2619
    %v2749 = vunpack.c.l.b16 %v2620
    %v2750 = vunpack.c.h.b16 %v2620
    %v2751 = vunpack.c.l.b16 %v2621
    %v2752 = vunpack.c.l.b16 %v2622
    %v2753 = vunpack.c.h.b16 %v2622
    %v2754 = vunpack.c.l.b16 %v2623
    %v2755 = vunpack.c.l.b16 %v2624
    %v2756 = vunpack.c.h.b16 %v2624
    %v2757 = vunpack.c.l.b16 %v2625
    %v2758 = vunpack.c.l.b16 %v2626
    %v2759 = vunpack.c.h.b16 %v2626
    %v2760 = vunpack.c.l.b16 %v2627
    %v2761 = vunpack.c.l.b16 %v2628
    %v2762 = vunpack.c.h.b16 %v2628
    %v2763 = vunpack.c.l.b16 %v2629
    %v2764 = vunpack.c.l.b16 %v2630
    %v2765 = vunpack.c.h.b16 %v2630
    %v2766 = vunpack.c.l.b16 %v2631
    %v2767 = vunpack.c.l.b16 %v2632
    %v2768 = vunpack.c.h.b16 %v2632
    %v2769 = vunpack.c.l.b16 %v2633
    %v2770 = vunpack.c.l.b16 %v2634
    %v2771 = vunpack.c.h.b16 %v2634
    %v2772 = vunpack.c.l.b16 %v2635
    %v2773 = vunpack.c.l.b16 %v2636
    %v2774 = vunpack.c.h.b16 %v2636
    %v2775 = vunpack.c.l.b16 %v2637
    %v2776 = vunpack.c.l.b16 %v2638
    %v2777 = vunpack.c.h.b16 %v2638
    %v2778 = vunpack.c.l.b16 %v2639
    %v2779 = vunpack.c.l.b16 %v2640
    %v2780 = vunpack.c.h.b16 %v2640
    %v2781 = vunpack.c.l.b16 %v2641
    %v2782 = vunpack.c.l.b16 %v2642
    %v2783 = vunpack.c.h.b16 %v2642
    %v2784 = vunpack.c.l.b16 %v2643
    %v2785 = vunpack.c.l.b16 %v2644
    %v2786 = vunpack.c.h.b16 %v2644
    %v2787 = vunpack.c.l.b16 %v2645
    %v2788 = vunpack.c.l.b16 %v2646
    %v2789 = vunpack.c.h.b16 %v2646
    %v2790 = vunpack.c.l.b16 %v2647
    %v2791 = vunpack.c.l.b16 %v2648
    %v2792 = vunpack.c.h.b16 %v2648
    %v2793 = vunpack.c.l.b16 %v2649
    %v2794 = vpack.c.b16 %v2749, %v2746
    %v2795 = vpack.c.b16 %v2750, %v2747
    %v2796 = vpack.c.b16 %v2751, %v2748
    %v2797 = vpack.c.b16 %v2755, %v2752
    %v2798 = vpack.c.b16 %v2756, %v2753
    %v2799 = vpack.c.b16 %v2757, %v2754
    %v2800 = vpack.c.b16 %v2761, %v2758
    %v2801 = vpack.c.b16 %v2762, %v2759
    %v2802 = vpack.c.b16 %v2763, %v2760
    %v2803 = vpack.c.b16 %v2767, %v2764
    %v2804 = vpack.c.b16 %v2768, %v2765
    %v2805 = vpack.c.b16 %v2769, %v2766
    %v2806 = vpack.c.b16 %v2773, %v2770
    %v2807 = vpack.c.b16 %v2774, %v2771
    %v2808 = vpack.c.b16 %v2775, %v2772
    %v2809 = vpack.c.b16 %v2779, %v2776
    %v2810 = vpack.c.b16 %v2780, %v2777
    %v2811 = vpack.c.b16 %v2781, %v2778
    %v2812 = vpack.c.b16 %v2785, %v2782
    %v2813 = vpack.c.b16 %v2786, %v2783
    %v2814 = vpack.c.b16 %v2787, %v2784
    %v2815 = vpack.c.b16 %v2791, %v2788
    %v2816 = vpack.c.b16 %v2792, %v2789
    %v2817 = vpack.c.b16 %v2793, %v2790
    %2842 = vmatprep.subr.bf16.mxu0 %v2795
    %2843 = vmatpush1.bf16.msra.mxu0 %v2794
    %2844 = vmatprep.subr.bf16.mxu0 %v2798
    %2845 = vmatpush1.bf16.msra.mxu0 %v2797
    %2846 = vmatprep.subr.bf16.mxu0 %v2801
    %2847 = vmatpush1.bf16.msra.mxu0 %v2800
    %2848 = vmatprep.subr.bf16.mxu0 %v2804
    %2849 = vmatpush1.bf16.msra.mxu0 %v2803
    %2850 = vmatprep.subr.bf16.mxu0 %v2807
    %2851 = vmatpush1.bf16.msra.mxu0 %v2806
    %2852 = vmatprep.subr.bf16.mxu0 %v2810
    %2853 = vmatpush1.bf16.msra.mxu0 %v2809
    %2854 = vmatprep.subr.bf16.mxu0 %v2813
    %2855 = vmatpush1.bf16.msra.mxu0 %v2812
    %2856 = vmatprep.subr.bf16.mxu0 %v2816
    %2857 = vmatpush1.bf16.msra.mxu0 %v2815
    %2858 = vmatprep.subr.bf16.mxu0 0
    %2859 = vmatpush1.bf16.msra.mxu0 0
    %2860 = vmatprep.subr.bf16.mxu0 0
    %2861 = vmatpush1.bf16.msra.mxu0 0
    %2862 = vmatprep.subr.bf16.mxu0 0
    %2863 = vmatpush1.bf16.msra.mxu0 0
    %2864 = vmatprep.subr.bf16.mxu0 0
    %2865 = vmatpush1.bf16.msra.mxu0 0
    %2866 = vmatprep.subr.bf16.mxu0 0
    %2867 = vmatpush1.bf16.msra.mxu0 0
    %2868 = vmatprep.subr.bf16.mxu0 0
    %2869 = vmatpush1.bf16.msra.mxu0 0
    %2870 = vmatprep.subr.bf16.mxu0 0
    %2871 = vmatpush1.bf16.msra.mxu0 0
    %2872 = vmatprep.subr.bf16.mxu0 0
    %2873 = vmatpush1.bf16.msra.mxu0 0
    %2874 = vmatprep.mubr.bf16.mxu0 0
    %2875 = vmatmul.mubr.bf16.gmra.mrb[0].mxu0 %v2712
    %v2876 = vpop.f32.mrb[0].mxu0
    %v2877 = vadd.f32 %v2654, %v2876
    %v2878 = vpop.f32.mrb[0].mxu0
    %v2879 = vadd.f32 %v2658, %v2878
    %v2880 = vpop.f32.mrb[0].mxu0
    %v2881 = vadd.f32 %v2654, %v2880
    %v2882 = vpop.f32.mrb[0].mxu0
    %v2883 = vadd.f32 %v2658, %v2882
    %2884 = vdwg.mxu0
    %2885 = vmatprep.subr.bf16.mxu0 0
    %2886 = vmatpush1.bf16.msra.mxu0 %v2796
    %2887 = vmatprep.subr.bf16.mxu0 0
    %2888 = vmatpush1.bf16.msra.mxu0 %v2799
    %2889 = vmatprep.subr.bf16.mxu0 0
    %2890 = vmatpush1.bf16.msra.mxu0 %v2802
    %2891 = vmatprep.subr.bf16.mxu0 0
    %2892 = vmatpush1.bf16.msra.mxu0 %v2805
    %2893 = vmatprep.subr.bf16.mxu0 0
    %2894 = vmatpush1.bf16.msra.mxu0 %v2808
    %2895 = vmatprep.subr.bf16.mxu0 0
    %2896 = vmatpush1.bf16.msra.mxu0 %v2811
    %2897 = vmatprep.subr.bf16.mxu0 0
    %2898 = vmatpush1.bf16.msra.mxu0 %v2814
    %2899 = vmatprep.subr.bf16.mxu0 0
    %2900 = vmatpush1.bf16.msra.mxu0 %v2817
    %2901 = vmatprep.subr.bf16.mxu0 0
    %2902 = vmatpush1.bf16.msra.mxu0 0
    %2903 = vmatprep.subr.bf16.mxu0 0
    %2904 = vmatpush1.bf16.msra.mxu0 0
    %2905 = vmatprep.subr.bf16.mxu0 0
    %2906 = vmatpush1.bf16.msra.mxu0 0
    %2907 = vmatprep.subr.bf16.mxu0 0
    %2908 = vmatpush1.bf16.msra.mxu0 0
    %2909 = vmatprep.subr.bf16.mxu0 0
    %2910 = vmatpush1.bf16.msra.mxu0 0
    %2911 = vmatprep.subr.bf16.mxu0 0
    %2912 = vmatpush1.bf16.msra.mxu0 0
    %2913 = vmatprep.subr.bf16.mxu0 0
    %2914 = vmatpush1.bf16.msra.mxu0 0
    %2915 = vmatprep.subr.bf16.mxu0 0
    %2916 = vmatpush1.bf16.msra.mxu0 0
    %2917 = vmatprep.mubr.bf16.mxu0 0
    %2918 = vmatmul.mubr.bf16.gmra.mrb[0].mxu0 %v2712
    %v2919 = vpop.f32.mrb[0].mxu0
    %v2920 = vadd.f32 %v2662, %v2919
    %v2921 = vpop.f32.mrb[0].mxu0
    %v2922 = vpop.f32.mrb[0].mxu0
    %v2923 = vadd.f32 %v2662, %v2922
    %v2924 = vpop.f32.mrb[0].mxu0
    %2925 = vdwg.mxu0
    %v2926 = vld [vmem:[#allocation4] sm:$0xf]
    %v2927 = vld [vmem:[#allocation4 + $0x4] sm:$0xf]
    %v2928 = vld [vmem:[#allocation4 + $0x8] sm:$0xf]
    %v2929 = vld [vmem:[#allocation4 + $0xc] sm:$0xf]
    %v2930 = vld [vmem:[#allocation4 + $0x10] sm:$0xf]
    %v2931 = vld [vmem:[#allocation4 + $0x14] sm:$0xf]
    %v2932 = vld [vmem:[#allocation4 + $0x18] sm:$0xf]
    %v2933 = vld [vmem:[#allocation4 + $0x1c] sm:$0xf]
    %v2934 = vld [vmem:[#allocation4 + $0x20] sm:$0xf]
    %v2935 = vld [vmem:[#allocation4 + $0x24] sm:$0xf]
    %v2936 = vld [vmem:[#allocation4 + $0x28] sm:$0xf]
    %v2937 = vld [vmem:[#allocation4 + $0x2c] sm:$0xf]
    %v2938 = vld [vmem:[#allocation4 + $0x30] sm:$0xf]
    %v2939 = vld [vmem:[#allocation4 + $0x34] sm:$0xf]
    %v2940 = vld [vmem:[#allocation4 + $0x38] sm:$0xf]
    %v2941 = vld [vmem:[#allocation4 + $0x3c] sm:$0xf]
    %v2942 = vld [vmem:[#allocation15] sm:$0xff]
    %v2943 = vld [vmem:[#allocation15 + $0x8] sm:$0xf]
    %v2944 = vld [vmem:[#allocation15 + $0xc] sm:$0xff]
    %v2945 = vld [vmem:[#allocation15 + $0x14] sm:$0xf]
    %v2946 = vld [vmem:[#allocation15 + $0x18] sm:$0xff]
    %v2947 = vld [vmem:[#allocation15 + $0x20] sm:$0xf]
    %v2948 = vld [vmem:[#allocation15 + $0x24] sm:$0xff]
    %v2949 = vld [vmem:[#allocation15 + $0x2c] sm:$0xf]
    %v2950 = vld [vmem:[#allocation15 + $0x30] sm:$0xff]
    %v2951 = vld [vmem:[#allocation15 + $0x38] sm:$0xf]
    %v2952 = vld [vmem:[#allocation15 + $0x3c] sm:$0xff]
    %v2953 = vld [vmem:[#allocation15 + $0x44] sm:$0xf]
    %v2954 = vld [vmem:[#allocation15 + $0x48] sm:$0xff]
    %v2955 = vld [vmem:[#allocation15 + $0x50] sm:$0xf]
    %v2956 = vld [vmem:[#allocation15 + $0x54] sm:$0xff]
    %v2957 = vld [vmem:[#allocation15 + $0x5c] sm:$0xf]
    %v2958 = vld [vmem:[#allocation15 + $0x60] sm:$0xff]
    %v2959 = vld [vmem:[#allocation15 + $0x68] sm:$0xf]
    %v2960 = vld [vmem:[#allocation15 + $0x6c] sm:$0xff]
    %v2961 = vld [vmem:[#allocation15 + $0x74] sm:$0xf]
    %v2962 = vld [vmem:[#allocation15 + $0x78] sm:$0xff]
    %v2963 = vld [vmem:[#allocation15 + $0x80] sm:$0xf]
    %v2964 = vld [vmem:[#allocation15 + $0x84] sm:$0xff]
    %v2965 = vld [vmem:[#allocation15 + $0x8c] sm:$0xf]
    %v2966 = vld [vmem:[#allocation15 + $0x90] sm:$0xff]
    %v2967 = vld [vmem:[#allocation15 + $0x98] sm:$0xf]
    %v2968 = vld [vmem:[#allocation15 + $0x9c] sm:$0xff]
    %v2969 = vld [vmem:[#allocation15 + $0xa4] sm:$0xf]
    %v2970 = vld [vmem:[#allocation15 + $0xa8] sm:$0xff]
    %v2971 = vld [vmem:[#allocation15 + $0xb0] sm:$0xf]
    %v2972 = vld [vmem:[#allocation15 + $0xb4] sm:$0xff]
    %v2973 = vld [vmem:[#allocation15 + $0xbc] sm:$0xf]
    %v2990 = vunpack.c.l.b16 %v2926
    %v2991 = vunpack.c.l.b16 %v2927
    %v2992 = vunpack.c.l.b16 %v2928
    %v2993 = vunpack.c.l.b16 %v2929
    %v2994 = vunpack.c.l.b16 %v2930
    %v2995 = vunpack.c.l.b16 %v2931
    %v2996 = vunpack.c.l.b16 %v2932
    %v2997 = vunpack.c.l.b16 %v2933
    %v2998 = vunpack.c.l.b16 %v2934
    %v2999 = vunpack.c.l.b16 %v2935
    %v3000 = vunpack.c.l.b16 %v2936
    %v3001 = vunpack.c.l.b16 %v2937
    %v3002 = vunpack.c.l.b16 %v2938
    %v3003 = vunpack.c.l.b16 %v2939
    %v3004 = vunpack.c.l.b16 %v2940
    %v3005 = vunpack.c.l.b16 %v2941
    %v3006 = vpack.c.b16 %v2991, %v2990
    %v3007 = vpack.c.b16 %v2993, %v2992
    %v3008 = vpack.c.b16 %v2995, %v2994
    %v3009 = vpack.c.b16 %v2997, %v2996
    %v3010 = vpack.c.b16 %v2999, %v2998
    %v3011 = vpack.c.b16 %v3001, %v3000
    %v3012 = vpack.c.b16 %v3003, %v3002
    %v3013 = vpack.c.b16 %v3005, %v3004
    %v3054 = vunpack.c.l.b16 %v2942
    %v3055 = vunpack.c.h.b16 %v2942
    %v3056 = vunpack.c.l.b16 %v2943
    %v3057 = vunpack.c.l.b16 %v2944
    %v3058 = vunpack.c.h.b16 %v2944
    %v3059 = vunpack.c.l.b16 %v2945
    %v3060 = vunpack.c.l.b16 %v2946
    %v3061 = vunpack.c.h.b16 %v2946
    %v3062 = vunpack.c.l.b16 %v2947
    %v3063 = vunpack.c.l.b16 %v2948
    %v3064 = vunpack.c.h.b16 %v2948
    %v3065 = vunpack.c.l.b16 %v2949
    %v3066 = vunpack.c.l.b16 %v2950
    %v3067 = vunpack.c.h.b16 %v2950
    %v3068 = vunpack.c.l.b16 %v2951
    %v3069 = vunpack.c.l.b16 %v2952
    %v3070 = vunpack.c.h.b16 %v2952
    %v3071 = vunpack.c.l.b16 %v2953
    %v3072 = vunpack.c.l.b16 %v2954
    %v3073 = vunpack.c.h.b16 %v2954
    %v3074 = vunpack.c.l.b16 %v2955
    %v3075 = vunpack.c.l.b16 %v2956
    %v3076 = vunpack.c.h.b16 %v2956
    %v3077 = vunpack.c.l.b16 %v2957
    %v3078 = vunpack.c.l.b16 %v2958
    %v3079 = vunpack.c.h.b16 %v2958
    %v3080 = vunpack.c.l.b16 %v2959
    %v3081 = vunpack.c.l.b16 %v2960
    %v3082 = vunpack.c.h.b16 %v2960
    %v3083 = vunpack.c.l.b16 %v2961
    %v3084 = vunpack.c.l.b16 %v2962
    %v3085 = vunpack.c.h.b16 %v2962
    %v3086 = vunpack.c.l.b16 %v2963
    %v3087 = vunpack.c.l.b16 %v2964
    %v3088 = vunpack.c.h.b16 %v2964
    %v3089 = vunpack.c.l.b16 %v2965
    %v3090 = vunpack.c.l.b16 %v2966
    %v3091 = vunpack.c.h.b16 %v2966
    %v3092 = vunpack.c.l.b16 %v2967
    %v3093 = vunpack.c.l.b16 %v2968
    %v3094 = vunpack.c.h.b16 %v2968
    %v3095 = vunpack.c.l.b16 %v2969
    %v3096 = vunpack.c.l.b16 %v2970
    %v3097 = vunpack.c.h.b16 %v2970
    %v3098 = vunpack.c.l.b16 %v2971
    %v3099 = vunpack.c.l.b16 %v2972
    %v3100 = vunpack.c.h.b16 %v2972
    %v3101 = vunpack.c.l.b16 %v2973
    %v3102 = vpack.c.b16 %v3057, %v3054
    %v3103 = vpack.c.b16 %v3058, %v3055
    %v3104 = vpack.c.b16 %v3059, %v3056
    %v3105 = vpack.c.b16 %v3063, %v3060
    %v3106 = vpack.c.b16 %v3064, %v3061
    %v3107 = vpack.c.b16 %v3065, %v3062
    %v3108 = vpack.c.b16 %v3069, %v3066
    %v3109 = vpack.c.b16 %v3070, %v3067
    %v3110 = vpack.c.b16 %v3071, %v3068
    %v3111 = vpack.c.b16 %v3075, %v3072
    %v3112 = vpack.c.b16 %v3076, %v3073
    %v3113 = vpack.c.b16 %v3077, %v3074
    %v3114 = vpack.c.b16 %v3081, %v3078
    %v3115 = vpack.c.b16 %v3082, %v3079
    %v3116 = vpack.c.b16 %v3083, %v3080
    %v3117 = vpack.c.b16 %v3087, %v3084
    %v3118 = vpack.c.b16 %v3088, %v3085
    %v3119 = vpack.c.b16 %v3089, %v3086
    %v3120 = vpack.c.b16 %v3093, %v3090
    %v3121 = vpack.c.b16 %v3094, %v3091
    %v3122 = vpack.c.b16 %v3095, %v3092
    %v3123 = vpack.c.b16 %v3099, %v3096
    %v3124 = vpack.c.b16 %v3100, %v3097
    %v3125 = vpack.c.b16 %v3101, %v3098
    %3150 = vmatprep.subr.bf16.mxu0 %v3103
    %3151 = vmatpush1.bf16.msra.mxu0 %v3102
    %3152 = vmatprep.subr.bf16.mxu0 %v3106
    %3153 = vmatpush1.bf16.msra.mxu0 %v3105
    %3154 = vmatprep.subr.bf16.mxu0 %v3109
    %3155 = vmatpush1.bf16.msra.mxu0 %v3108
    %3156 = vmatprep.subr.bf16.mxu0 %v3112
    %3157 = vmatpush1.bf16.msra.mxu0 %v3111
    %3158 = vmatprep.subr.bf16.mxu0 %v3115
    %3159 = vmatpush1.bf16.msra.mxu0 %v3114
    %3160 = vmatprep.subr.bf16.mxu0 %v3118
    %3161 = vmatpush1.bf16.msra.mxu0 %v3117
    %3162 = vmatprep.subr.bf16.mxu0 %v3121
    %3163 = vmatpush1.bf16.msra.mxu0 %v3120
    %3164 = vmatprep.subr.bf16.mxu0 %v3124
    %3165 = vmatpush1.bf16.msra.mxu0 %v3123
    %3166 = vmatprep.subr.bf16.mxu0 0
    %3167 = vmatpush1.bf16.msra.mxu0 0
    %3168 = vmatprep.subr.bf16.mxu0 0
    %3169 = vmatpush1.bf16.msra.mxu0 0
    %3170 = vmatprep.subr.bf16.mxu0 0
    %3171 = vmatpush1.bf16.msra.mxu0 0
    %3172 = vmatprep.subr.bf16.mxu0 0
    %3173 = vmatpush1.bf16.msra.mxu0 0
    %3174 = vmatprep.subr.bf16.mxu0 0
    %3175 = vmatpush1.bf16.msra.mxu0 0
    %3176 = vmatprep.subr.bf16.mxu0 0
    %3177 = vmatpush1.bf16.msra.mxu0 0
    %3178 = vmatprep.subr.bf16.mxu0 0
    %3179 = vmatpush1.bf16.msra.mxu0 0
    %3180 = vmatprep.subr.bf16.mxu0 0
    %3181 = vmatpush1.bf16.msra.mxu0 0
    %3182 = vmatprep.mubr.bf16.mxu0 0
    %3183 = vmatmul.mubr.bf16.gmra.mrb[0].mxu0 %v3006
    %v3184 = vpop.f32.mrb[0].mxu0
    %v3185 = vadd.f32 0.0, %v3184
    %v3186 = vpop.f32.mrb[0].mxu0
    %v3187 = vadd.f32 0.0, %v3186
    %v3188 = vpop.f32.mrb[0].mxu0
    %v3189 = vadd.f32 0.0, %v3188
    %v3190 = vpop.f32.mrb[0].mxu0
    %v3191 = vadd.f32 0.0, %v3190
    %3192 = vmatprep.mubr.bf16.mxu0 0
    %3193 = vmatmul.mubr.bf16.gmra.mrb[0].mxu0 %v3007
    %v3194 = vpop.f32.mrb[0].mxu0
    %v3195 = vadd.f32 0.0, %v3194
    %v3196 = vpop.f32.mrb[0].mxu0
    %v3197 = vadd.f32 0.0, %v3196
    %v3198 = vpop.f32.mrb[0].mxu0
    %v3199 = vadd.f32 0.0, %v3198
    %v3200 = vpop.f32.mrb[0].mxu0
    %v3201 = vadd.f32 0.0, %v3200
    %3202 = vmatprep.mubr.bf16.mxu0 0
    %3203 = vmatmul.mubr.bf16.gmra.mrb[0].mxu0 %v3008
    %v3204 = vpop.f32.mrb[0].mxu0
    %v3205 = vadd.f32 0.0, %v3204
    %v3206 = vpop.f32.mrb[0].mxu0
    %v3207 = vadd.f32 0.0, %v3206
    %v3208 = vpop.f32.mrb[0].mxu0
    %v3209 = vadd.f32 0.0, %v3208
    %v3210 = vpop.f32.mrb[0].mxu0
    %v3211 = vadd.f32 0.0, %v3210
    %3212 = vmatprep.mubr.bf16.mxu0 0
    %3213 = vmatmul.mubr.bf16.gmra.mrb[0].mxu0 %v3009
    %v3214 = vpop.f32.mrb[0].mxu0
    %v3215 = vadd.f32 0.0, %v3214
    %v3216 = vpop.f32.mrb[0].mxu0
    %v3217 = vadd.f32 0.0, %v3216
    %v3218 = vpop.f32.mrb[0].mxu0
    %v3219 = vadd.f32 0.0, %v3218
    %v3220 = vpop.f32.mrb[0].mxu0
    %v3221 = vadd.f32 0.0, %v3220
    %3222 = vmatprep.mubr.bf16.mxu0 0
    %3223 = vmatmul.mubr.bf16.gmra.mrb[0].mxu0 %v3010
    %v3224 = vpop.f32.mrb[0].mxu0
    %v3225 = vadd.f32 0.0, %v3224
    %v3226 = vpop.f32.mrb[0].mxu0
    %v3227 = vadd.f32 0.0, %v3226
    %v3228 = vpop.f32.mrb[0].mxu0
    %v3229 = vadd.f32 0.0, %v3228
    %v3230 = vpop.f32.mrb[0].mxu0
    %v3231 = vadd.f32 0.0, %v3230
    %3232 = vmatprep.mubr.bf16.mxu0 0
    %3233 = vmatmul.mubr.bf16.gmra.mrb[0].mxu0 %v3011
    %v3234 = vpop.f32.mrb[0].mxu0
    %v3235 = vadd.f32 0.0, %v3234
    %v3236 = vpop.f32.mrb[0].mxu0
    %v3237 = vadd.f32 0.0, %v3236
    %v3238 = vpop.f32.mrb[0].mxu0
    %v3239 = vadd.f32 0.0, %v3238
    %v3240 = vpop.f32.mrb[0].mxu0
    %v3241 = vadd.f32 0.0, %v3240
    %3242 = vmatprep.mubr.bf16.mxu0 0
    %3243 = vmatmul.mubr.bf16.gmra.mrb[0].mxu0 %v3012
    %v3244 = vpop.f32.mrb[0].mxu0
    %v3245 = vadd.f32 0.0, %v3244
    %v3246 = vpop.f32.mrb[0].mxu0
    %v3247 = vadd.f32 0.0, %v3246
    %v3248 = vpop.f32.mrb[0].mxu0
    %v3249 = vadd.f32 0.0, %v3248
    %v3250 = vpop.f32.mrb[0].mxu0
    %v3251 = vadd.f32 0.0, %v3250
    %3252 = vmatprep.mubr.bf16.mxu0 0
    %3253 = vmatmul.mubr.bf16.gmra.mrb[0].mxu0 %v3013
    %v3254 = vpop.f32.mrb[0].mxu0
    %v3255 = vadd.f32 0.0, %v3254
    %v3256 = vpop.f32.mrb[0].mxu0
    %v3257 = vadd.f32 0.0, %v3256
    %v3258 = vpop.f32.mrb[0].mxu0
    %v3259 = vadd.f32 0.0, %v3258
    %v3260 = vpop.f32.mrb[0].mxu0
    %v3261 = vadd.f32 0.0, %v3260
    %3262 = vdwg.mxu0
    %3263 = vmatprep.subr.bf16.mxu0 0
    %3264 = vmatpush1.bf16.msra.mxu0 %v3104
    %3265 = vmatprep.subr.bf16.mxu0 0
    %3266 = vmatpush1.bf16.msra.mxu0 %v3107
    %3267 = vmatprep.subr.bf16.mxu0 0
    %3268 = vmatpush1.bf16.msra.mxu0 %v3110
    %3269 = vmatprep.subr.bf16.mxu0 0
    %3270 = vmatpush1.bf16.msra.mxu0 %v3113
    %3271 = vmatprep.subr.bf16.mxu0 0
    %3272 = vmatpush1.bf16.msra.mxu0 %v3116
    %3273 = vmatprep.subr.bf16.mxu0 0
    %3274 = vmatpush1.bf16.msra.mxu0 %v3119
    %3275 = vmatprep.subr.bf16.mxu0 0
    %3276 = vmatpush1.bf16.msra.mxu0 %v3122
    %3277 = vmatprep.subr.bf16.mxu0 0
    %3278 = vmatpush1.bf16.msra.mxu0 %v3125
    %3279 = vmatprep.subr.bf16.mxu0 0
    %3280 = vmatpush1.bf16.msra.mxu0 0
    %3281 = vmatprep.subr.bf16.mxu0 0
    %3282 = vmatpush1.bf16.msra.mxu0 0
    %3283 = vmatprep.subr.bf16.mxu0 0
    %3284 = vmatpush1.bf16.msra.mxu0 0
    %3285 = vmatprep.subr.bf16.mxu0 0
    %3286 = vmatpush1.bf16.msra.mxu0 0
    %3287 = vmatprep.subr.bf16.mxu0 0
    %3288 = vmatpush1.bf16.msra.mxu0 0
    %3289 = vmatprep.subr.bf16.mxu0 0
    %3290 = vmatpush1.bf16.msra.mxu0 0
    %3291 = vmatprep.subr.bf16.mxu0 0
    %3292 = vmatpush1.bf16.msra.mxu0 0
    %3293 = vmatprep.subr.bf16.mxu0 0
    %3294 = vmatpush1.bf16.msra.mxu0 0
    %3295 = vmatprep.mubr.bf16.mxu0 0
    %3296 = vmatmul.mubr.bf16.gmra.mrb[0].mxu0 %v3006
    %v3297 = vpop.f32.mrb[0].mxu0
    %v3298 = vadd.f32 0.0, %v3297
    %v3299 = vpop.f32.mrb[0].mxu0
    %v3300 = vpop.f32.mrb[0].mxu0
    %v3301 = vadd.f32 0.0, %v3300
    %v3302 = vpop.f32.mrb[0].mxu0
    %3303 = vmatprep.mubr.bf16.mxu0 0
    %3304 = vmatmul.mubr.bf16.gmra.mrb[0].mxu0 %v3007
    %v3305 = vpop.f32.mrb[0].mxu0
    %v3306 = vadd.f32 0.0, %v3305
    %v3307 = vpop.f32.mrb[0].mxu0
    %v3308 = vpop.f32.mrb[0].mxu0
    %v3309 = vadd.f32 0.0, %v3308
    %v3310 = vpop.f32.mrb[0].mxu0
    %3311 = vmatprep.mubr.bf16.mxu0 0
    %3312 = vmatmul.mubr.bf16.gmra.mrb[0].mxu0 %v3008
    %v3313 = vpop.f32.mrb[0].mxu0
    %v3314 = vadd.f32 0.0, %v3313
    %v3315 = vpop.f32.mrb[0].mxu0
    %v3316 = vpop.f32.mrb[0].mxu0
    %v3317 = vadd.f32 0.0, %v3316
    %v3318 = vpop.f32.mrb[0].mxu0
    %3319 = vmatprep.mubr.bf16.mxu0 0
    %3320 = vmatmul.mubr.bf16.gmra.mrb[0].mxu0 %v3009
    %v3321 = vpop.f32.mrb[0].mxu0
    %v3322 = vadd.f32 0.0, %v3321
    %v3323 = vpop.f32.mrb[0].mxu0
    %v3324 = vpop.f32.mrb[0].mxu0
    %v3325 = vadd.f32 0.0, %v3324
    %v3326 = vpop.f32.mrb[0].mxu0
    %3327 = vmatprep.mubr.bf16.mxu0 0
    %3328 = vmatmul.mubr.bf16.gmra.mrb[0].mxu0 %v3010
    %v3329 = vpop.f32.mrb[0].mxu0
    %v3330 = vadd.f32 0.0, %v3329
    %v3331 = vpop.f32.mrb[0].mxu0
    %v3332 = vpop.f32.mrb[0].mxu0
    %v3333 = vadd.f32 0.0, %v3332
    %v3334 = vpop.f32.mrb[0].mxu0
    %3335 = vmatprep.mubr.bf16.mxu0 0
    %3336 = vmatmul.mubr.bf16.gmra.mrb[0].mxu0 %v3011
    %v3337 = vpop.f32.mrb[0].mxu0
    %v3338 = vadd.f32 0.0, %v3337
    %v3339 = vpop.f32.mrb[0].mxu0
    %v3340 = vpop.f32.mrb[0].mxu0
    %v3341 = vadd.f32 0.0, %v3340
    %v3342 = vpop.f32.mrb[0].mxu0
    %3343 = vmatprep.mubr.bf16.mxu0 0
    %3344 = vmatmul.mubr.bf16.gmra.mrb[0].mxu0 %v3012
    %v3345 = vpop.f32.mrb[0].mxu0
    %v3346 = vadd.f32 0.0, %v3345
    %v3347 = vpop.f32.mrb[0].mxu0
    %v3348 = vpop.f32.mrb[0].mxu0
    %v3349 = vadd.f32 0.0, %v3348
    %v3350 = vpop.f32.mrb[0].mxu0
    %3351 = vmatprep.mubr.bf16.mxu0 0
    %3352 = vmatmul.mubr.bf16.gmra.mrb[0].mxu0 %v3013
    %v3353 = vpop.f32.mrb[0].mxu0
    %v3354 = vadd.f32 0.0, %v3353
    %v3355 = vpop.f32.mrb[0].mxu0
    %v3356 = vpop.f32.mrb[0].mxu0
    %v3357 = vadd.f32 0.0, %v3356
    %v3358 = vpop.f32.mrb[0].mxu0
    %3359 = vdwg.mxu0
    %v3360 = vadd.f32 %v3185, %v2877
    %v3361 = vadd.f32 %v3187, %v2879
    %v3362 = vadd.f32 %v3298, %v2920
    %v3363 = vadd.f32 %v3189, %v2881
    %v3364 = vadd.f32 %v3191, %v2883
    %v3365 = vadd.f32 %v3301, %v2923
    %v3366 = vadd.f32 %v3195, %v2877
    %v3367 = vadd.f32 %v3197, %v2879
    %v3368 = vadd.f32 %v3306, %v2920
    %v3369 = vadd.f32 %v3199, %v2881
    %v3370 = vadd.f32 %v3201, %v2883
    %v3371 = vadd.f32 %v3309, %v2923
    %v3372 = vadd.f32 %v3205, %v2877
    %v3373 = vadd.f32 %v3207, %v2879
    %v3374 = vadd.f32 %v3314, %v2920
    %v3375 = vadd.f32 %v3209, %v2881
    %v3376 = vadd.f32 %v3211, %v2883
    %v3377 = vadd.f32 %v3317, %v2923
    %v3378 = vadd.f32 %v3215, %v2877
    %v3379 = vadd.f32 %v3217, %v2879
    %v3380 = vadd.f32 %v3322, %v2920
    %v3381 = vadd.f32 %v3219, %v2881
    %v3382 = vadd.f32 %v3221, %v2883
    %v3383 = vadd.f32 %v3325, %v2923
    %v3384 = vadd.f32 %v3225, %v2877
    %v3385 = vadd.f32 %v3227, %v2879
    %v3386 = vadd.f32 %v3330, %v2920
    %v3387 = vadd.f32 %v3229, %v2881
    %v3388 = vadd.f32 %v3231, %v2883
    %v3389 = vadd.f32 %v3333, %v2923
    %v3390 = vadd.f32 %v3235, %v2877
    %v3391 = vadd.f32 %v3237, %v2879
    %v3392 = vadd.f32 %v3338, %v2920
    %v3393 = vadd.f32 %v3239, %v2881
    %v3394 = vadd.f32 %v3241, %v2883
    %v3395 = vadd.f32 %v3341, %v2923
    %v3396 = vadd.f32 %v3245, %v2877
    %v3397 = vadd.f32 %v3247, %v2879
    %v3398 = vadd.f32 %v3346, %v2920
    %v3399 = vadd.f32 %v3249, %v2881
    %v3400 = vadd.f32 %v3251, %v2883
    %v3401 = vadd.f32 %v3349, %v2923
    %v3402 = vadd.f32 %v3255, %v2877
    %v3403 = vadd.f32 %v3257, %v2879
    %v3404 = vadd.f32 %v3354, %v2920
    %v3405 = vadd.f32 %v3259, %v2881
    %v3406 = vadd.f32 %v3261, %v2883
    %v3407 = vadd.f32 %v3357, %v2923
    %3408 = vst [vmem:[#allocation2] sm:$0xff] %v3360
    %3409 = vst [vmem:[#allocation2 + $0x8] sm:$0xff] %v3361
    %3410 = vst [vmem:[#allocation2 + $0x10] sm:$0xff] %v3362
    %3411 = vst [vmem:[#allocation2 + $0x18] sm:$0xff] %v3363
    %3412 = vst [vmem:[#allocation2 + $0x20] sm:$0xff] %v3364
    %3413 = vst [vmem:[#allocation2 + $0x28] sm:$0xff] %v3365
    %3414 = vst [vmem:[#allocation2 + $0x30] sm:$0xff] %v3366
    %3415 = vst [vmem:[#allocation2 + $0x38] sm:$0xff] %v3367
    %3416 = vst [vmem:[#allocation2 + $0x40] sm:$0xff] %v3368
    %3417 = vst [vmem:[#allocation2 + $0x48] sm:$0xff] %v3369
    %3418 = vst [vmem:[#allocation2 + $0x50] sm:$0xff] %v3370
    %3419 = vst [vmem:[#allocation2 + $0x58] sm:$0xff] %v3371
    %3420 = vst [vmem:[#allocation2 + $0x60] sm:$0xff] %v3372
    %3421 = vst [vmem:[#allocation2 + $0x68] sm:$0xff] %v3373
    %3422 = vst [vmem:[#allocation2 + $0x70] sm:$0xff] %v3374
    %3423 = vst [vmem:[#allocation2 + $0x78] sm:$0xff] %v3375
    %3424 = vst [vmem:[#allocation2 + $0x80] sm:$0xff] %v3376
    %3425 = vst [vmem:[#allocation2 + $0x88] sm:$0xff] %v3377
    %3426 = vst [vmem:[#allocation2 + $0x90] sm:$0xff] %v3378
    %3427 = vst [vmem:[#allocation2 + $0x98] sm:$0xff] %v3379
    %3428 = vst [vmem:[#allocation2 + $0xa0] sm:$0xff] %v3380
    %3429 = vst [vmem:[#allocation2 + $0xa8] sm:$0xff] %v3381
    %3430 = vst [vmem:[#allocation2 + $0xb0] sm:$0xff] %v3382
    %3431 = vst [vmem:[#allocation2 + $0xb8] sm:$0xff] %v3383
    %3432 = vst [vmem:[#allocation2 + $0xc0] sm:$0xff] %v3384
    %3433 = vst [vmem:[#allocation2 + $0xc8] sm:$0xff] %v3385
    %3434 = vst [vmem:[#allocation2 + $0xd0] sm:$0xff] %v3386
    %3435 = vst [vmem:[#allocation2 + $0xd8] sm:$0xff] %v3387
    %3436 = vst [vmem:[#allocation2 + $0xe0] sm:$0xff] %v3388
    %3437 = vst [vmem:[#allocation2 + $0xe8] sm:$0xff] %v3389
    %3438 = vst [vmem:[#allocation2 + $0xf0] sm:$0xff] %v3390
    %3439 = vst [vmem:[#allocation2 + $0xf8] sm:$0xff] %v3391
    %3440 = vst [vmem:[#allocation2 + $0x100] sm:$0xff] %v3392
    %3441 = vst [vmem:[#allocation2 + $0x108] sm:$0xff] %v3393
    %3442 = vst [vmem:[#allocation2 + $0x110] sm:$0xff] %v3394
    %3443 = vst [vmem:[#allocation2 + $0x118] sm:$0xff] %v3395
    %3444 = vst [vmem:[#allocation2 + $0x120] sm:$0xff] %v3396
    %3445 = vst [vmem:[#allocation2 + $0x128] sm:$0xff] %v3397
    %3446 = vst [vmem:[#allocation2 + $0x130] sm:$0xff] %v3398
    %3447 = vst [vmem:[#allocation2 + $0x138] sm:$0xff] %v3399
    %3448 = vst [vmem:[#allocation2 + $0x140] sm:$0xff] %v3400
    %3449 = vst [vmem:[#allocation2 + $0x148] sm:$0xff] %v3401
    %3450 = vst [vmem:[#allocation2 + $0x150] sm:$0xff] %v3402
    %3451 = vst [vmem:[#allocation2 + $0x158] sm:$0xff] %v3403
    %3452 = vst [vmem:[#allocation2 + $0x160] sm:$0xff] %v3404
    %3453 = vst [vmem:[#allocation2 + $0x168] sm:$0xff] %v3405
    %3454 = vst [vmem:[#allocation2 + $0x170] sm:$0xff] %v3406
    %3455 = vst [vmem:[#allocation2 + $0x178] sm:$0xff] %v3407
    %v3456 = vld [vmem:[#allocation2] sm:$0xff]
    %v3457 = vld [vmem:[#allocation2 + $0x8] sm:$0xff]
    %v3458 = vld [vmem:[#allocation2 + $0x10] sm:$0xff]
    %v3459 = vld [vmem:[#allocation2 + $0x18] sm:$0xff]
    %v3460 = vld [vmem:[#allocation2 + $0x20] sm:$0xff]
    %v3461 = vld [vmem:[#allocation2 + $0x28] sm:$0xff]
    %v3463 = vlaneseq
    %v3464 = vshrl.u32 %v3463, 7
    %v3465 = vsub.s32 0, %v3464
    %v3466 = vrot.slane %v2569, %v3465
    %v3467 = vlaneseq
    %v3468 = vshrl.u32 %v3467, 7
    %v3469 = vsub.s32 1, %v3468
    %v3470 = vrot.slane %v2569, %v3469
    %v3471 = vlaneseq
    %v3472 = vshrl.u32 %v3471, 7
    %v3473 = vsub.s32 2, %v3472
    %v3474 = vrot.slane %v2569, %v3473
    %v3510 = vunpack.c.l.b16 %v2570
    %v3511 = vunpack.c.h.b16 %v2570
    %v3512 = vunpack.c.l.b16 %v2571
    %v3513 = vunpack.c.l.b16 %v2572
    %v3514 = vunpack.c.h.b16 %v2572
    %v3515 = vunpack.c.l.b16 %v2573
    %v3516 = vunpack.c.l.b16 %v2574
    %v3517 = vunpack.c.h.b16 %v2574
    %v3518 = vunpack.c.l.b16 %v2575
    %v3519 = vunpack.c.l.b16 %v2576
    %v3520 = vunpack.c.h.b16 %v2576
    %v3521 = vunpack.c.l.b16 %v2577
    %v3522 = vunpack.c.l.b16 %v2578
    %v3523 = vunpack.c.h.b16 %v2578
    %v3524 = vunpack.c.l.b16 %v2579
    %v3525 = vunpack.c.l.b16 %v2580
    %v3526 = vunpack.c.h.b16 %v2580
    %v3527 = vunpack.c.l.b16 %v2581
    %v3528 = vunpack.c.l.b16 %v2582
    %v3529 = vunpack.c.h.b16 %v2582
    %v3530 = vunpack.c.l.b16 %v2583
    %v3531 = vunpack.c.l.b16 %v2584
    %v3532 = vunpack.c.h.b16 %v2584
    %v3533 = vunpack.c.l.b16 %v2585
    %v3534 = vunpack.c.l.b16 %v2586
    %v3535 = vunpack.c.h.b16 %v2586
    %v3536 = vunpack.c.l.b16 %v2587
    %v3537 = vunpack.c.l.b16 %v2588
    %v3538 = vunpack.c.h.b16 %v2588
    %v3539 = vunpack.c.l.b16 %v2589
    %v3540 = vunpack.c.l.b16 %v2590
    %v3541 = vunpack.c.h.b16 %v2590
    %v3542 = vunpack.c.l.b16 %v2591
    %v3543 = vunpack.c.l.b16 %v2592
    %v3544 = vunpack.c.h.b16 %v2592
    %v3545 = vunpack.c.l.b16 %v2593
    %v3546 = vunpack.c.l.b16 %v2594
    %v3547 = vunpack.c.h.b16 %v2594
    %v3548 = vunpack.c.l.b16 %v2595
    %v3549 = vunpack.c.l.b16 %v2596
    %v3550 = vunpack.c.h.b16 %v2596
    %v3551 = vunpack.c.l.b16 %v2597
    %v3552 = vunpack.c.l.b16 %v2598
    %v3553 = vunpack.c.h.b16 %v2598
    %v3554 = vunpack.c.l.b16 %v2599
    %v3555 = vunpack.c.l.b16 %v2600
    %v3556 = vunpack.c.h.b16 %v2600
    %v3557 = vunpack.c.l.b16 %v2601
    %v3558 = vpack.c.b16 %v3513, %v3510
    %v3559 = vpack.c.b16 %v3514, %v3511
    %v3560 = vpack.c.b16 %v3515, %v3512
    %v3561 = vpack.c.b16 %v3519, %v3516
    %v3562 = vpack.c.b16 %v3520, %v3517
    %v3563 = vpack.c.b16 %v3521, %v3518
    %v3564 = vpack.c.b16 %v3525, %v3522
    %v3565 = vpack.c.b16 %v3526, %v3523
    %v3566 = vpack.c.b16 %v3527, %v3524
    %v3567 = vpack.c.b16 %v3531, %v3528
    %v3568 = vpack.c.b16 %v3532, %v3529
    %v3569 = vpack.c.b16 %v3533, %v3530
    %v3570 = vpack.c.b16 %v3537, %v3534
    %v3571 = vpack.c.b16 %v3538, %v3535
    %v3572 = vpack.c.b16 %v3539, %v3536
    %v3573 = vpack.c.b16 %v3543, %v3540
    %v3574 = vpack.c.b16 %v3544, %v3541
    %v3575 = vpack.c.b16 %v3545, %v3542
    %v3576 = vpack.c.b16 %v3549, %v3546
    %v3577 = vpack.c.b16 %v3550, %v3547
    %v3578 = vpack.c.b16 %v3551, %v3548
    %v3579 = vpack.c.b16 %v3555, %v3552
    %v3580 = vpack.c.b16 %v3556, %v3553
    %v3581 = vpack.c.b16 %v3557, %v3554
    %3606 = vmatprep.subr.bf16.mxu0 %v3559
    %3607 = vmatpush1.bf16.msra.mxu0 %v3558
    %3608 = vmatprep.subr.bf16.mxu0 %v3562
    %3609 = vmatpush1.bf16.msra.mxu0 %v3561
    %3610 = vmatprep.subr.bf16.mxu0 %v3565
    %3611 = vmatpush1.bf16.msra.mxu0 %v3564
    %3612 = vmatprep.subr.bf16.mxu0 %v3568
    %3613 = vmatpush1.bf16.msra.mxu0 %v3567
    %3614 = vmatprep.subr.bf16.mxu0 %v3571
    %3615 = vmatpush1.bf16.msra.mxu0 %v3570
    %3616 = vmatprep.subr.bf16.mxu0 %v3574
    %3617 = vmatpush1.bf16.msra.mxu0 %v3573
    %3618 = vmatprep.subr.bf16.mxu0 %v3577
    %3619 = vmatpush1.bf16.msra.mxu0 %v3576
    %3620 = vmatprep.subr.bf16.mxu0 %v3580
    %3621 = vmatpush1.bf16.msra.mxu0 %v3579
    %3622 = vmatprep.subr.bf16.mxu0 0
    %3623 = vmatpush1.bf16.msra.mxu0 0
    %3624 = vmatprep.subr.bf16.mxu0 0
    %3625 = vmatpush1.bf16.msra.mxu0 0
    %3626 = vmatprep.subr.bf16.mxu0 0
    %3627 = vmatpush1.bf16.msra.mxu0 0
    %3628 = vmatprep.subr.bf16.mxu0 0
    %3629 = vmatpush1.bf16.msra.mxu0 0
    %3630 = vmatprep.subr.bf16.mxu0 0
    %3631 = vmatpush1.bf16.msra.mxu0 0
    %3632 = vmatprep.subr.bf16.mxu0 0
    %3633 = vmatpush1.bf16.msra.mxu0 0
    %3634 = vmatprep.subr.bf16.mxu0 0
    %3635 = vmatpush1.bf16.msra.mxu0 0
    %3636 = vmatprep.subr.bf16.mxu0 0
    %3637 = vmatpush1.bf16.msra.mxu0 0
    %3638 = vmatprep.mubr.bf16.mxu0 0
    %3639 = vmatmul.mubr.bf16.gmra.mrb[0].mxu0 %v462
    %v3640 = vpop.f32.mrb[0].mxu0
    %v3641 = vadd.f32 %v3466, %v3640
    %v3642 = vpop.f32.mrb[0].mxu0
    %v3643 = vadd.f32 %v3470, %v3642
    %v3644 = vpop.f32.mrb[0].mxu0
    %v3645 = vadd.f32 %v3466, %v3644
    %v3646 = vpop.f32.mrb[0].mxu0
    %v3647 = vadd.f32 %v3470, %v3646
    %3648 = vdwg.mxu0
    %3649 = vmatprep.subr.bf16.mxu0 0
    %3650 = vmatpush1.bf16.msra.mxu0 %v3560
    %3651 = vmatprep.subr.bf16.mxu0 0
    %3652 = vmatpush1.bf16.msra.mxu0 %v3563
    %3653 = vmatprep.subr.bf16.mxu0 0
    %3654 = vmatpush1.bf16.msra.mxu0 %v3566
    %3655 = vmatprep.subr.bf16.mxu0 0
    %3656 = vmatpush1.bf16.msra.mxu0 %v3569
    %3657 = vmatprep.subr.bf16.mxu0 0
    %3658 = vmatpush1.bf16.msra.mxu0 %v3572
    %3659 = vmatprep.subr.bf16.mxu0 0
    %3660 = vmatpush1.bf16.msra.mxu0 %v3575
    %3661 = vmatprep.subr.bf16.mxu0 0
    %3662 = vmatpush1.bf16.msra.mxu0 %v3578
    %3663 = vmatprep.subr.bf16.mxu0 0
    %3664 = vmatpush1.bf16.msra.mxu0 %v3581
    %3665 = vmatprep.subr.bf16.mxu0 0
    %3666 = vmatpush1.bf16.msra.mxu0 0
    %3667 = vmatprep.subr.bf16.mxu0 0
    %3668 = vmatpush1.bf16.msra.mxu0 0
    %3669 = vmatprep.subr.bf16.mxu0 0
    %3670 = vmatpush1.bf16.msra.mxu0 0
    %3671 = vmatprep.subr.bf16.mxu0 0
    %3672 = vmatpush1.bf16.msra.mxu0 0
    %3673 = vmatprep.subr.bf16.mxu0 0
    %3674 = vmatpush1.bf16.msra.mxu0 0
    %3675 = vmatprep.subr.bf16.mxu0 0
    %3676 = vmatpush1.bf16.msra.mxu0 0
    %3677 = vmatprep.subr.bf16.mxu0 0
    %3678 = vmatpush1.bf16.msra.mxu0 0
    %3679 = vmatprep.subr.bf16.mxu0 0
    %3680 = vmatpush1.bf16.msra.mxu0 0
    %3681 = vmatprep.mubr.bf16.mxu0 0
    %3682 = vmatmul.mubr.bf16.gmra.mrb[0].mxu0 %v462
    %v3683 = vpop.f32.mrb[0].mxu0
    %v3684 = vadd.f32 %v3474, %v3683
    %v3685 = vpop.f32.mrb[0].mxu0
    %v3686 = vpop.f32.mrb[0].mxu0
    %v3687 = vadd.f32 %v3474, %v3686
    %v3688 = vpop.f32.mrb[0].mxu0
    %3689 = vdwg.mxu0
    %v3690 = vadd.f32 %v3456, %v3641
    %v3691 = vadd.f32 %v3459, %v3645
    %v3692 = vxor.u32 %v3690, 2147483648
    %v3693 = vxor.u32 %v3691, 2147483648
    %v3694 = vmul.f32 %v3692, 1.442695
    %v3695 = vpow.pop %v3694
    %v3696 = vmul.f32 %v3693, 1.442695
    %v3697 = vpow.pop %v3696
    %v3698 = vadd.f32 %v3695, 1.0
    %v3699 = vadd.f32 %v3697, 1.0
    %v3700 = vrcp.pop %v3698
    %v3701 = vmul.f32 1.0, %v3700
    %v3702 = vrcp.pop %v3699
    %v3703 = vmul.f32 1.0, %v3702
    %v3704 = vadd.f32 %v3457, %v3643
    %v3705 = vadd.f32 %v3460, %v3647
    %v3706 = vxor.u32 %v3704, 2147483648
    %v3707 = vxor.u32 %v3705, 2147483648
    %v3708 = vmul.f32 %v3706, 1.442695
    %v3709 = vpow.pop %v3708
    %v3710 = vmul.f32 %v3707, 1.442695
    %v3711 = vpow.pop %v3710
    %v3712 = vadd.f32 %v3709, 1.0
    %v3713 = vadd.f32 %v3711, 1.0
    %v3714 = vrcp.pop %v3712
    %v3715 = vmul.f32 1.0, %v3714
    %v3716 = vrcp.pop %v3713
    %v3717 = vmul.f32 1.0, %v3716
    %v3718 = vmul.f32 %v3701, %v3684
    %v3719 = vmul.f32 %v3703, %v3687
    %v3720 = vadd.f32 %v3458, %v3718
    %v3721 = vadd.f32 %v3461, %v3719
    %v3722 = vtanh.pop %v3720
    %v3723 = vtanh.pop %v3721
    %v3724 = vsub.f32 1.0, %v3715
    %v3725 = vsub.f32 1.0, %v3717
    %v3726 = vmul.f32 %v3724, %v3722
    %v3727 = vmul.f32 %v3725, %v3723
    %v3728 = vmul.f32 %v3715, %v212
    %v3729 = vmul.f32 %v3717, %v213
    %v3730 = vadd.f32 %v3726, %v3728
    %v3731 = vadd.f32 %v3727, %v3729
    %v3732 = vpack.c.bf16 %v3731, %v3730
    %v3734 = vunpack.c.l.b16 %v3732
    %v3735 = vunpack.c.h.b16 %v3732
    %v3736 = vpack.c.b16 %v3734, %v3734
    %v3737 = vpack.c.b16 %v3735, %v3735
    %3740 = vst [vmem:[#allocation19] sm:$0xf] %v3736
    %3741 = vst [vmem:[#allocation19 + $0x4] sm:$0xf] %v3737
    %s3742 = scalar_lea.vmem [#allocation2], 48
    %v3743 = vld [vmem:[%s3742] sm:$0xff]
    %v3744 = vld [vmem:[%s3742 + $0x8] sm:$0xff]
    %v3745 = vld [vmem:[%s3742 + $0x10] sm:$0xff]
    %v3746 = vld [vmem:[%s3742 + $0x18] sm:$0xff]
    %v3747 = vld [vmem:[%s3742 + $0x20] sm:$0xff]
    %v3748 = vld [vmem:[%s3742 + $0x28] sm:$0xff]
    %3749 = vmatprep.subr.bf16.mxu0 %v3559
    %3750 = vmatpush1.bf16.msra.mxu0 %v3558
    %3751 = vmatprep.subr.bf16.mxu0 %v3562
    %3752 = vmatpush1.bf16.msra.mxu0 %v3561
    %3753 = vmatprep.subr.bf16.mxu0 %v3565
    %3754 = vmatpush1.bf16.msra.mxu0 %v3564
    %3755 = vmatprep.subr.bf16.mxu0 %v3568
    %3756 = vmatpush1.bf16.msra.mxu0 %v3567
    %3757 = vmatprep.subr.bf16.mxu0 %v3571
    %3758 = vmatpush1.bf16.msra.mxu0 %v3570
    %3759 = vmatprep.subr.bf16.mxu0 %v3574
    %3760 = vmatpush1.bf16.msra.mxu0 %v3573
    %3761 = vmatprep.subr.bf16.mxu0 %v3577
    %3762 = vmatpush1.bf16.msra.mxu0 %v3576
    %3763 = vmatprep.subr.bf16.mxu0 %v3580
    %3764 = vmatpush1.bf16.msra.mxu0 %v3579
    %3765 = vmatprep.subr.bf16.mxu0 0
    %3766 = vmatpush1.bf16.msra.mxu0 0
    %3767 = vmatprep.subr.bf16.mxu0 0
    %3768 = vmatpush1.bf16.msra.mxu0 0
    %3769 = vmatprep.subr.bf16.mxu0 0
    %3770 = vmatpush1.bf16.msra.mxu0 0
    %3771 = vmatprep.subr.bf16.mxu0 0
    %3772 = vmatpush1.bf16.msra.mxu0 0
    %3773 = vmatprep.subr.bf16.mxu0 0
    %3774 = vmatpush1.bf16.msra.mxu0 0
    %3775 = vmatprep.subr.bf16.mxu0 0
    %3776 = vmatpush1.bf16.msra.mxu0 0
    %3777 = vmatprep.subr.bf16.mxu0 0
    %3778 = vmatpush1.bf16.msra.mxu0 0
    %3779 = vmatprep.subr.bf16.mxu0 0
    %3780 = vmatpush1.bf16.msra.mxu0 0
    %3781 = vmatprep.mubr.bf16.mxu0 0
    %3782 = vmatmul.mubr.bf16.gmra.mrb[0].mxu0 %v3732
    %v3783 = vpop.f32.mrb[0].mxu0
    %v3784 = vadd.f32 %v3466, %v3783
    %v3785 = vpop.f32.mrb[0].mxu0
    %v3786 = vadd.f32 %v3470, %v3785
    %v3787 = vpop.f32.mrb[0].mxu0
    %v3788 = vadd.f32 %v3466, %v3787
    %v3789 = vpop.f32.mrb[0].mxu0
    %v3790 = vadd.f32 %v3470, %v3789
    %3791 = vdwg.mxu0
    %3792 = vmatprep.subr.bf16.mxu0 0
    %3793 = vmatpush1.bf16.msra.mxu0 %v3560
    %3794 = vmatprep.subr.bf16.mxu0 0
    %3795 = vmatpush1.bf16.msra.mxu0 %v3563
    %3796 = vmatprep.subr.bf16.mxu0 0
    %3797 = vmatpush1.bf16.msra.mxu0 %v3566
    %3798 = vmatprep.subr.bf16.mxu0 0
    %3799 = vmatpush1.bf16.msra.mxu0 %v3569
    %3800 = vmatprep.subr.bf16.mxu0 0
    %3801 = vmatpush1.bf16.msra.mxu0 %v3572
    %3802 = vmatprep.subr.bf16.mxu0 0
    %3803 = vmatpush1.bf16.msra.mxu0 %v3575
    %3804 = vmatprep.subr.bf16.mxu0 0
    %3805 = vmatpush1.bf16.msra.mxu0 %v3578
    %3806 = vmatprep.subr.bf16.mxu0 0
    %3807 = vmatpush1.bf16.msra.mxu0 %v3581
    %3808 = vmatprep.subr.bf16.mxu0 0
    %3809 = vmatpush1.bf16.msra.mxu0 0
    %3810 = vmatprep.subr.bf16.mxu0 0
    %3811 = vmatpush1.bf16.msra.mxu0 0
    %3812 = vmatprep.subr.bf16.mxu0 0
    %3813 = vmatpush1.bf16.msra.mxu0 0
    %3814 = vmatprep.subr.bf16.mxu0 0
    %3815 = vmatpush1.bf16.msra.mxu0 0
    %3816 = vmatprep.subr.bf16.mxu0 0
    %3817 = vmatpush1.bf16.msra.mxu0 0
    %3818 = vmatprep.subr.bf16.mxu0 0
    %3819 = vmatpush1.bf16.msra.mxu0 0
    %3820 = vmatprep.subr.bf16.mxu0 0
    %3821 = vmatpush1.bf16.msra.mxu0 0
    %3822 = vmatprep.subr.bf16.mxu0 0
    %3823 = vmatpush1.bf16.msra.mxu0 0
    %3824 = vmatprep.mubr.bf16.mxu0 0
    %3825 = vmatmul.mubr.bf16.gmra.mrb[0].mxu0 %v3732
    %v3826 = vpop.f32.mrb[0].mxu0
    %v3827 = vadd.f32 %v3474, %v3826
    %v3828 = vpop.f32.mrb[0].mxu0
    %v3829 = vpop.f32.mrb[0].mxu0
    %v3830 = vadd.f32 %v3474, %v3829
    %v3831 = vpop.f32.mrb[0].mxu0
    %3832 = vdwg.mxu0
    %v3833 = vadd.f32 %v3743, %v3784
    %v3834 = vadd.f32 %v3746, %v3788
    %v3835 = vxor.u32 %v3833, 2147483648
    %v3836 = vxor.u32 %v3834, 2147483648
    %v3837 = vmul.f32 %v3835, 1.442695
    %v3838 = vpow.pop %v3837
    %v3839 = vmul.f32 %v3836, 1.442695
    %v3840 = vpow.pop %v3839
    %v3841 = vadd.f32 %v3838, 1.0
    %v3842 = vadd.f32 %v3840, 1.0
    %v3843 = vrcp.pop %v3841
    %v3844 = vmul.f32 1.0, %v3843
    %v3845 = vrcp.pop %v3842
    %v3846 = vmul.f32 1.0, %v3845
    %v3847 = vadd.f32 %v3744, %v3786
    %v3848 = vadd.f32 %v3747, %v3790
    %v3849 = vxor.u32 %v3847, 2147483648
    %v3850 = vxor.u32 %v3848, 2147483648
    %v3851 = vmul.f32 %v3849, 1.442695
    %v3852 = vpow.pop %v3851
    %v3853 = vmul.f32 %v3850, 1.442695
    %v3854 = vpow.pop %v3853
    %v3855 = vadd.f32 %v3852, 1.0
    %v3856 = vadd.f32 %v3854, 1.0
    %v3857 = vrcp.pop %v3855
    %v3858 = vmul.f32 1.0, %v3857
    %v3859 = vrcp.pop %v3856
    %v3860 = vmul.f32 1.0, %v3859
    %v3861 = vmul.f32 %v3844, %v3827
    %v3862 = vmul.f32 %v3846, %v3830
    %v3863 = vadd.f32 %v3745, %v3861
    %v3864 = vadd.f32 %v3748, %v3862
    %v3865 = vtanh.pop %v3863
    %v3866 = vtanh.pop %v3864
    %v3867 = vsub.f32 1.0, %v3858
    %v3868 = vsub.f32 1.0, %v3860
    %v3869 = vmul.f32 %v3867, %v3865
    %v3870 = vmul.f32 %v3868, %v3866
    %v3871 = vmul.f32 %v3858, %v3730
    %v3872 = vmul.f32 %v3860, %v3731
    %v3873 = vadd.f32 %v3869, %v3871
    %v3874 = vadd.f32 %v3870, %v3872
    %v3875 = vpack.c.bf16 %v3874, %v3873
    %v3877 = vunpack.c.l.b16 %v3875
    %v3878 = vunpack.c.h.b16 %v3875
    %v3879 = vpack.c.b16 %v3877, %v3877
    %v3880 = vpack.c.b16 %v3878, %v3878
    %s3883 = scalar_lea.vmem [#allocation19], 8
    %3884 = vst [vmem:[%s3883] sm:$0xf] %v3879
    %3885 = vst [vmem:[%s3883 + $0x4] sm:$0xf] %v3880
    %s3886 = scalar_lea.vmem [#allocation2], 96
    %v3887 = vld [vmem:[%s3886] sm:$0xff]
    %v3888 = vld [vmem:[%s3886 + $0x8] sm:$0xff]
    %v3889 = vld [vmem:[%s3886 + $0x10] sm:$0xff]
    %v3890 = vld [vmem:[%s3886 + $0x18] sm:$0xff]
    %v3891 = vld [vmem:[%s3886 + $0x20] sm:$0xff]
    %v3892 = vld [vmem:[%s3886 + $0x28] sm:$0xff]
    %3893 = vmatprep.subr.bf16.mxu0 %v3559
    %3894 = vmatpush1.bf16.msra.mxu0 %v3558
    %3895 = vmatprep.subr.bf16.mxu0 %v3562
    %3896 = vmatpush1.bf16.msra.mxu0 %v3561
    %3897 = vmatprep.subr.bf16.mxu0 %v3565
    %3898 = vmatpush1.bf16.msra.mxu0 %v3564
    %3899 = vmatprep.subr.bf16.mxu0 %v3568
    %3900 = vmatpush1.bf16.msra.mxu0 %v3567
    %3901 = vmatprep.subr.bf16.mxu0 %v3571
    %3902 = vmatpush1.bf16.msra.mxu0 %v3570
    %3903 = vmatprep.subr.bf16.mxu0 %v3574
    %3904 = vmatpush1.bf16.msra.mxu0 %v3573
    %3905 = vmatprep.subr.bf16.mxu0 %v3577
    %3906 = vmatpush1.bf16.msra.mxu0 %v3576
    %3907 = vmatprep.subr.bf16.mxu0 %v3580
    %3908 = vmatpush1.bf16.msra.mxu0 %v3579
    %3909 = vmatprep.subr.bf16.mxu0 0
    %3910 = vmatpush1.bf16.msra.mxu0 0
    %3911 = vmatprep.subr.bf16.mxu0 0
    %3912 = vmatpush1.bf16.msra.mxu0 0
    %3913 = vmatprep.subr.bf16.mxu0 0
    %3914 = vmatpush1.bf16.msra.mxu0 0
    %3915 = vmatprep.subr.bf16.mxu0 0
    %3916 = vmatpush1.bf16.msra.mxu0 0
    %3917 = vmatprep.subr.bf16.mxu0 0
    %3918 = vmatpush1.bf16.msra.mxu0 0
    %3919 = vmatprep.subr.bf16.mxu0 0
    %3920 = vmatpush1.bf16.msra.mxu0 0
    %3921 = vmatprep.subr.bf16.mxu0 0
    %3922 = vmatpush1.bf16.msra.mxu0 0
    %3923 = vmatprep.subr.bf16.mxu0 0
    %3924 = vmatpush1.bf16.msra.mxu0 0
    %3925 = vmatprep.mubr.bf16.mxu0 0
    %3926 = vmatmul.mubr.bf16.gmra.mrb[0].mxu0 %v3875
    %v3927 = vpop.f32.mrb[0].mxu0
    %v3928 = vadd.f32 %v3466, %v3927
    %v3929 = vpop.f32.mrb[0].mxu0
    %v3930 = vadd.f32 %v3470, %v3929
    %v3931 = vpop.f32.mrb[0].mxu0
    %v3932 = vadd.f32 %v3466, %v3931
    %v3933 = vpop.f32.mrb[0].mxu0
    %v3934 = vadd.f32 %v3470, %v3933
    %3935 = vdwg.mxu0
    %3936 = vmatprep.subr.bf16.mxu0 0
    %3937 = vmatpush1.bf16.msra.mxu0 %v3560
    %3938 = vmatprep.subr.bf16.mxu0 0
    %3939 = vmatpush1.bf16.msra.mxu0 %v3563
    %3940 = vmatprep.subr.bf16.mxu0 0
    %3941 = vmatpush1.bf16.msra.mxu0 %v3566
    %3942 = vmatprep.subr.bf16.mxu0 0
    %3943 = vmatpush1.bf16.msra.mxu0 %v3569
    %3944 = vmatprep.subr.bf16.mxu0 0
    %3945 = vmatpush1.bf16.msra.mxu0 %v3572
    %3946 = vmatprep.subr.bf16.mxu0 0
    %3947 = vmatpush1.bf16.msra.mxu0 %v3575
    %3948 = vmatprep.subr.bf16.mxu0 0
    %3949 = vmatpush1.bf16.msra.mxu0 %v3578
    %3950 = vmatprep.subr.bf16.mxu0 0
    %3951 = vmatpush1.bf16.msra.mxu0 %v3581
    %3952 = vmatprep.subr.bf16.mxu0 0
    %3953 = vmatpush1.bf16.msra.mxu0 0
    %3954 = vmatprep.subr.bf16.mxu0 0
    %3955 = vmatpush1.bf16.msra.mxu0 0
    %3956 = vmatprep.subr.bf16.mxu0 0
    %3957 = vmatpush1.bf16.msra.mxu0 0
    %3958 = vmatprep.subr.bf16.mxu0 0
    %3959 = vmatpush1.bf16.msra.mxu0 0
    %3960 = vmatprep.subr.bf16.mxu0 0
    %3961 = vmatpush1.bf16.msra.mxu0 0
    %3962 = vmatprep.subr.bf16.mxu0 0
    %3963 = vmatpush1.bf16.msra.mxu0 0
    %3964 = vmatprep.subr.bf16.mxu0 0
    %3965 = vmatpush1.bf16.msra.mxu0 0
    %3966 = vmatprep.subr.bf16.mxu0 0
    %3967 = vmatpush1.bf16.msra.mxu0 0
    %3968 = vmatprep.mubr.bf16.mxu0 0
    %3969 = vmatmul.mubr.bf16.gmra.mrb[0].mxu0 %v3875
    %v3970 = vpop.f32.mrb[0].mxu0
    %v3971 = vadd.f32 %v3474, %v3970
    %v3972 = vpop.f32.mrb[0].mxu0
    %v3973 = vpop.f32.mrb[0].mxu0
    %v3974 = vadd.f32 %v3474, %v3973
    %v3975 = vpop.f32.mrb[0].mxu0
    %3976 = vdwg.mxu0
    %v3977 = vadd.f32 %v3887, %v3928
    %v3978 = vadd.f32 %v3890, %v3932
    %v3979 = vxor.u32 %v3977, 2147483648
    %v3980 = vxor.u32 %v3978, 2147483648
    %v3981 = vmul.f32 %v3979, 1.442695
    %v3982 = vpow.pop %v3981
    %v3983 = vmul.f32 %v3980, 1.442695
    %v3984 = vpow.pop %v3983
    %v3985 = vadd.f32 %v3982, 1.0
    %v3986 = vadd.f32 %v3984, 1.0
    %v3987 = vrcp.pop %v3985
    %v3988 = vmul.f32 1.0, %v3987
    %v3989 = vrcp.pop %v3986
    %v3990 = vmul.f32 1.0, %v3989
    %v3991 = vadd.f32 %v3888, %v3930
    %v3992 = vadd.f32 %v3891, %v3934
    %v3993 = vxor.u32 %v3991, 2147483648
    %v3994 = vxor.u32 %v3992, 2147483648
    %v3995 = vmul.f32 %v3993, 1.442695
    %v3996 = vpow.pop %v3995
    %v3997 = vmul.f32 %v3994, 1.442695
    %v3998 = vpow.pop %v3997
    %v3999 = vadd.f32 %v3996, 1.0
    %v4000 = vadd.f32 %v3998, 1.0
    %v4001 = vrcp.pop %v3999
    %v4002 = vmul.f32 1.0, %v4001
    %v4003 = vrcp.pop %v4000
    %v4004 = vmul.f32 1.0, %v4003
    %v4005 = vmul.f32 %v3988, %v3971
    %v4006 = vmul.f32 %v3990, %v3974
    %v4007 = vadd.f32 %v3889, %v4005
    %v4008 = vadd.f32 %v3892, %v4006
    %v4009 = vtanh.pop %v4007
    %v4010 = vtanh.pop %v4008
    %v4011 = vsub.f32 1.0, %v4002
    %v4012 = vsub.f32 1.0, %v4004
    %v4013 = vmul.f32 %v4011, %v4009
    %v4014 = vmul.f32 %v4012, %v4010
    %v4015 = vmul.f32 %v4002, %v3873
    %v4016 = vmul.f32 %v4004, %v3874
    %v4017 = vadd.f32 %v4013, %v4015
    %v4018 = vadd.f32 %v4014, %v4016
    %v4019 = vpack.c.bf16 %v4018, %v4017
    %v4021 = vunpack.c.l.b16 %v4019
    %v4022 = vunpack.c.h.b16 %v4019
    %v4023 = vpack.c.b16 %v4021, %v4021
    %v4024 = vpack.c.b16 %v4022, %v4022
    %s4027 = scalar_lea.vmem [#allocation19], 16
    %4028 = vst [vmem:[%s4027] sm:$0xf] %v4023
    %4029 = vst [vmem:[%s4027 + $0x4] sm:$0xf] %v4024
    %s4030 = scalar_lea.vmem [#allocation2], 144
    %v4031 = vld [vmem:[%s4030] sm:$0xff]
    %v4032 = vld [vmem:[%s4030 + $0x8] sm:$0xff]
    %v4033 = vld [vmem:[%s4030 + $0x10] sm:$0xff]
    %v4034 = vld [vmem:[%s4030 + $0x18] sm:$0xff]
    %v4035 = vld [vmem:[%s4030 + $0x20] sm:$0xff]
    %v4036 = vld [vmem:[%s4030 + $0x28] sm:$0xff]
    %4037 = vmatprep.subr.bf16.mxu0 %v3559
    %4038 = vmatpush1.bf16.msra.mxu0 %v3558
    %4039 = vmatprep.subr.bf16.mxu0 %v3562
    %4040 = vmatpush1.bf16.msra.mxu0 %v3561
    %4041 = vmatprep.subr.bf16.mxu0 %v3565
    %4042 = vmatpush1.bf16.msra.mxu0 %v3564
    %4043 = vmatprep.subr.bf16.mxu0 %v3568
    %4044 = vmatpush1.bf16.msra.mxu0 %v3567
    %4045 = vmatprep.subr.bf16.mxu0 %v3571
    %4046 = vmatpush1.bf16.msra.mxu0 %v3570
    %4047 = vmatprep.subr.bf16.mxu0 %v3574
    %4048 = vmatpush1.bf16.msra.mxu0 %v3573
    %4049 = vmatprep.subr.bf16.mxu0 %v3577
    %4050 = vmatpush1.bf16.msra.mxu0 %v3576
    %4051 = vmatprep.subr.bf16.mxu0 %v3580
    %4052 = vmatpush1.bf16.msra.mxu0 %v3579
    %4053 = vmatprep.subr.bf16.mxu0 0
    %4054 = vmatpush1.bf16.msra.mxu0 0
    %4055 = vmatprep.subr.bf16.mxu0 0
    %4056 = vmatpush1.bf16.msra.mxu0 0
    %4057 = vmatprep.subr.bf16.mxu0 0
    %4058 = vmatpush1.bf16.msra.mxu0 0
    %4059 = vmatprep.subr.bf16.mxu0 0
    %4060 = vmatpush1.bf16.msra.mxu0 0
    %4061 = vmatprep.subr.bf16.mxu0 0
    %4062 = vmatpush1.bf16.msra.mxu0 0
    %4063 = vmatprep.subr.bf16.mxu0 0
    %4064 = vmatpush1.bf16.msra.mxu0 0
    %4065 = vmatprep.subr.bf16.mxu0 0
    %4066 = vmatpush1.bf16.msra.mxu0 0
    %4067 = vmatprep.subr.bf16.mxu0 0
    %4068 = vmatpush1.bf16.msra.mxu0 0
    %4069 = vmatprep.mubr.bf16.mxu0 0
    %4070 = vmatmul.mubr.bf16.gmra.mrb[0].mxu0 %v4019
    %v4071 = vpop.f32.mrb[0].mxu0
    %v4072 = vadd.f32 %v3466, %v4071
    %v4073 = vpop.f32.mrb[0].mxu0
    %v4074 = vadd.f32 %v3470, %v4073
    %v4075 = vpop.f32.mrb[0].mxu0
    %v4076 = vadd.f32 %v3466, %v4075
    %v4077 = vpop.f32.mrb[0].mxu0
    %v4078 = vadd.f32 %v3470, %v4077
    %4079 = vdwg.mxu0
    %4080 = vmatprep.subr.bf16.mxu0 0
    %4081 = vmatpush1.bf16.msra.mxu0 %v3560
    %4082 = vmatprep.subr.bf16.mxu0 0
    %4083 = vmatpush1.bf16.msra.mxu0 %v3563
    %4084 = vmatprep.subr.bf16.mxu0 0
    %4085 = vmatpush1.bf16.msra.mxu0 %v3566
    %4086 = vmatprep.subr.bf16.mxu0 0
    %4087 = vmatpush1.bf16.msra.mxu0 %v3569
    %4088 = vmatprep.subr.bf16.mxu0 0
    %4089 = vmatpush1.bf16.msra.mxu0 %v3572
    %4090 = vmatprep.subr.bf16.mxu0 0
    %4091 = vmatpush1.bf16.msra.mxu0 %v3575
    %4092 = vmatprep.subr.bf16.mxu0 0
    %4093 = vmatpush1.bf16.msra.mxu0 %v3578
    %4094 = vmatprep.subr.bf16.mxu0 0
    %4095 = vmatpush1.bf16.msra.mxu0 %v3581
    %4096 = vmatprep.subr.bf16.mxu0 0
    %4097 = vmatpush1.bf16.msra.mxu0 0
    %4098 = vmatprep.subr.bf16.mxu0 0
    %4099 = vmatpush1.bf16.msra.mxu0 0
    %4100 = vmatprep.subr.bf16.mxu0 0
    %4101 = vmatpush1.bf16.msra.mxu0 0
    %4102 = vmatprep.subr.bf16.mxu0 0
    %4103 = vmatpush1.bf16.msra.mxu0 0
    %4104 = vmatprep.subr.bf16.mxu0 0
    %4105 = vmatpush1.bf16.msra.mxu0 0
    %4106 = vmatprep.subr.bf16.mxu0 0
    %4107 = vmatpush1.bf16.msra.mxu0 0
    %4108 = vmatprep.subr.bf16.mxu0 0
    %4109 = vmatpush1.bf16.msra.mxu0 0
    %4110 = vmatprep.subr.bf16.mxu0 0
    %4111 = vmatpush1.bf16.msra.mxu0 0
    %4112 = vmatprep.mubr.bf16.mxu0 0
    %4113 = vmatmul.mubr.bf16.gmra.mrb[0].mxu0 %v4019
    %v4114 = vpop.f32.mrb[0].mxu0
    %v4115 = vadd.f32 %v3474, %v4114
    %v4116 = vpop.f32.mrb[0].mxu0
    %v4117 = vpop.f32.mrb[0].mxu0
    %v4118 = vadd.f32 %v3474, %v4117
    %v4119 = vpop.f32.mrb[0].mxu0
    %4120 = vdwg.mxu0
    %v4121 = vadd.f32 %v4031, %v4072
    %v4122 = vadd.f32 %v4034, %v4076
    %v4123 = vxor.u32 %v4121, 2147483648
    %v4124 = vxor.u32 %v4122, 2147483648
    %v4125 = vmul.f32 %v4123, 1.442695
    %v4126 = vpow.pop %v4125
    %v4127 = vmul.f32 %v4124, 1.442695
    %v4128 = vpow.pop %v4127
    %v4129 = vadd.f32 %v4126, 1.0
    %v4130 = vadd.f32 %v4128, 1.0
    %v4131 = vrcp.pop %v4129
    %v4132 = vmul.f32 1.0, %v4131
    %v4133 = vrcp.pop %v4130
    %v4134 = vmul.f32 1.0, %v4133
    %v4135 = vadd.f32 %v4032, %v4074
    %v4136 = vadd.f32 %v4035, %v4078
    %v4137 = vxor.u32 %v4135, 2147483648
    %v4138 = vxor.u32 %v4136, 2147483648
    %v4139 = vmul.f32 %v4137, 1.442695
    %v4140 = vpow.pop %v4139
    %v4141 = vmul.f32 %v4138, 1.442695
    %v4142 = vpow.pop %v4141
    %v4143 = vadd.f32 %v4140, 1.0
    %v4144 = vadd.f32 %v4142, 1.0
    %v4145 = vrcp.pop %v4143
    %v4146 = vmul.f32 1.0, %v4145
    %v4147 = vrcp.pop %v4144
    %v4148 = vmul.f32 1.0, %v4147
    %v4149 = vmul.f32 %v4132, %v4115
    %v4150 = vmul.f32 %v4134, %v4118
    %v4151 = vadd.f32 %v4033, %v4149
    %v4152 = vadd.f32 %v4036, %v4150
    %v4153 = vtanh.pop %v4151
    %v4154 = vtanh.pop %v4152
    %v4155 = vsub.f32 1.0, %v4146
    %v4156 = vsub.f32 1.0, %v4148
    %v4157 = vmul.f32 %v4155, %v4153
    %v4158 = vmul.f32 %v4156, %v4154
    %v4159 = vmul.f32 %v4146, %v4017
    %v4160 = vmul.f32 %v4148, %v4018
    %v4161 = vadd.f32 %v4157, %v4159
    %v4162 = vadd.f32 %v4158, %v4160
    %v4163 = vpack.c.bf16 %v4162, %v4161
    %v4165 = vunpack.c.l.b16 %v4163
    %v4166 = vunpack.c.h.b16 %v4163
    %v4167 = vpack.c.b16 %v4165, %v4165
    %v4168 = vpack.c.b16 %v4166, %v4166
    %s4171 = scalar_lea.vmem [#allocation19], 24
    %4172 = vst [vmem:[%s4171] sm:$0xf] %v4167
    %4173 = vst [vmem:[%s4171 + $0x4] sm:$0xf] %v4168
    %s4174 = scalar_lea.vmem [#allocation2], 192
    %v4175 = vld [vmem:[%s4174] sm:$0xff]
    %v4176 = vld [vmem:[%s4174 + $0x8] sm:$0xff]
    %v4177 = vld [vmem:[%s4174 + $0x10] sm:$0xff]
    %v4178 = vld [vmem:[%s4174 + $0x18] sm:$0xff]
    %v4179 = vld [vmem:[%s4174 + $0x20] sm:$0xff]
    %v4180 = vld [vmem:[%s4174 + $0x28] sm:$0xff]
    %4181 = vmatprep.subr.bf16.mxu0 %v3559
    %4182 = vmatpush1.bf16.msra.mxu0 %v3558
    %4183 = vmatprep.subr.bf16.mxu0 %v3562
    %4184 = vmatpush1.bf16.msra.mxu0 %v3561
    %4185 = vmatprep.subr.bf16.mxu0 %v3565
    %4186 = vmatpush1.bf16.msra.mxu0 %v3564
    %4187 = vmatprep.subr.bf16.mxu0 %v3568
    %4188 = vmatpush1.bf16.msra.mxu0 %v3567
    %4189 = vmatprep.subr.bf16.mxu0 %v3571
    %4190 = vmatpush1.bf16.msra.mxu0 %v3570
    %4191 = vmatprep.subr.bf16.mxu0 %v3574
    %4192 = vmatpush1.bf16.msra.mxu0 %v3573
    %4193 = vmatprep.subr.bf16.mxu0 %v3577
    %4194 = vmatpush1.bf16.msra.mxu0 %v3576
    %4195 = vmatprep.subr.bf16.mxu0 %v3580
    %4196 = vmatpush1.bf16.msra.mxu0 %v3579
    %4197 = vmatprep.subr.bf16.mxu0 0
    %4198 = vmatpush1.bf16.msra.mxu0 0
    %4199 = vmatprep.subr.bf16.mxu0 0
    %4200 = vmatpush1.bf16.msra.mxu0 0
    %4201 = vmatprep.subr.bf16.mxu0 0
    %4202 = vmatpush1.bf16.msra.mxu0 0
    %4203 = vmatprep.subr.bf16.mxu0 0
    %4204 = vmatpush1.bf16.msra.mxu0 0
    %4205 = vmatprep.subr.bf16.mxu0 0
    %4206 = vmatpush1.bf16.msra.mxu0 0
    %4207 = vmatprep.subr.bf16.mxu0 0
    %4208 = vmatpush1.bf16.msra.mxu0 0
    %4209 = vmatprep.subr.bf16.mxu0 0
    %4210 = vmatpush1.bf16.msra.mxu0 0
    %4211 = vmatprep.subr.bf16.mxu0 0
    %4212 = vmatpush1.bf16.msra.mxu0 0
    %4213 = vmatprep.mubr.bf16.mxu0 0
    %4214 = vmatmul.mubr.bf16.gmra.mrb[0].mxu0 %v4163
    %v4215 = vpop.f32.mrb[0].mxu0
    %v4216 = vadd.f32 %v3466, %v4215
    %v4217 = vpop.f32.mrb[0].mxu0
    %v4218 = vadd.f32 %v3470, %v4217
    %v4219 = vpop.f32.mrb[0].mxu0
    %v4220 = vadd.f32 %v3466, %v4219
    %v4221 = vpop.f32.mrb[0].mxu0
    %v4222 = vadd.f32 %v3470, %v4221
    %4223 = vdwg.mxu0
    %4224 = vmatprep.subr.bf16.mxu0 0
    %4225 = vmatpush1.bf16.msra.mxu0 %v3560
    %4226 = vmatprep.subr.bf16.mxu0 0
    %4227 = vmatpush1.bf16.msra.mxu0 %v3563
    %4228 = vmatprep.subr.bf16.mxu0 0
    %4229 = vmatpush1.bf16.msra.mxu0 %v3566
    %4230 = vmatprep.subr.bf16.mxu0 0
    %4231 = vmatpush1.bf16.msra.mxu0 %v3569
    %4232 = vmatprep.subr.bf16.mxu0 0
    %4233 = vmatpush1.bf16.msra.mxu0 %v3572
    %4234 = vmatprep.subr.bf16.mxu0 0
    %4235 = vmatpush1.bf16.msra.mxu0 %v3575
    %4236 = vmatprep.subr.bf16.mxu0 0
    %4237 = vmatpush1.bf16.msra.mxu0 %v3578
    %4238 = vmatprep.subr.bf16.mxu0 0
    %4239 = vmatpush1.bf16.msra.mxu0 %v3581
    %4240 = vmatprep.subr.bf16.mxu0 0
    %4241 = vmatpush1.bf16.msra.mxu0 0
    %4242 = vmatprep.subr.bf16.mxu0 0
    %4243 = vmatpush1.bf16.msra.mxu0 0
    %4244 = vmatprep.subr.bf16.mxu0 0
    %4245 = vmatpush1.bf16.msra.mxu0 0
    %4246 = vmatprep.subr.bf16.mxu0 0
    %4247 = vmatpush1.bf16.msra.mxu0 0
    %4248 = vmatprep.subr.bf16.mxu0 0
    %4249 = vmatpush1.bf16.msra.mxu0 0
    %4250 = vmatprep.subr.bf16.mxu0 0
    %4251 = vmatpush1.bf16.msra.mxu0 0
    %4252 = vmatprep.subr.bf16.mxu0 0
    %4253 = vmatpush1.bf16.msra.mxu0 0
    %4254 = vmatprep.subr.bf16.mxu0 0
    %4255 = vmatpush1.bf16.msra.mxu0 0
    %4256 = vmatprep.mubr.bf16.mxu0 0
    %4257 = vmatmul.mubr.bf16.gmra.mrb[0].mxu0 %v4163
    %v4258 = vpop.f32.mrb[0].mxu0
    %v4259 = vadd.f32 %v3474, %v4258
    %v4260 = vpop.f32.mrb[0].mxu0
    %v4261 = vpop.f32.mrb[0].mxu0
    %v4262 = vadd.f32 %v3474, %v4261
    %v4263 = vpop.f32.mrb[0].mxu0
    %4264 = vdwg.mxu0
    %v4265 = vadd.f32 %v4175, %v4216
    %v4266 = vadd.f32 %v4178, %v4220
    %v4267 = vxor.u32 %v4265, 2147483648
    %v4268 = vxor.u32 %v4266, 2147483648
    %v4269 = vmul.f32 %v4267, 1.442695
    %v4270 = vpow.pop %v4269
    %v4271 = vmul.f32 %v4268, 1.442695
    %v4272 = vpow.pop %v4271
    %v4273 = vadd.f32 %v4270, 1.0
    %v4274 = vadd.f32 %v4272, 1.0
    %v4275 = vrcp.pop %v4273
    %v4276 = vmul.f32 1.0, %v4275
    %v4277 = vrcp.pop %v4274
    %v4278 = vmul.f32 1.0, %v4277
    %v4279 = vadd.f32 %v4176, %v4218
    %v4280 = vadd.f32 %v4179, %v4222
    %v4281 = vxor.u32 %v4279, 2147483648
    %v4282 = vxor.u32 %v4280, 2147483648
    %v4283 = vmul.f32 %v4281, 1.442695
    %v4284 = vpow.pop %v4283
    %v4285 = vmul.f32 %v4282, 1.442695
    %v4286 = vpow.pop %v4285
    %v4287 = vadd.f32 %v4284, 1.0
    %v4288 = vadd.f32 %v4286, 1.0
    %v4289 = vrcp.pop %v4287
    %v4290 = vmul.f32 1.0, %v4289
    %v4291 = vrcp.pop %v4288
    %v4292 = vmul.f32 1.0, %v4291
    %v4293 = vmul.f32 %v4276, %v4259
    %v4294 = vmul.f32 %v4278, %v4262
    %v4295 = vadd.f32 %v4177, %v4293
    %v4296 = vadd.f32 %v4180, %v4294
    %v4297 = vtanh.pop %v4295
    %v4298 = vtanh.pop %v4296
    %v4299 = vsub.f32 1.0, %v4290
    %v4300 = vsub.f32 1.0, %v4292
    %v4301 = vmul.f32 %v4299, %v4297
    %v4302 = vmul.f32 %v4300, %v4298
    %v4303 = vmul.f32 %v4290, %v4161
    %v4304 = vmul.f32 %v4292, %v4162
    %v4305 = vadd.f32 %v4301, %v4303
    %v4306 = vadd.f32 %v4302, %v4304
    %v4307 = vpack.c.bf16 %v4306, %v4305
    %v4309 = vunpack.c.l.b16 %v4307
    %v4310 = vunpack.c.h.b16 %v4307
    %v4311 = vpack.c.b16 %v4309, %v4309
    %v4312 = vpack.c.b16 %v4310, %v4310
    %s4315 = scalar_lea.vmem [#allocation19], 32
    %4316 = vst [vmem:[%s4315] sm:$0xf] %v4311
    %4317 = vst [vmem:[%s4315 + $0x4] sm:$0xf] %v4312
    %s4318 = scalar_lea.vmem [#allocation2], 240
    %v4319 = vld [vmem:[%s4318] sm:$0xff]
    %v4320 = vld [vmem:[%s4318 + $0x8] sm:$0xff]
    %v4321 = vld [vmem:[%s4318 + $0x10] sm:$0xff]
    %v4322 = vld [vmem:[%s4318 + $0x18] sm:$0xff]
    %v4323 = vld [vmem:[%s4318 + $0x20] sm:$0xff]
    %v4324 = vld [vmem:[%s4318 + $0x28] sm:$0xff]
    %4325 = vmatprep.subr.bf16.mxu0 %v3559
    %4326 = vmatpush1.bf16.msra.mxu0 %v3558
    %4327 = vmatprep.subr.bf16.mxu0 %v3562
    %4328 = vmatpush1.bf16.msra.mxu0 %v3561
    %4329 = vmatprep.subr.bf16.mxu0 %v3565
    %4330 = vmatpush1.bf16.msra.mxu0 %v3564
    %4331 = vmatprep.subr.bf16.mxu0 %v3568
    %4332 = vmatpush1.bf16.msra.mxu0 %v3567
    %4333 = vmatprep.subr.bf16.mxu0 %v3571
    %4334 = vmatpush1.bf16.msra.mxu0 %v3570
    %4335 = vmatprep.subr.bf16.mxu0 %v3574
    %4336 = vmatpush1.bf16.msra.mxu0 %v3573
    %4337 = vmatprep.subr.bf16.mxu0 %v3577
    %4338 = vmatpush1.bf16.msra.mxu0 %v3576
    %4339 = vmatprep.subr.bf16.mxu0 %v3580
    %4340 = vmatpush1.bf16.msra.mxu0 %v3579
    %4341 = vmatprep.subr.bf16.mxu0 0
    %4342 = vmatpush1.bf16.msra.mxu0 0
    %4343 = vmatprep.subr.bf16.mxu0 0
    %4344 = vmatpush1.bf16.msra.mxu0 0
    %4345 = vmatprep.subr.bf16.mxu0 0
    %4346 = vmatpush1.bf16.msra.mxu0 0
    %4347 = vmatprep.subr.bf16.mxu0 0
    %4348 = vmatpush1.bf16.msra.mxu0 0
    %4349 = vmatprep.subr.bf16.mxu0 0
    %4350 = vmatpush1.bf16.msra.mxu0 0
    %4351 = vmatprep.subr.bf16.mxu0 0
    %4352 = vmatpush1.bf16.msra.mxu0 0
    %4353 = vmatprep.subr.bf16.mxu0 0
    %4354 = vmatpush1.bf16.msra.mxu0 0
    %4355 = vmatprep.subr.bf16.mxu0 0
    %4356 = vmatpush1.bf16.msra.mxu0 0
    %4357 = vmatprep.mubr.bf16.mxu0 0
    %4358 = vmatmul.mubr.bf16.gmra.mrb[0].mxu0 %v4307
    %v4359 = vpop.f32.mrb[0].mxu0
    %v4360 = vadd.f32 %v3466, %v4359
    %v4361 = vpop.f32.mrb[0].mxu0
    %v4362 = vadd.f32 %v3470, %v4361
    %v4363 = vpop.f32.mrb[0].mxu0
    %v4364 = vadd.f32 %v3466, %v4363
    %v4365 = vpop.f32.mrb[0].mxu0
    %v4366 = vadd.f32 %v3470, %v4365
    %4367 = vdwg.mxu0
    %4368 = vmatprep.subr.bf16.mxu0 0
    %4369 = vmatpush1.bf16.msra.mxu0 %v3560
    %4370 = vmatprep.subr.bf16.mxu0 0
    %4371 = vmatpush1.bf16.msra.mxu0 %v3563
    %4372 = vmatprep.subr.bf16.mxu0 0
    %4373 = vmatpush1.bf16.msra.mxu0 %v3566
    %4374 = vmatprep.subr.bf16.mxu0 0
    %4375 = vmatpush1.bf16.msra.mxu0 %v3569
    %4376 = vmatprep.subr.bf16.mxu0 0
    %4377 = vmatpush1.bf16.msra.mxu0 %v3572
    %4378 = vmatprep.subr.bf16.mxu0 0
    %4379 = vmatpush1.bf16.msra.mxu0 %v3575
    %4380 = vmatprep.subr.bf16.mxu0 0
    %4381 = vmatpush1.bf16.msra.mxu0 %v3578
    %4382 = vmatprep.subr.bf16.mxu0 0
    %4383 = vmatpush1.bf16.msra.mxu0 %v3581
    %4384 = vmatprep.subr.bf16.mxu0 0
    %4385 = vmatpush1.bf16.msra.mxu0 0
    %4386 = vmatprep.subr.bf16.mxu0 0
    %4387 = vmatpush1.bf16.msra.mxu0 0
    %4388 = vmatprep.subr.bf16.mxu0 0
    %4389 = vmatpush1.bf16.msra.mxu0 0
    %4390 = vmatprep.subr.bf16.mxu0 0
    %4391 = vmatpush1.bf16.msra.mxu0 0
    %4392 = vmatprep.subr.bf16.mxu0 0
    %4393 = vmatpush1.bf16.msra.mxu0 0
    %4394 = vmatprep.subr.bf16.mxu0 0
    %4395 = vmatpush1.bf16.msra.mxu0 0
    %4396 = vmatprep.subr.bf16.mxu0 0
    %4397 = vmatpush1.bf16.msra.mxu0 0
    %4398 = vmatprep.subr.bf16.mxu0 0
    %4399 = vmatpush1.bf16.msra.mxu0 0
    %4400 = vmatprep.mubr.bf16.mxu0 0
    %4401 = vmatmul.mubr.bf16.gmra.mrb[0].mxu0 %v4307
    %v4402 = vpop.f32.mrb[0].mxu0
    %v4403 = vadd.f32 %v3474, %v4402
    %v4404 = vpop.f32.mrb[0].mxu0
    %v4405 = vpop.f32.mrb[0].mxu0
    %v4406 = vadd.f32 %v3474, %v4405
    %v4407 = vpop.f32.mrb[0].mxu0
    %4408 = vdwg.mxu0
    %v4409 = vadd.f32 %v4319, %v4360
    %v4410 = vadd.f32 %v4322, %v4364
    %v4411 = vxor.u32 %v4409, 2147483648
    %v4412 = vxor.u32 %v4410, 2147483648
    %v4413 = vmul.f32 %v4411, 1.442695
    %v4414 = vpow.pop %v4413
    %v4415 = vmul.f32 %v4412, 1.442695
    %v4416 = vpow.pop %v4415
    %v4417 = vadd.f32 %v4414, 1.0
    %v4418 = vadd.f32 %v4416, 1.0
    %v4419 = vrcp.pop %v4417
    %v4420 = vmul.f32 1.0, %v4419
    %v4421 = vrcp.pop %v4418
    %v4422 = vmul.f32 1.0, %v4421
    %v4423 = vadd.f32 %v4320, %v4362
    %v4424 = vadd.f32 %v4323, %v4366
    %v4425 = vxor.u32 %v4423, 2147483648
    %v4426 = vxor.u32 %v4424, 2147483648
    %v4427 = vmul.f32 %v4425, 1.442695
    %v4428 = vpow.pop %v4427
    %v4429 = vmul.f32 %v4426, 1.442695
    %v4430 = vpow.pop %v4429
    %v4431 = vadd.f32 %v4428, 1.0
    %v4432 = vadd.f32 %v4430, 1.0
    %v4433 = vrcp.pop %v4431
    %v4434 = vmul.f32 1.0, %v4433
    %v4435 = vrcp.pop %v4432
    %v4436 = vmul.f32 1.0, %v4435
    %v4437 = vmul.f32 %v4420, %v4403
    %v4438 = vmul.f32 %v4422, %v4406
    %v4439 = vadd.f32 %v4321, %v4437
    %v4440 = vadd.f32 %v4324, %v4438
    %v4441 = vtanh.pop %v4439
    %v4442 = vtanh.pop %v4440
    %v4443 = vsub.f32 1.0, %v4434
    %v4444 = vsub.f32 1.0, %v4436
    %v4445 = vmul.f32 %v4443, %v4441
    %v4446 = vmul.f32 %v4444, %v4442
    %v4447 = vmul.f32 %v4434, %v4305
    %v4448 = vmul.f32 %v4436, %v4306
    %v4449 = vadd.f32 %v4445, %v4447
    %v4450 = vadd.f32 %v4446, %v4448
    %v4451 = vpack.c.bf16 %v4450, %v4449
    %v4453 = vunpack.c.l.b16 %v4451
    %v4454 = vunpack.c.h.b16 %v4451
    %v4455 = vpack.c.b16 %v4453, %v4453
    %v4456 = vpack.c.b16 %v4454, %v4454
    %s4459 = scalar_lea.vmem [#allocation19], 40
    %4460 = vst [vmem:[%s4459] sm:$0xf] %v4455
    %4461 = vst [vmem:[%s4459 + $0x4] sm:$0xf] %v4456
    %s4462 = scalar_lea.vmem [#allocation2], 288
    %v4463 = vld [vmem:[%s4462] sm:$0xff]
    %v4464 = vld [vmem:[%s4462 + $0x8] sm:$0xff]
    %v4465 = vld [vmem:[%s4462 + $0x10] sm:$0xff]
    %v4466 = vld [vmem:[%s4462 + $0x18] sm:$0xff]
    %v4467 = vld [vmem:[%s4462 + $0x20] sm:$0xff]
    %v4468 = vld [vmem:[%s4462 + $0x28] sm:$0xff]
    %4469 = vmatprep.subr.bf16.mxu0 %v3559
    %4470 = vmatpush1.bf16.msra.mxu0 %v3558
    %4471 = vmatprep.subr.bf16.mxu0 %v3562
    %4472 = vmatpush1.bf16.msra.mxu0 %v3561
    %4473 = vmatprep.subr.bf16.mxu0 %v3565
    %4474 = vmatpush1.bf16.msra.mxu0 %v3564
    %4475 = vmatprep.subr.bf16.mxu0 %v3568
    %4476 = vmatpush1.bf16.msra.mxu0 %v3567
    %4477 = vmatprep.subr.bf16.mxu0 %v3571
    %4478 = vmatpush1.bf16.msra.mxu0 %v3570
    %4479 = vmatprep.subr.bf16.mxu0 %v3574
    %4480 = vmatpush1.bf16.msra.mxu0 %v3573
    %4481 = vmatprep.subr.bf16.mxu0 %v3577
    %4482 = vmatpush1.bf16.msra.mxu0 %v3576
    %4483 = vmatprep.subr.bf16.mxu0 %v3580
    %4484 = vmatpush1.bf16.msra.mxu0 %v3579
    %4485 = vmatprep.subr.bf16.mxu0 0
    %4486 = vmatpush1.bf16.msra.mxu0 0
    %4487 = vmatprep.subr.bf16.mxu0 0
    %4488 = vmatpush1.bf16.msra.mxu0 0
    %4489 = vmatprep.subr.bf16.mxu0 0
    %4490 = vmatpush1.bf16.msra.mxu0 0
    %4491 = vmatprep.subr.bf16.mxu0 0
    %4492 = vmatpush1.bf16.msra.mxu0 0
    %4493 = vmatprep.subr.bf16.mxu0 0
    %4494 = vmatpush1.bf16.msra.mxu0 0
    %4495 = vmatprep.subr.bf16.mxu0 0
    %4496 = vmatpush1.bf16.msra.mxu0 0
    %4497 = vmatprep.subr.bf16.mxu0 0
    %4498 = vmatpush1.bf16.msra.mxu0 0
    %4499 = vmatprep.subr.bf16.mxu0 0
    %4500 = vmatpush1.bf16.msra.mxu0 0
    %4501 = vmatprep.mubr.bf16.mxu0 0
    %4502 = vmatmul.mubr.bf16.gmra.mrb[0].mxu0 %v4451
    %v4503 = vpop.f32.mrb[0].mxu0
    %v4504 = vadd.f32 %v3466, %v4503
    %v4505 = vpop.f32.mrb[0].mxu0
    %v4506 = vadd.f32 %v3470, %v4505
    %v4507 = vpop.f32.mrb[0].mxu0
    %v4508 = vadd.f32 %v3466, %v4507
    %v4509 = vpop.f32.mrb[0].mxu0
    %v4510 = vadd.f32 %v3470, %v4509
    %4511 = vdwg.mxu0
    %4512 = vmatprep.subr.bf16.mxu0 0
    %4513 = vmatpush1.bf16.msra.mxu0 %v3560
    %4514 = vmatprep.subr.bf16.mxu0 0
    %4515 = vmatpush1.bf16.msra.mxu0 %v3563
    %4516 = vmatprep.subr.bf16.mxu0 0
    %4517 = vmatpush1.bf16.msra.mxu0 %v3566
    %4518 = vmatprep.subr.bf16.mxu0 0
    %4519 = vmatpush1.bf16.msra.mxu0 %v3569
    %4520 = vmatprep.subr.bf16.mxu0 0
    %4521 = vmatpush1.bf16.msra.mxu0 %v3572
    %4522 = vmatprep.subr.bf16.mxu0 0
    %4523 = vmatpush1.bf16.msra.mxu0 %v3575
    %4524 = vmatprep.subr.bf16.mxu0 0
    %4525 = vmatpush1.bf16.msra.mxu0 %v3578
    %4526 = vmatprep.subr.bf16.mxu0 0
    %4527 = vmatpush1.bf16.msra.mxu0 %v3581
    %4528 = vmatprep.subr.bf16.mxu0 0
    %4529 = vmatpush1.bf16.msra.mxu0 0
    %4530 = vmatprep.subr.bf16.mxu0 0
    %4531 = vmatpush1.bf16.msra.mxu0 0
    %4532 = vmatprep.subr.bf16.mxu0 0
    %4533 = vmatpush1.bf16.msra.mxu0 0
    %4534 = vmatprep.subr.bf16.mxu0 0
    %4535 = vmatpush1.bf16.msra.mxu0 0
    %4536 = vmatprep.subr.bf16.mxu0 0
    %4537 = vmatpush1.bf16.msra.mxu0 0
    %4538 = vmatprep.subr.bf16.mxu0 0
    %4539 = vmatpush1.bf16.msra.mxu0 0
    %4540 = vmatprep.subr.bf16.mxu0 0
    %4541 = vmatpush1.bf16.msra.mxu0 0
    %4542 = vmatprep.subr.bf16.mxu0 0
    %4543 = vmatpush1.bf16.msra.mxu0 0
    %4544 = vmatprep.mubr.bf16.mxu0 0
    %4545 = vmatmul.mubr.bf16.gmra.mrb[0].mxu0 %v4451
    %v4546 = vpop.f32.mrb[0].mxu0
    %v4547 = vadd.f32 %v3474, %v4546
    %v4548 = vpop.f32.mrb[0].mxu0
    %v4549 = vpop.f32.mrb[0].mxu0
    %v4550 = vadd.f32 %v3474, %v4549
    %v4551 = vpop.f32.mrb[0].mxu0
    %4552 = vdwg.mxu0
    %v4553 = vadd.f32 %v4463, %v4504
    %v4554 = vadd.f32 %v4466, %v4508
    %v4555 = vxor.u32 %v4553, 2147483648
    %v4556 = vxor.u32 %v4554, 2147483648
    %v4557 = vmul.f32 %v4555, 1.442695
    %v4558 = vpow.pop %v4557
    %v4559 = vmul.f32 %v4556, 1.442695
    %v4560 = vpow.pop %v4559
    %v4561 = vadd.f32 %v4558, 1.0
    %v4562 = vadd.f32 %v4560, 1.0
    %v4563 = vrcp.pop %v4561
    %v4564 = vmul.f32 1.0, %v4563
    %v4565 = vrcp.pop %v4562
    %v4566 = vmul.f32 1.0, %v4565
    %v4567 = vadd.f32 %v4464, %v4506
    %v4568 = vadd.f32 %v4467, %v4510
    %v4569 = vxor.u32 %v4567, 2147483648
    %v4570 = vxor.u32 %v4568, 2147483648
    %v4571 = vmul.f32 %v4569, 1.442695
    %v4572 = vpow.pop %v4571
    %v4573 = vmul.f32 %v4570, 1.442695
    %v4574 = vpow.pop %v4573
    %v4575 = vadd.f32 %v4572, 1.0
    %v4576 = vadd.f32 %v4574, 1.0
    %v4577 = vrcp.pop %v4575
    %v4578 = vmul.f32 1.0, %v4577
    %v4579 = vrcp.pop %v4576
    %v4580 = vmul.f32 1.0, %v4579
    %v4581 = vmul.f32 %v4564, %v4547
    %v4582 = vmul.f32 %v4566, %v4550
    %v4583 = vadd.f32 %v4465, %v4581
    %v4584 = vadd.f32 %v4468, %v4582
    %v4585 = vtanh.pop %v4583
    %v4586 = vtanh.pop %v4584
    %v4587 = vsub.f32 1.0, %v4578
    %v4588 = vsub.f32 1.0, %v4580
    %v4589 = vmul.f32 %v4587, %v4585
    %v4590 = vmul.f32 %v4588, %v4586
    %v4591 = vmul.f32 %v4578, %v4449
    %v4592 = vmul.f32 %v4580, %v4450
    %v4593 = vadd.f32 %v4589, %v4591
    %v4594 = vadd.f32 %v4590, %v4592
    %v4595 = vpack.c.bf16 %v4594, %v4593
    %v4597 = vunpack.c.l.b16 %v4595
    %v4598 = vunpack.c.h.b16 %v4595
    %v4599 = vpack.c.b16 %v4597, %v4597
    %v4600 = vpack.c.b16 %v4598, %v4598
    %s4603 = scalar_lea.vmem [#allocation19], 48
    %4604 = vst [vmem:[%s4603] sm:$0xf] %v4599
    %4605 = vst [vmem:[%s4603 + $0x4] sm:$0xf] %v4600
    %s4606 = scalar_lea.vmem [#allocation2], 336
    %v4607 = vld [vmem:[%s4606] sm:$0xff]
    %v4608 = vld [vmem:[%s4606 + $0x8] sm:$0xff]
    %v4609 = vld [vmem:[%s4606 + $0x10] sm:$0xff]
    %v4610 = vld [vmem:[%s4606 + $0x18] sm:$0xff]
    %v4611 = vld [vmem:[%s4606 + $0x20] sm:$0xff]
    %v4612 = vld [vmem:[%s4606 + $0x28] sm:$0xff]
    %4613 = vmatprep.subr.bf16.mxu0 %v3559
    %4614 = vmatpush1.bf16.msra.mxu0 %v3558
    %4615 = vmatprep.subr.bf16.mxu0 %v3562
    %4616 = vmatpush1.bf16.msra.mxu0 %v3561
    %4617 = vmatprep.subr.bf16.mxu0 %v3565
    %4618 = vmatpush1.bf16.msra.mxu0 %v3564
    %4619 = vmatprep.subr.bf16.mxu0 %v3568
    %4620 = vmatpush1.bf16.msra.mxu0 %v3567
    %4621 = vmatprep.subr.bf16.mxu0 %v3571
    %4622 = vmatpush1.bf16.msra.mxu0 %v3570
    %4623 = vmatprep.subr.bf16.mxu0 %v3574
    %4624 = vmatpush1.bf16.msra.mxu0 %v3573
    %4625 = vmatprep.subr.bf16.mxu0 %v3577
    %4626 = vmatpush1.bf16.msra.mxu0 %v3576
    %4627 = vmatprep.subr.bf16.mxu0 %v3580
    %4628 = vmatpush1.bf16.msra.mxu0 %v3579
    %4629 = vmatprep.subr.bf16.mxu0 0
    %4630 = vmatpush1.bf16.msra.mxu0 0
    %4631 = vmatprep.subr.bf16.mxu0 0
    %4632 = vmatpush1.bf16.msra.mxu0 0
    %4633 = vmatprep.subr.bf16.mxu0 0
    %4634 = vmatpush1.bf16.msra.mxu0 0
    %4635 = vmatprep.subr.bf16.mxu0 0
    %4636 = vmatpush1.bf16.msra.mxu0 0
    %4637 = vmatprep.subr.bf16.mxu0 0
    %4638 = vmatpush1.bf16.msra.mxu0 0
    %4639 = vmatprep.subr.bf16.mxu0 0
    %4640 = vmatpush1.bf16.msra.mxu0 0
    %4641 = vmatprep.subr.bf16.mxu0 0
    %4642 = vmatpush1.bf16.msra.mxu0 0
    %4643 = vmatprep.subr.bf16.mxu0 0
    %4644 = vmatpush1.bf16.msra.mxu0 0
    %4645 = vmatprep.mubr.bf16.mxu0 0
    %4646 = vmatmul.mubr.bf16.gmra.mrb[0].mxu0 %v4595
    %v4647 = vpop.f32.mrb[0].mxu0
    %v4648 = vadd.f32 %v3466, %v4647
    %v4649 = vpop.f32.mrb[0].mxu0
    %v4650 = vadd.f32 %v3470, %v4649
    %v4651 = vpop.f32.mrb[0].mxu0
    %v4652 = vadd.f32 %v3466, %v4651
    %v4653 = vpop.f32.mrb[0].mxu0
    %v4654 = vadd.f32 %v3470, %v4653
    %4655 = vdwg.mxu0
    %4656 = vmatprep.subr.bf16.mxu0 0
    %4657 = vmatpush1.bf16.msra.mxu0 %v3560
    %4658 = vmatprep.subr.bf16.mxu0 0
    %4659 = vmatpush1.bf16.msra.mxu0 %v3563
    %4660 = vmatprep.subr.bf16.mxu0 0
    %4661 = vmatpush1.bf16.msra.mxu0 %v3566
    %4662 = vmatprep.subr.bf16.mxu0 0
    %4663 = vmatpush1.bf16.msra.mxu0 %v3569
    %4664 = vmatprep.subr.bf16.mxu0 0
    %4665 = vmatpush1.bf16.msra.mxu0 %v3572
    %4666 = vmatprep.subr.bf16.mxu0 0
    %4667 = vmatpush1.bf16.msra.mxu0 %v3575
    %4668 = vmatprep.subr.bf16.mxu0 0
    %4669 = vmatpush1.bf16.msra.mxu0 %v3578
    %4670 = vmatprep.subr.bf16.mxu0 0
    %4671 = vmatpush1.bf16.msra.mxu0 %v3581
    %4672 = vmatprep.subr.bf16.mxu0 0
    %4673 = vmatpush1.bf16.msra.mxu0 0
    %4674 = vmatprep.subr.bf16.mxu0 0
    %4675 = vmatpush1.bf16.msra.mxu0 0
    %4676 = vmatprep.subr.bf16.mxu0 0
    %4677 = vmatpush1.bf16.msra.mxu0 0
    %4678 = vmatprep.subr.bf16.mxu0 0
    %4679 = vmatpush1.bf16.msra.mxu0 0
    %4680 = vmatprep.subr.bf16.mxu0 0
    %4681 = vmatpush1.bf16.msra.mxu0 0
    %4682 = vmatprep.subr.bf16.mxu0 0
    %4683 = vmatpush1.bf16.msra.mxu0 0
    %4684 = vmatprep.subr.bf16.mxu0 0
    %4685 = vmatpush1.bf16.msra.mxu0 0
    %4686 = vmatprep.subr.bf16.mxu0 0
    %4687 = vmatpush1.bf16.msra.mxu0 0
    %4688 = vmatprep.mubr.bf16.mxu0 0
    %4689 = vmatmul.mubr.bf16.gmra.mrb[0].mxu0 %v4595
    %v4690 = vpop.f32.mrb[0].mxu0
    %v4691 = vadd.f32 %v3474, %v4690
    %v4692 = vpop.f32.mrb[0].mxu0
    %v4693 = vpop.f32.mrb[0].mxu0
    %v4694 = vadd.f32 %v3474, %v4693
    %v4695 = vpop.f32.mrb[0].mxu0
    %4696 = vdwg.mxu0
    %v4697 = vadd.f32 %v4607, %v4648
    %v4698 = vadd.f32 %v4610, %v4652
    %v4699 = vxor.u32 %v4697, 2147483648
    %v4700 = vxor.u32 %v4698, 2147483648
    %v4701 = vmul.f32 %v4699, 1.442695
    %v4702 = vpow.pop %v4701
    %v4703 = vmul.f32 %v4700, 1.442695
    %v4704 = vpow.pop %v4703
    %v4705 = vadd.f32 %v4702, 1.0
    %v4706 = vadd.f32 %v4704, 1.0
    %v4707 = vrcp.pop %v4705
    %v4708 = vmul.f32 1.0, %v4707
    %v4709 = vrcp.pop %v4706
    %v4710 = vmul.f32 1.0, %v4709
    %v4711 = vadd.f32 %v4608, %v4650
    %v4712 = vadd.f32 %v4611, %v4654
    %v4713 = vxor.u32 %v4711, 2147483648
    %v4714 = vxor.u32 %v4712, 2147483648
    %v4715 = vmul.f32 %v4713, 1.442695
    %v4716 = vpow.pop %v4715
    %v4717 = vmul.f32 %v4714, 1.442695
    %v4718 = vpow.pop %v4717
    %v4719 = vadd.f32 %v4716, 1.0
    %v4720 = vadd.f32 %v4718, 1.0
    %v4721 = vrcp.pop %v4719
    %v4722 = vmul.f32 1.0, %v4721
    %v4723 = vrcp.pop %v4720
    %v4724 = vmul.f32 1.0, %v4723
    %v4725 = vmul.f32 %v4708, %v4691
    %v4726 = vmul.f32 %v4710, %v4694
    %v4727 = vadd.f32 %v4609, %v4725
    %v4728 = vadd.f32 %v4612, %v4726
    %v4729 = vtanh.pop %v4727
    %v4730 = vtanh.pop %v4728
    %v4731 = vsub.f32 1.0, %v4722
    %v4732 = vsub.f32 1.0, %v4724
    %v4733 = vmul.f32 %v4731, %v4729
    %v4734 = vmul.f32 %v4732, %v4730
    %v4735 = vmul.f32 %v4722, %v4593
    %v4736 = vmul.f32 %v4724, %v4594
    %v4737 = vadd.f32 %v4733, %v4735
    %v4738 = vadd.f32 %v4734, %v4736
    %v4739 = vpack.c.bf16 %v4738, %v4737
    %v4741 = vunpack.c.l.b16 %v4739
    %v4742 = vunpack.c.h.b16 %v4739
    %v4743 = vpack.c.b16 %v4741, %v4741
    %v4744 = vpack.c.b16 %v4742, %v4742
    %s4747 = scalar_lea.vmem [#allocation19], 56
    %4748 = vst [vmem:[%s4747] sm:$0xf] %v4743
    %4749 = vst [vmem:[%s4747 + $0x4] sm:$0xf] %v4744
    %4750 = vst [vmem:[#allocation20] sm:$0xff] %v4737
    %4751 = vst [vmem:[#allocation20 + $0x8] sm:$0xff] %v4738
    // Predicated region
    $region98: #{tpu_custom_call.1} parent=1 // pred_check
      _
    $region99: #{tpu_custom_call.1} parent=1 // pred_check_branch
      %4753 = sbr.rel (0) target = $region101
    $region100: #{tpu_custom_call.1} parent=1 // pred_region
      %s4755 = ssub.s32 1024, 1024
      %4756 = vsyncadd [#allocation6], %s4755
      %s4757 = sshll.u32 [#allocation19], 4
      %s4758 = int_to_ptr.vmem [resolvable:$true] %s4757
      %4763 = dma.vmem_to_hbm [thread:$0]  %s4758, 1024, %s15, [#allocation6], 64, 64, 4
    $region101: #{tpu_custom_call.1} parent=1 // pred_fallthru
      _
    // Predicated region
    $region102: #{tpu_custom_call.1} parent=1 // pred_check
      _
    $region103: #{tpu_custom_call.1} parent=1 // pred_check_branch
      %4765 = sbr.rel (0) target = $region105
    $region104: #{tpu_custom_call.1} parent=1 // pred_region
      %s4767 = ssub.s32 256, 256
      %4768 = vsyncadd [#allocation21], %s4767
      %s4769 = sshll.u32 [#allocation20], 4
      %s4770 = int_to_ptr.vmem [resolvable:$true] %s4769
      %4775 = dma.vmem_to_hbm [thread:$0]  %s4770, 256, %s16, [#allocation21], 128, 128, 8
    $region105: #{tpu_custom_call.1} parent=1 // pred_fallthru
      _
    // Predicated region
    $region106: #{tpu_custom_call.1} parent=1 // pred_check
      _
    $region107: #{tpu_custom_call.1} parent=1 // pred_check_branch
      %4777 = sbr.rel (0) target = $region109
    $region108: #{tpu_custom_call.1} parent=1 // pred_region
      %s4779 = ssub.s32 256, 256
      %4780 = vsyncadd [#allocation21], %s4779
      %s4781 = sshll.u32 [#allocation22], 4
      %s4782 = int_to_ptr.vmem [resolvable:$true] %s4781
      %4787 = dma.vmem_to_hbm [thread:$0]  %s4782, 256, %s17, [#allocation21], 128, 128, 8
    $region109: #{tpu_custom_call.1} parent=1 // pred_fallthru
      _
    // Predicated region
    $region110: #{tpu_custom_call.1} parent=1 // pred_check
      _
    $region111: #{tpu_custom_call.1} parent=1 // pred_check_branch
      %4789 = sbr.rel (0) target = $region113
    $region112: #{tpu_custom_call.1} parent=1 // pred_region
      %4790 = dma.done [#allocation6], 1024
    $region113: #{tpu_custom_call.1} parent=1 // pred_fallthru
      _
    // Predicated region
    $region114: #{tpu_custom_call.1} parent=1 // pred_check
      _
    $region115: #{tpu_custom_call.1} parent=1 // pred_check_branch
      %4792 = sbr.rel (0) target = $region117
    $region116: #{tpu_custom_call.1} parent=1 // pred_region
      %4793 = dma.done [#allocation21], 256
    $region117: #{tpu_custom_call.1} parent=1 // pred_fallthru
      _
    // Predicated region
    $region118: #{tpu_custom_call.1} parent=1 // pred_check
      _
    $region119: #{tpu_custom_call.1} parent=1 // pred_check_branch
      %4795 = sbr.rel (0) target = $region121
    $region120: #{tpu_custom_call.1} parent=1 // pred_region
      %4796 = dma.done [#allocation21], 256
    $region121: #{tpu_custom_call.1} parent=1 // pred_fallthru
      _
    %4797 = vsyncpa [#allocation5], 1
    %4798 = vsyncpa [#allocation8], 1
    %4799 = vsyncpa [#allocation11], 1
    %4800 = vsyncpa [#allocation14], 1
    %4801 = vsyncpa [#allocation17], 1
    %4802 = vsyncpa [#allocation6], 1
    %4803 = vsyncpa [#allocation21], 1

</llo_original>
